<compile_context>
chip_gen: v7x
topology: tpu7x:2x2x1
jax: 0.10.0
libtpu: 0.0.40
codegen_flags: <defaults>
</compile_context>

<pallas_src>
import functools

import numpy as np

import jax
import jax.numpy as jnp
from jax.experimental import pallas as pl
from jax.experimental.pallas import tpu as pltpu

# ----------------------------------------------------------------------------
# Config (mirrors the PyTorch config dict)
# ----------------------------------------------------------------------------
FEAT_IND = {'fpn_res5_2_sum': 0, 'fpn_res4_5_sum': 1,
            'fpn_res3_3_sum': 2, 'fpn_res2_2_sum': 3}
LEVEL_NAMES = ['fpn_res5_2_sum', 'fpn_res4_5_sum',
               'fpn_res3_3_sum', 'fpn_res2_2_sum']

CONFIG = dict(
    FfpnLevels=2,            # number of FPN levels actually used
    n_target_frames_ar=2,    # autoregressive steps
    nb_features=4,           # nb_feat
    n_input_frames=2,        # nI  -> input channels = nb_feat * nI = 8
    train_single_level=None,
    nb_scales=[2, 1, 1, 1],  # scales per level (indexed by FEAT_IND)
)

_HIGHEST = jax.lax.Precision.HIGHEST


# ----------------------------------------------------------------------------
# Fused Pallas kernel: the whole autoregressive roll-out in one invocation.
# Layout inside the kernel: every (level, scale) tensor is (N*Cin, H*W) f32,
# pixels lane-dense on the last axis.  Weights are batch-block-diagonal so one
# MXU dot mixes channels for all batches at once.
# ----------------------------------------------------------------------------
def _make_fused_ar_kernel(meta, scales_per_level, smat_index, out_index, T):
    """Build the fused kernel body.

    meta             : list of (level, scale, H, W) per flattened input, in input order.
    scales_per_level : list of scale counts per level.
    smat_index       : dict (H, W) source-shape -> index into the S-matrix inputs.
    out_index        : dict (level, t, scale) -> position in the output tuple.
    T                : number of autoregressive steps (statically unrolled).
    """
    n_x = len(meta)
    n_s = len(smat_index)
    n_lvl = len(scales_per_level)

    def kernel(*refs):
        x_refs = refs[:n_x]
        s_refs = refs[n_x:n_x + n_s]
        wf_ref, ws_ref, wh_ref, wt_ref, bb_ref = refs[n_x + n_s:n_x + n_s + 5]
        out_refs = refs[n_x + n_s + 5:]

        def mm(w, x):
            return jnp.dot(w, x, preferred_element_type=jnp.float32,
                           precision=_HIGHEST)

        def downsample(y, hw):
            # MaxPool2d(kernel_size=1, stride=2) == spatial subsampling, expressed
            # as y @ S (0/1 selection matrix) so it stays one MXU pass on the
            # lane-flattened layout instead of a strided in-kernel relayout.
            s = s_refs[smat_index[hw]][...]
            return mm(y, s)

        # Load every (level, scale) input once; all state stays in vregs/VMEM.
        xs, dims = {}, {}
        for idx, (li, sc, H, W) in enumerate(meta):
            xs[(li, sc)] = x_refs[idx][...]
            dims[(li, sc)] = (H, W)

        # state[(li, sc)]:
        #   ('raw',)          input is the original nI-frame stack
        #   ('mixed', c0)     input = [raw frame 1.. channels, c0]   (after 1st update)
        #   ('pred', ca, cb)  input = [ca, cb] (both are model predictions)
        state = {key: ('raw',) for key in xs}

        for t in range(T):
            ys = {}
            for (li, sc) in xs:
                st = state[(li, sc)]
                if st[0] == 'raw':
                    z = mm(wf_ref[li], xs[(li, sc)])
                elif st[0] == 'mixed':
                    z = mm(ws_ref[li], xs[(li, sc)]) + mm(wt_ref[li], st[1])
                else:  # 'pred'
                    z = mm(wh_ref[li], st[1]) + mm(wt_ref[li], st[2])
                y = jnp.maximum(z + bb_ref[li], 0.0)
                ys[(li, sc)] = y
                out_refs[out_index[(li, t, sc)]][...] = y

            if t < T - 1:
                # update_autoregressive_multiscale_inputs, without materializing the
                # channel concat (the 1x1 conv is linear -> shift/tail weight split).
                for li in range(n_lvl):
                    ns = scales_per_level[li]
                    cur = ys[(li, ns - 1)]
                    cur_hw = dims[(li, ns - 1)]
                    for sc in range(ns - 1, -1, -1):
                        if sc < ns - 1:
                            cur = downsample(cur, cur_hw)
                            cur_hw = ((cur_hw[0] + 1) // 2, (cur_hw[1] + 1) // 2)
                        assert cur_hw == dims[(li, sc)]
                        st = state[(li, sc)]
                        if st[0] == 'raw':
                            state[(li, sc)] = ('mixed', cur)
                        elif st[0] == 'mixed':
                            state[(li, sc)] = ('pred', st[1], cur)
                        else:
                            state[(li, sc)] = ('pred', st[2], cur)

    return kernel


def _ds_selection_matrix(H, W):
    """0/1 matrix S with (y_flat @ S) == y[:, ::2, ::2] flattened (stride-2 subsample)."""
    Hd, Wd = (H + 1) // 2, (W + 1) // 2
    S = np.zeros((H * W, Hd * Wd), np.float32)
    for hd in range(Hd):
        for wd in range(Wd):
            S[(2 * hd) * W + 2 * wd, hd * Wd + wd] = 1.0
    return jnp.asarray(S)


def _build_big_weights(w_stack, b_stack, N, nb_feat):
    """Per-level batch-block-diagonal transposed weights for the (N*Cin, H*W) layout.

    Returns (w_full_t, w_shift_t, w_head_t, w_tail_t, b_big):
      w_full_t : (L, N*cout, N*cin)  — conv on the raw stacked input
      w_shift_t: (L, N*cout, N*cin)  — contribution of the *kept* old channels (channels
                                       nb_feat.. of the raw input) to the next step
      w_head_t : (L, N*cout, N*nb_feat) — contribution of the older predicted frame (t>=2)
      w_tail_t : (L, N*cout, N*nb_feat) — contribution of the newest predicted frame
      b_big    : (L, N*cout, 1)
    """
    L, cin, cout = w_stack.shape
    eye = jnp.eye(N, dtype=w_stack.dtype)

    def blockdiag_t(w):  # (L, c_in, c_out) -> (L, N*c_out, N*c_in)
        wt = jnp.swapaxes(w, 1, 2)                       # (L, c_out, c_in)
        big = jnp.einsum('ab,loc->laobc', eye, wt)       # (L, N, c_out, N, c_in)
        return big.reshape(L, N * w.shape[2], N * w.shape[1])

    w_shift = jnp.concatenate(
        [jnp.zeros((L, nb_feat, cout), w_stack.dtype),
         w_stack[:, :cin - nb_feat, :]], axis=1)          # (L, cin, cout)
    w_head = w_stack[:, :nb_feat, :]
    w_tail = w_stack[:, cin - nb_feat:, :]

    w_full_t = blockdiag_t(w_stack)
    w_shift_t = blockdiag_t(w_shift)
    w_head_t = blockdiag_t(w_head)
    w_tail_t = blockdiag_t(w_tail)
    b_big = jnp.tile(b_stack, (1, N)).reshape(L, N * cout, 1)
    return w_full_t, w_shift_t, w_head_t, w_tail_t, b_big


# ----------------------------------------------------------------------------
# Pallas forward: one fused pallas_call for the whole roll-out.
# ----------------------------------------------------------------------------
def autoregressive_forward_pallas(inputs, w_stack, b_stack, config):
    L = config['FfpnLevels']
    T = config['n_target_frames_ar']
    nb_feat = config['nb_features']
    nI = config['n_input_frames']
    nb_scales = config['nb_scales']
    # TODO(synk): train_single_level mode is not wired into the fused kernel.
    assert config['train_single_level'] is None
    assert nI == 2 or T <= 2  # TODO(synk): t>=2 recursion assumes nI == 2

    level_names = LEVEL_NAMES[:L]
    L_w, cin, cout = w_stack.shape
    assert L_w == L and cin == nb_feat * nI and cout == nb_feat

    # NCHW -> (N*Cin, H*W): pure row-major reshape (no transpose), lane-dense pixels.
    x_flat, meta = [], []
    scales_per_level = []
    N = None
    for li, k in enumerate(level_names):
        tensors = inputs[k]
        ns = nb_scales[FEAT_IND[k]]
        assert len(tensors) == ns
        scales_per_level.append(ns)
        for sc, x in enumerate(tensors):
            n, c, H, W = x.shape
            assert c == cin
            N = n if N is None else N
            assert n == N
            x_flat.append(x.reshape(n * c, H * W))
            meta.append((li, sc, H, W))

    dims = {(li, sc): (H, W) for (li, sc, H, W) in meta}

    # One downsample selection matrix per distinct source spatial shape.
    smat_index, s_mats = {}, []
    for li in range(L):
        ns = scales_per_level[li]
        for sc in range(ns - 1, 0, -1):
            hw = dims[(li, sc)]
            dd = ((hw[0] + 1) // 2, (hw[1] + 1) // 2)
            assert dd == dims[(li, sc - 1)]
            if hw not in smat_index:
                smat_index[hw] = len(s_mats)
                s_mats.append(_ds_selection_matrix(*hw))

    wf, ws, wh, wt_, b_big = _build_big_weights(w_stack, b_stack, N, nb_feat)

    # Output order matches transform_into_list: level-major, then time, then scale.
    out_index, out_shapes = {}, []
    for li in range(L):
        for t in range(T):
            for sc in range(scales_per_level[li]):
                out_index[(li, t, sc)] = len(out_shapes)
                H, W = dims[(li, sc)]
                out_shapes.append(
                    jax.ShapeDtypeStruct((N * cout, H * W), jnp.float32))

    kernel = _make_fused_ar_kernel(meta, scales_per_level, smat_index,
                                   out_index, T)

    n_in = len(x_flat) + len(s_mats) + 5
    vmem = pl.BlockSpec(memory_space=pltpu.MemorySpace.VMEM)
    outs = pl.pallas_call(
        kernel,
        out_shape=tuple(out_shapes),
        in_specs=[vmem] * n_in,
        out_specs=tuple([vmem] * len(out_shapes)),
    )(*x_flat, *s_mats, wf, ws, wh, wt_, b_big)

    # (N*Cout, H*W) -> NCHW (pure reshape) and rebuild the module's output nesting.
    out_list = []
    for li in range(L):
        for t in range(T):
            per_scale = []
            for sc in range(scales_per_level[li]):
                H, W = dims[(li, sc)]
                y = outs[out_index[(li, t, sc)]]
                per_scale.append(y.reshape(N, cout, H, W))
            out_list.append(per_scale)
    return out_list


# ----------------------------------------------------------------------------
# Pure-JAX reference (mirrors the PyTorch module exactly: NCHW, explicit concat,
# explicit stride-2 downsample).  Used to validate the fused kernel.
# ----------------------------------------------------------------------------
def _downsample_ref(x):
    return x[:, :, ::2, ::2]  # MaxPool2d(kernel_size=1, stride=2)


def format_variable_length_output(outputs, n_outputs, train_single_level=None):
    if train_single_level is None:
        r_outputs = {'fpn_res5_2_sum': outputs[0]}
        if n_outputs == 1:
            return r_outputs
        r_outputs['fpn_res4_5_sum'] = outputs[1]
        if n_outputs == 2:
            return r_outputs
        r_outputs['fpn_res3_3_sum'] = outputs[2]
        if n_outputs == 3:
            return r_outputs
        r_outputs['fpn_res2_2_sum'] = outputs[3]
        return r_outputs
    return {train_single_level: outputs}


def transform_into_list(seq_outputs):
    rslt = []
    for k in seq_outputs[0]:
        for t in range(len(seq_outputs)):
            rslt.append(seq_outputs[t][k])
    return rslt


def update_autoregressive_multiscale_inputs(inputs, outputs, nb_feat, nI,
                                            nb_scales):
    new_inputs = {}
    for k, v in inputs.items():
        new_inputs[k] = []
        ns = nb_scales[FEAT_IND[k]]
        out = outputs[k][ns - 1]
        for sc in range(ns - 1, -1, -1):
            inp = v[sc]
            if sc < ns - 1:
                out = _downsample_ref(out)
            assert nb_feat * nI == inp.shape[1]
            st, en = (nb_feat * 1, nb_feat * nI)
            new_inputs[k].insert(0, jnp.concatenate((inp[:, st:en], out),
                                                    axis=1))
            assert new_inputs[k][0].shape == inp.shape
    return new_inputs


def _single_frame_model_ref(features_inputs, w_stack, b_stack, config):
    n_levels = config['FfpnLevels']
    tsl = config['train_single_level']

    def conv(x, li):
        y = jnp.einsum('io,nihw->nohw', w_stack[li], x, precision=_HIGHEST)
        return jnp.maximum(y + b_stack[li][None, :, None, None], 0.0)

    if tsl is None:
        return [[conv(x, li) for x in features_inputs[LEVEL_NAMES[li]]]
                for li in range(n_levels)]
    li = FEAT_IND[tsl]
    return [conv(x, li) for x in features_inputs]


def autoregressive_forward_ref(inputs, w_stack, b_stack, config):
    ffpn_levels = config['FfpnLevels']
    T = config['n_target_frames_ar']
    nb_feat = config['nb_features']
    nI = config['n_input_frames']
    tsl = config['train_single_level']
    nb_scales = config['nb_scales']

    seq_outputs = []
    for t in range(T):
        features_inputs = inputs
        if tsl is not None:
            features_inputs = features_inputs[tsl]
        raw = _single_frame_model_ref(features_inputs, w_stack, b_stack, config)
        outputs = format_variable_length_output(raw, ffpn_levels,
                                                train_single_level=tsl)
        seq_outputs.append(outputs)
        if t < T - 1:
            inputs = update_autoregressive_multiscale_inputs(
                inputs, outputs, nb_feat, nI, nb_scales)
    return transform_into_list(seq_outputs)


# ----------------------------------------------------------------------------
# Main
# ----------------------------------------------------------------------------
if __name__ == "__main__":
    key = jax.random.PRNGKey(0)
    nb_feat = CONFIG['nb_features']
    nI = CONFIG['n_input_frames']
    c_in = nb_feat * nI     # 8
    c_out = nb_feat         # 4
    N = 2

    k1, k2, k3, kw, kb = jax.random.split(key, 5)
    # Multi-scale inputs (NCHW, PyTorch convention).  Scale ns-1 is the finest.
    inputs = {
        'fpn_res5_2_sum': [
            jax.random.normal(k1, (N, c_in, 8, 8), jnp.float32),    # scale 0
            jax.random.normal(k2, (N, c_in, 16, 16), jnp.float32),  # scale 1
        ],
        'fpn_res4_5_sum': [
            jax.random.normal(k3, (N, c_in, 16, 16), jnp.float32),  # scale 0
        ],
    }
    w_stack = jax.random.normal(
        kw, (CONFIG['FfpnLevels'], c_in, c_out), jnp.float32) * 0.1
    b_stack = jax.random.normal(
        kb, (CONFIG['FfpnLevels'], c_out), jnp.float32) * 0.1

    fwd_pallas = jax.jit(functools.partial(autoregressive_forward_pallas,
                                           config=CONFIG))
    fwd_ref = jax.jit(functools.partial(autoregressive_forward_ref,
                                        config=CONFIG))

    out_p = jax.block_until_ready(fwd_pallas(inputs, w_stack, b_stack))
    out_r = jax.block_until_ready(fwd_ref(inputs, w_stack, b_stack))

    flat_p, tree_p = jax.tree_util.tree_flatten(out_p)
    flat_r, tree_r = jax.tree_util.tree_flatten(out_r)
    assert tree_p == tree_r
    assert len(flat_p) == len(flat_r) == 6
    for a, b in zip(flat_p, flat_r):
        assert a.shape == b.shape and a.dtype == b.dtype
        assert jnp.allclose(a, b, atol=1e-4, rtol=1e-4)

    print("KERNEL_OK")
</pallas_src>

<mosaic_0001>
module attributes {stable_mosaic.version = 11 : i64} {
  func.func @kernel(%arg0: memref<16x64xf32, #tpu.memory_space<vmem>>, %arg1: memref<16x256xf32, #tpu.memory_space<vmem>>, %arg2: memref<16x256xf32, #tpu.memory_space<vmem>>, %arg3: memref<256x64xf32, #tpu.memory_space<vmem>>, %arg4: memref<2x8x16xf32, #tpu.memory_space<vmem>>, %arg5: memref<2x8x16xf32, #tpu.memory_space<vmem>>, %arg6: memref<2x8x8xf32, #tpu.memory_space<vmem>>, %arg7: memref<2x8x8xf32, #tpu.memory_space<vmem>>, %arg8: memref<2x8x1xf32, #tpu.memory_space<vmem>>, %arg9: memref<8x64xf32, #tpu.memory_space<vmem>>, %arg10: memref<8x256xf32, #tpu.memory_space<vmem>>, %arg11: memref<8x64xf32, #tpu.memory_space<vmem>>, %arg12: memref<8x256xf32, #tpu.memory_space<vmem>>, %arg13: memref<8x256xf32, #tpu.memory_space<vmem>>, %arg14: memref<8x256xf32, #tpu.memory_space<vmem>>) attributes {dimension_semantics = [], scalar_prefetch = 0 : i64, scratch_operands = 0 : i64, tpu.core_type = #tpu.core_type<tc>} {
    %c0 = arith.constant 0 : index
    %c0_0 = arith.constant 0 : index
    %0 = vector.load %arg0[%c0, %c0_0] : memref<16x64xf32, #tpu.memory_space<vmem>>, vector<16x64xf32>
    %c0_1 = arith.constant 0 : index
    %c0_2 = arith.constant 0 : index
    %1 = vector.load %arg1[%c0_1, %c0_2] : memref<16x256xf32, #tpu.memory_space<vmem>>, vector<16x256xf32>
    %c0_3 = arith.constant 0 : index
    %c0_4 = arith.constant 0 : index
    %2 = vector.load %arg2[%c0_3, %c0_4] : memref<16x256xf32, #tpu.memory_space<vmem>>, vector<16x256xf32>
    %c0_5 = arith.constant 0 : index
    %c0_6 = arith.constant 0 : index
    %c0_7 = arith.constant 0 : index
    %3 = vector.load %arg4[%c0_5, %c0_6, %c0_7] : memref<2x8x16xf32, #tpu.memory_space<vmem>>, vector<1x8x16xf32>
    %4 = vector.shape_cast %3 : vector<1x8x16xf32> to vector<8x16xf32>
    %cst = arith.constant dense<0.000000e+00> : vector<8x64xf32>
    %5 = tpu.matmul %4, %0, %cst {dimension_numbers = #tpu.dot_dimension_numbers<[1], [0], [0], [1], [0, 0, 1, 1], [], []>, precision = #tpu.contract_precision<fp32>} : vector<8x16xf32>, vector<16x64xf32>, vector<8x64xf32> -> vector<8x64xf32>
    %c0_8 = arith.constant 0 : index
    %c0_9 = arith.constant 0 : index
    %c0_10 = arith.constant 0 : index
    %6 = vector.load %arg8[%c0_8, %c0_9, %c0_10] : memref<2x8x1xf32, #tpu.memory_space<vmem>>, vector<1x8x1xf32>
    %7 = vector.shape_cast %6 : vector<1x8x1xf32> to vector<8x1xf32>
    %8 = vector.broadcast %7 : vector<8x1xf32> to vector<8x64xf32>
    %9 = arith.addf %5, %8 : vector<8x64xf32>
    %cst_11 = arith.constant 0.000000e+00 : f32
    %10 = vector.broadcast %cst_11 : f32 to vector<8x64xf32>
    %11 = arith.maximumf %9, %10 : vector<8x64xf32>
    %c0_12 = arith.constant 0 : index
    %c0_13 = arith.constant 0 : index
    %12 = vector.load %arg9[%c0_12, %c0_13] : memref<8x64xf32, #tpu.memory_space<vmem>>, vector<8x64xf32>
    tpu.vector_store %arg9[%c0_12, %c0_13], %11 {strides = array<i32>} : memref<8x64xf32, #tpu.memory_space<vmem>>, vector<8x64xf32>,
    %c0_14 = arith.constant 0 : index
    %c0_15 = arith.constant 0 : index
    %c0_16 = arith.constant 0 : index
    %13 = vector.load %arg4[%c0_14, %c0_15, %c0_16] : memref<2x8x16xf32, #tpu.memory_space<vmem>>, vector<1x8x16xf32>
    %14 = vector.shape_cast %13 : vector<1x8x16xf32> to vector<8x16xf32>
    %cst_17 = arith.constant dense<0.000000e+00> : vector<8x256xf32>
    %15 = tpu.matmul %14, %1, %cst_17 {dimension_numbers = #tpu.dot_dimension_numbers<[1], [0], [0], [1], [0, 0, 1, 1], [], []>, precision = #tpu.contract_precision<fp32>} : vector<8x16xf32>, vector<16x256xf32>, vector<8x256xf32> -> vector<8x256xf32>
    %c0_18 = arith.constant 0 : index
    %c0_19 = arith.constant 0 : index
    %c0_20 = arith.constant 0 : index
    %16 = vector.load %arg8[%c0_18, %c0_19, %c0_20] : memref<2x8x1xf32, #tpu.memory_space<vmem>>, vector<1x8x1xf32>
    %17 = vector.shape_cast %16 : vector<1x8x1xf32> to vector<8x1xf32>
    %18 = vector.broadcast %17 : vector<8x1xf32> to vector<8x256xf32>
    %19 = arith.addf %15, %18 : vector<8x256xf32>
    %cst_21 = arith.constant 0.000000e+00 : f32
    %20 = vector.broadcast %cst_21 : f32 to vector<8x256xf32>
    %21 = arith.maximumf %19, %20 : vector<8x256xf32>
    %c0_22 = arith.constant 0 : index
    %c0_23 = arith.constant 0 : index
    %22 = vector.load %arg10[%c0_22, %c0_23] : memref<8x256xf32, #tpu.memory_space<vmem>>, vector<8x256xf32>
    tpu.vector_store %arg10[%c0_22, %c0_23], %21 {strides = array<i32>} : memref<8x256xf32, #tpu.memory_space<vmem>>, vector<8x256xf32>,
    %c1 = arith.constant 1 : index
    %c0_24 = arith.constant 0 : index
    %c0_25 = arith.constant 0 : index
    %23 = vector.load %arg4[%c1, %c0_24, %c0_25] : memref<2x8x16xf32, #tpu.memory_space<vmem>>, vector<1x8x16xf32>
    %24 = vector.shape_cast %23 : vector<1x8x16xf32> to vector<8x16xf32>
    %cst_26 = arith.constant dense<0.000000e+00> : vector<8x256xf32>
    %25 = tpu.matmul %24, %2, %cst_26 {dimension_numbers = #tpu.dot_dimension_numbers<[1], [0], [0], [1], [0, 0, 1, 1], [], []>, precision = #tpu.contract_precision<fp32>} : vector<8x16xf32>, vector<16x256xf32>, vector<8x256xf32> -> vector<8x256xf32>
    %c1_27 = arith.constant 1 : index
    %c0_28 = arith.constant 0 : index
    %c0_29 = arith.constant 0 : index
    %26 = vector.load %arg8[%c1_27, %c0_28, %c0_29] : memref<2x8x1xf32, #tpu.memory_space<vmem>>, vector<1x8x1xf32>
    %27 = vector.shape_cast %26 : vector<1x8x1xf32> to vector<8x1xf32>
    %28 = vector.broadcast %27 : vector<8x1xf32> to vector<8x256xf32>
    %29 = arith.addf %25, %28 : vector<8x256xf32>
    %cst_30 = arith.constant 0.000000e+00 : f32
    %30 = vector.broadcast %cst_30 : f32 to vector<8x256xf32>
    %31 = arith.maximumf %29, %30 : vector<8x256xf32>
    %c0_31 = arith.constant 0 : index
    %c0_32 = arith.constant 0 : index
    %32 = vector.load %arg13[%c0_31, %c0_32] : memref<8x256xf32, #tpu.memory_space<vmem>>, vector<8x256xf32>
    tpu.vector_store %arg13[%c0_31, %c0_32], %31 {strides = array<i32>} : memref<8x256xf32, #tpu.memory_space<vmem>>, vector<8x256xf32>,
    %c0_33 = arith.constant 0 : index
    %c0_34 = arith.constant 0 : index
    %33 = vector.load %arg3[%c0_33, %c0_34] : memref<256x64xf32, #tpu.memory_space<vmem>>, vector<256x64xf32>
    %cst_35 = arith.constant dense<0.000000e+00> : vector<8x64xf32>
    %34 = tpu.matmul %21, %33, %cst_35 {dimension_numbers = #tpu.dot_dimension_numbers<[1], [0], [0], [1], [0, 0, 1, 1], [], []>, precision = #tpu.contract_precision<fp32>} : vector<8x256xf32>, vector<256x64xf32>, vector<8x64xf32> -> vector<8x64xf32>
    %c0_36 = arith.constant 0 : index
    %c0_37 = arith.constant 0 : index
    %c0_38 = arith.constant 0 : index
    %35 = vector.load %arg5[%c0_36, %c0_37, %c0_38] : memref<2x8x16xf32, #tpu.memory_space<vmem>>, vector<1x8x16xf32>
    %36 = vector.shape_cast %35 : vector<1x8x16xf32> to vector<8x16xf32>
    %cst_39 = arith.constant dense<0.000000e+00> : vector<8x64xf32>
    %37 = tpu.matmul %36, %0, %cst_39 {dimension_numbers = #tpu.dot_dimension_numbers<[1], [0], [0], [1], [0, 0, 1, 1], [], []>, precision = #tpu.contract_precision<fp32>} : vector<8x16xf32>, vector<16x64xf32>, vector<8x64xf32> -> vector<8x64xf32>
    %c0_40 = arith.constant 0 : index
    %c0_41 = arith.constant 0 : index
    %c0_42 = arith.constant 0 : index
    %38 = vector.load %arg7[%c0_40, %c0_41, %c0_42] : memref<2x8x8xf32, #tpu.memory_space<vmem>>, vector<1x8x8xf32>
    %39 = vector.shape_cast %38 : vector<1x8x8xf32> to vector<8x8xf32>
    %cst_43 = arith.constant dense<0.000000e+00> : vector<8x64xf32>
    %40 = tpu.matmul %39, %34, %cst_43 {dimension_numbers = #tpu.dot_dimension_numbers<[1], [0], [0], [1], [0, 0, 1, 1], [], []>, precision = #tpu.contract_precision<fp32>} : vector<8x8xf32>, vector<8x64xf32>, vector<8x64xf32> -> vector<8x64xf32>
    %41 = arith.addf %37, %40 : vector<8x64xf32>
    %c0_44 = arith.constant 0 : index
    %c0_45 = arith.constant 0 : index
    %c0_46 = arith.constant 0 : index
    %42 = vector.load %arg8[%c0_44, %c0_45, %c0_46] : memref<2x8x1xf32, #tpu.memory_space<vmem>>, vector<1x8x1xf32>
    %43 = vector.shape_cast %42 : vector<1x8x1xf32> to vector<8x1xf32>
    %44 = vector.broadcast %43 : vector<8x1xf32> to vector<8x64xf32>
    %45 = arith.addf %41, %44 : vector<8x64xf32>
    %cst_47 = arith.constant 0.000000e+00 : f32
    %46 = vector.broadcast %cst_47 : f32 to vector<8x64xf32>
    %47 = arith.maximumf %45, %46 : vector<8x64xf32>
    %c0_48 = arith.constant 0 : index
    %c0_49 = arith.constant 0 : index
    %48 = vector.load %arg11[%c0_48, %c0_49] : memref<8x64xf32, #tpu.memory_space<vmem>>, vector<8x64xf32>
    tpu.vector_store %arg11[%c0_48, %c0_49], %47 {strides = array<i32>} : memref<8x64xf32, #tpu.memory_space<vmem>>, vector<8x64xf32>,
    %c0_50 = arith.constant 0 : index
    %c0_51 = arith.constant 0 : index
    %c0_52 = arith.constant 0 : index
    %49 = vector.load %arg5[%c0_50, %c0_51, %c0_52] : memref<2x8x16xf32, #tpu.memory_space<vmem>>, vector<1x8x16xf32>
    %50 = vector.shape_cast %49 : vector<1x8x16xf32> to vector<8x16xf32>
    %cst_53 = arith.constant dense<0.000000e+00> : vector<8x256xf32>
    %51 = tpu.matmul %50, %1, %cst_53 {dimension_numbers = #tpu.dot_dimension_numbers<[1], [0], [0], [1], [0, 0, 1, 1], [], []>, precision = #tpu.contract_precision<fp32>} : vector<8x16xf32>, vector<16x256xf32>, vector<8x256xf32> -> vector<8x256xf32>
    %c0_54 = arith.constant 0 : index
    %c0_55 = arith.constant 0 : index
    %c0_56 = arith.constant 0 : index
    %52 = vector.load %arg7[%c0_54, %c0_55, %c0_56] : memref<2x8x8xf32, #tpu.memory_space<vmem>>, vector<1x8x8xf32>
    %53 = vector.shape_cast %52 : vector<1x8x8xf32> to vector<8x8xf32>
    %cst_57 = arith.constant dense<0.000000e+00> : vector<8x256xf32>
    %54 = tpu.matmul %53, %21, %cst_57 {dimension_numbers = #tpu.dot_dimension_numbers<[1], [0], [0], [1], [0, 0, 1, 1], [], []>, precision = #tpu.contract_precision<fp32>} : vector<8x8xf32>, vector<8x256xf32>, vector<8x256xf32> -> vector<8x256xf32>
    %55 = arith.addf %51, %54 : vector<8x256xf32>
    %c0_58 = arith.constant 0 : index
    %c0_59 = arith.constant 0 : index
    %c0_60 = arith.constant 0 : index
    %56 = vector.load %arg8[%c0_58, %c0_59, %c0_60] : memref<2x8x1xf32, #tpu.memory_space<vmem>>, vector<1x8x1xf32>
    %57 = vector.shape_cast %56 : vector<1x8x1xf32> to vector<8x1xf32>
    %58 = vector.broadcast %57 : vector<8x1xf32> to vector<8x256xf32>
    %59 = arith.addf %55, %58 : vector<8x256xf32>
    %cst_61 = arith.constant 0.000000e+00 : f32
    %60 = vector.broadcast %cst_61 : f32 to vector<8x256xf32>
    %61 = arith.maximumf %59, %60 : vector<8x256xf32>
    %c0_62 = arith.constant 0 : index
    %c0_63 = arith.constant 0 : index
    %62 = vector.load %arg12[%c0_62, %c0_63] : memref<8x256xf32, #tpu.memory_space<vmem>>, vector<8x256xf32>
    tpu.vector_store %arg12[%c0_62, %c0_63], %61 {strides = array<i32>} : memref<8x256xf32, #tpu.memory_space<vmem>>, vector<8x256xf32>,
    %c1_64 = arith.constant 1 : index
    %c0_65 = arith.constant 0 : index
    %c0_66 = arith.constant 0 : index
    %63 = vector.load %arg5[%c1_64, %c0_65, %c0_66] : memref<2x8x16xf32, #tpu.memory_space<vmem>>, vector<1x8x16xf32>
    %64 = vector.shape_cast %63 : vector<1x8x16xf32> to vector<8x16xf32>
    %cst_67 = arith.constant dense<0.000000e+00> : vector<8x256xf32>
    %65 = tpu.matmul %64, %2, %cst_67 {dimension_numbers = #tpu.dot_dimension_numbers<[1], [0], [0], [1], [0, 0, 1, 1], [], []>, precision = #tpu.contract_precision<fp32>} : vector<8x16xf32>, vector<16x256xf32>, vector<8x256xf32> -> vector<8x256xf32>
    %c1_68 = arith.constant 1 : index
    %c0_69 = arith.constant 0 : index
    %c0_70 = arith.constant 0 : index
    %66 = vector.load %arg7[%c1_68, %c0_69, %c0_70] : memref<2x8x8xf32, #tpu.memory_space<vmem>>, vector<1x8x8xf32>
    %67 = vector.shape_cast %66 : vector<1x8x8xf32> to vector<8x8xf32>
    %cst_71 = arith.constant dense<0.000000e+00> : vector<8x256xf32>
    %68 = tpu.matmul %67, %31, %cst_71 {dimension_numbers = #tpu.dot_dimension_numbers<[1], [0], [0], [1], [0, 0, 1, 1], [], []>, precision = #tpu.contract_precision<fp32>} : vector<8x8xf32>, vector<8x256xf32>, vector<8x256xf32> -> vector<8x256xf32>
    %69 = arith.addf %65, %68 : vector<8x256xf32>
    %c1_72 = arith.constant 1 : index
    %c0_73 = arith.constant 0 : index
    %c0_74 = arith.constant 0 : index
    %70 = vector.load %arg8[%c1_72, %c0_73, %c0_74] : memref<2x8x1xf32, #tpu.memory_space<vmem>>, vector<1x8x1xf32>
    %71 = vector.shape_cast %70 : vector<1x8x1xf32> to vector<8x1xf32>
    %72 = vector.broadcast %71 : vector<8x1xf32> to vector<8x256xf32>
    %73 = arith.addf %69, %72 : vector<8x256xf32>
    %cst_75 = arith.constant 0.000000e+00 : f32
    %74 = vector.broadcast %cst_75 : f32 to vector<8x256xf32>
    %75 = arith.maximumf %73, %74 : vector<8x256xf32>
    %c0_76 = arith.constant 0 : index
    %c0_77 = arith.constant 0 : index
    %76 = vector.load %arg14[%c0_76, %c0_77] : memref<8x256xf32, #tpu.memory_space<vmem>>, vector<8x256xf32>
    tpu.vector_store %arg14[%c0_76, %c0_77], %75 {strides = array<i32>} : memref<8x256xf32, #tpu.memory_space<vmem>>, vector<8x256xf32>,
    return
  }
}

</mosaic_0001>

<llo_original>
// kernel: autoregressive_forward_pallas.1
$region0: #{autoregressive_forward_pallas.1}
  #allocation0 [shape = 'u32[]', space=smem, size = 0x4, offset = 0x4, fixed_abs, tag = 'smem constant byte address 0x4 - core index']
  #allocation1 [shape = 'u32[144,128]{1,0:T(1,128)}', space=vmem, size = 0x12000, scoped, tag = 'internal scratch']
  %s0 = inlined_call_operand.vmem [shape: f32[16,64], index: 0, kind: input, shape index: {}]
  %s1 = inlined_call_operand.vmem [shape: f32[16,256], index: 1, kind: input, shape index: {}]
  %s2 = inlined_call_operand.vmem [shape: f32[16,256], index: 2, kind: input, shape index: {}]
  %s3 = inlined_call_operand.vmem [shape: f32[256,64], index: 3, kind: input, shape index: {}]
  %s4 = inlined_call_operand.vmem [shape: f32[2,8,16], index: 4, kind: input, shape index: {}]
  %s5 = inlined_call_operand.vmem [shape: f32[2,8,16], index: 5, kind: input, shape index: {}]
  %s6 = inlined_call_operand.vmem [shape: f32[2,8,8], index: 6, kind: input, shape index: {}]
  %s7 = inlined_call_operand.vmem [shape: f32[2,8,8], index: 7, kind: input, shape index: {}]
  %s8 = inlined_call_operand.vmem [shape: f32[2,8,1], index: 8, kind: input, shape index: {}]
  %s9 = inlined_call_operand.vmem [shape: f32[8,64], index: 9, kind: output, shape index: {0}]
  %s10 = inlined_call_operand.vmem [shape: f32[8,256], index: 10, kind: output, shape index: {1}]
  %s11 = inlined_call_operand.vmem [shape: f32[8,64], index: 11, kind: output, shape index: {2}]
  %s12 = inlined_call_operand.vmem [shape: f32[8,256], index: 12, kind: output, shape index: {3}]
  %s13 = inlined_call_operand.vmem [shape: f32[8,256], index: 13, kind: output, shape index: {4}]
  %s14 = inlined_call_operand.vmem [shape: f32[8,256], index: 14, kind: output, shape index: {5}]
  %15 = xla_tuple %s9, %s10, %s11, %s12, %s13, %s14
  %s16 = sld [smem:[#allocation0]]
  $region86: #{autoregressive_forward_pallas.1} parent=0
    _
  %s18 = ssub.s32 1, %s16
  %s19 = scalar_select 0, %s18, %s16
  // Predicated region
  $region2: #{autoregressive_forward_pallas.1} parent=0 // pred_check
    _
  $region3: #{autoregressive_forward_pallas.1} parent=0 // pred_check_branch
    %21 = sbr.rel (0) target = $region5
  $region4: #{autoregressive_forward_pallas.1} parent=0 // pred_region
    _
  $region5: #{autoregressive_forward_pallas.1} parent=0 // pred_fallthru
    _
  // Predicated region
  $region6: #{autoregressive_forward_pallas.1} parent=0 // pred_check
    _
  $region7: #{autoregressive_forward_pallas.1} parent=0 // pred_check_branch
    %23 = sbr.rel (0) target = $region9
  $region8: #{autoregressive_forward_pallas.1} parent=0 // pred_region
    _
  $region9: #{autoregressive_forward_pallas.1} parent=0 // pred_fallthru
    _
  // Predicated region
  $region10: #{autoregressive_forward_pallas.1} parent=0 // pred_check
    _
  $region11: #{autoregressive_forward_pallas.1} parent=0 // pred_check_branch
    %25 = sbr.rel (0) target = $region13
  $region12: #{autoregressive_forward_pallas.1} parent=0 // pred_region
    _
  $region13: #{autoregressive_forward_pallas.1} parent=0 // pred_fallthru
    _
  // Predicated region
  $region14: #{autoregressive_forward_pallas.1} parent=0 // pred_check
    _
  $region15: #{autoregressive_forward_pallas.1} parent=0 // pred_check_branch
    %27 = sbr.rel (0) target = $region17
  $region16: #{autoregressive_forward_pallas.1} parent=0 // pred_region
    _
  $region17: #{autoregressive_forward_pallas.1} parent=0 // pred_fallthru
    _
  // Predicated region
  $region18: #{autoregressive_forward_pallas.1} parent=0 // pred_check
    _
  $region19: #{autoregressive_forward_pallas.1} parent=0 // pred_check_branch
    %29 = sbr.rel (0) target = $region21
  $region20: #{autoregressive_forward_pallas.1} parent=0 // pred_region
    _
  $region21: #{autoregressive_forward_pallas.1} parent=0 // pred_fallthru
    _
  // Predicated region
  $region22: #{autoregressive_forward_pallas.1} parent=0 // pred_check
    _
  $region23: #{autoregressive_forward_pallas.1} parent=0 // pred_check_branch
    %31 = sbr.rel (0) target = $region25
  $region24: #{autoregressive_forward_pallas.1} parent=0 // pred_region
    _
  $region25: #{autoregressive_forward_pallas.1} parent=0 // pred_fallthru
    _
  // Predicated region
  $region26: #{autoregressive_forward_pallas.1} parent=0 // pred_check
    _
  $region27: #{autoregressive_forward_pallas.1} parent=0 // pred_check_branch
    %33 = sbr.rel (0) target = $region29
  $region28: #{autoregressive_forward_pallas.1} parent=0 // pred_region
    _
  $region29: #{autoregressive_forward_pallas.1} parent=0 // pred_fallthru
    _
  // Predicated region
  $region30: #{autoregressive_forward_pallas.1} parent=0 // pred_check
    _
  $region31: #{autoregressive_forward_pallas.1} parent=0 // pred_check_branch
    %35 = sbr.rel (0) target = $region33
  $region32: #{autoregressive_forward_pallas.1} parent=0 // pred_region
    _
  $region33: #{autoregressive_forward_pallas.1} parent=0 // pred_fallthru
    _
  // Predicated region
  $region34: #{autoregressive_forward_pallas.1} parent=0 // pred_check
    _
  $region35: #{autoregressive_forward_pallas.1} parent=0 // pred_check_branch
    %37 = sbr.rel (0) target = $region37
  $region36: #{autoregressive_forward_pallas.1} parent=0 // pred_region
    _
  $region37: #{autoregressive_forward_pallas.1} parent=0 // pred_fallthru
    _
  %v38 = vld [vmem:[%s0] sm:$0xff]
  %v39 = vld [vmem:[%s0 + $0x8] sm:$0xff]
  %v40 = vld [vmem:[%s1] sm:$0xff]
  %v41 = vld [vmem:[%s1 + $0x8] sm:$0xff]
  %v42 = vld [vmem:[%s1 + $0x10] sm:$0xff]
  %v43 = vld [vmem:[%s1 + $0x18] sm:$0xff]
  %v44 = vld [vmem:[%s2] sm:$0xff]
  %v45 = vld [vmem:[%s2 + $0x8] sm:$0xff]
  %v46 = vld [vmem:[%s2 + $0x10] sm:$0xff]
  %v47 = vld [vmem:[%s2 + $0x18] sm:$0xff]
  %v48 = vld [vmem:[%s4] sm:$0xff]
  %v49 = vld [vmem:[%s8] sm:$0xff]
  %51 = vset.pattern.permute.xlu0 0
  %52 = vperm.xlu0 %51, %v49
  %v53 = vpop.permute.xlu0 %52
  %vm55 = vcmask 130048
  %v57 = vsel %vm55, %v48, 0
  %59 = vmatprep.subr.mxu0 0.0
  %v60 = vand.u32 %v38, 4294901760
  %61 = vmatpush1.msra.mxu0 %v60
  %62 = vmatprep.subr.mxu0 0.0
  %v63 = vand.u32 %v39, 4294901760
  %64 = vmatpush1.msra.mxu0 %v63
  %65 = vmatprep.subr.mxu0 0.0
  %66 = vmatpush1.msra.mxu0 0.0
  %67 = vmatprep.subr.mxu0 0.0
  %68 = vmatpush1.msra.mxu0 0.0
  %69 = vmatprep.subr.mxu0 0.0
  %70 = vmatpush1.msra.mxu0 0.0
  %71 = vmatprep.subr.mxu0 0.0
  %72 = vmatpush1.msra.mxu0 0.0
  %73 = vmatprep.subr.mxu0 0.0
  %74 = vmatpush1.msra.mxu0 0.0
  %75 = vmatprep.subr.mxu0 0.0
  %76 = vmatpush1.msra.mxu0 0.0
  %77 = vmatprep.subr.mxu0 0.0
  %78 = vmatpush1.msra.mxu0 0.0
  %79 = vmatprep.subr.mxu0 0.0
  %80 = vmatpush1.msra.mxu0 0.0
  %81 = vmatprep.subr.mxu0 0.0
  %82 = vmatpush1.msra.mxu0 0.0
  %83 = vmatprep.subr.mxu0 0.0
  %84 = vmatpush1.msra.mxu0 0.0
  %85 = vmatprep.subr.mxu0 0.0
  %86 = vmatpush1.msra.mxu0 0.0
  %87 = vmatprep.subr.mxu0 0.0
  %88 = vmatpush1.msra.mxu0 0.0
  %89 = vmatprep.subr.mxu0 0.0
  %90 = vmatpush1.msra.mxu0 0.0
  %91 = vmatprep.subr.mxu0 0.0
  %92 = vmatpush1.msra.mxu0 0.0
  %93 = vmatprep.subr.mxu0 0.0
  %94 = vmatpush1.msra.mxu0 0.0
  %95 = vmatprep.subr.mxu0 0.0
  %96 = vmatpush1.msra.mxu0 0.0
  %97 = vmatprep.subr.mxu0 0.0
  %98 = vmatpush1.msra.mxu0 0.0
  %99 = vmatprep.subr.mxu0 0.0
  %100 = vmatpush1.msra.mxu0 0.0
  %101 = vmatprep.subr.mxu0 0.0
  %102 = vmatpush1.msra.mxu0 0.0
  %103 = vmatprep.subr.mxu0 0.0
  %104 = vmatpush1.msra.mxu0 0.0
  %105 = vmatprep.subr.mxu0 0.0
  %106 = vmatpush1.msra.mxu0 0.0
  %107 = vmatprep.subr.mxu0 0.0
  %108 = vmatpush1.msra.mxu0 0.0
  %109 = vmatprep.subr.mxu0 0.0
  %110 = vmatpush1.msra.mxu0 0.0
  %111 = vmatprep.subr.mxu0 0.0
  %112 = vmatpush1.msra.mxu0 0.0
  %113 = vmatprep.subr.mxu0 0.0
  %114 = vmatpush1.msra.mxu0 0.0
  %115 = vmatprep.subr.mxu0 0.0
  %116 = vmatpush1.msra.mxu0 0.0
  %117 = vmatprep.subr.mxu0 0.0
  %118 = vmatpush1.msra.mxu0 0.0
  %119 = vmatprep.subr.mxu0 0.0
  %120 = vmatpush1.msra.mxu0 0.0
  %121 = vmatprep.subr.mxu0 0.0
  %122 = vmatpush1.msra.mxu0 0.0
  %123 = vmatprep.subr.mxu0 0.0
  %124 = vmatpush1.msra.mxu0 0.0
  %125 = vmatprep.mubr.f32.mxu0 0.0
  %v126 = vand.u32 %v57, 4294901760
  %v127 = vsub.f32 %v57, %v126
  %v128 = vand.u32 %v127, 4294901760
  %v129 = vsub.f32 %v127, %v128
  %v130 = vand.u32 %v129, 4294901760
  %131 = vmatmul.mubr.f32.gmra.mrb[0].mxu0 %v130
  %v132 = vpop.f32.mrb[0].mxu0
  %v133 = vadd.f32 %v53, %v132
  %v134 = vpop.f32.mrb[0].mxu0
  %135 = vdwg.mxu0
  %136 = vmatprep.subr.mxu0 0.0
  %v137 = vand.u32 %v38, 4294901760
  %v138 = vsub.f32 %v38, %v137
  %v139 = vand.u32 %v138, 4294901760
  %v140 = vsub.f32 %v138, %v139
  %v141 = vand.u32 %v140, 4294901760
  %142 = vmatpush1.msra.mxu0 %v141
  %143 = vmatprep.subr.mxu0 0.0
  %v144 = vand.u32 %v39, 4294901760
  %v145 = vsub.f32 %v39, %v144
  %v146 = vand.u32 %v145, 4294901760
  %v147 = vsub.f32 %v145, %v146
  %v148 = vand.u32 %v147, 4294901760
  %149 = vmatpush1.msra.mxu0 %v148
  %150 = vmatprep.subr.mxu0 0.0
  %151 = vmatpush1.msra.mxu0 0.0
  %152 = vmatprep.subr.mxu0 0.0
  %153 = vmatpush1.msra.mxu0 0.0
  %154 = vmatprep.subr.mxu0 0.0
  %155 = vmatpush1.msra.mxu0 0.0
  %156 = vmatprep.subr.mxu0 0.0
  %157 = vmatpush1.msra.mxu0 0.0
  %158 = vmatprep.subr.mxu0 0.0
  %159 = vmatpush1.msra.mxu0 0.0
  %160 = vmatprep.subr.mxu0 0.0
  %161 = vmatpush1.msra.mxu0 0.0
  %162 = vmatprep.subr.mxu0 0.0
  %163 = vmatpush1.msra.mxu0 0.0
  %164 = vmatprep.subr.mxu0 0.0
  %165 = vmatpush1.msra.mxu0 0.0
  %166 = vmatprep.subr.mxu0 0.0
  %167 = vmatpush1.msra.mxu0 0.0
  %168 = vmatprep.subr.mxu0 0.0
  %169 = vmatpush1.msra.mxu0 0.0
  %170 = vmatprep.subr.mxu0 0.0
  %171 = vmatpush1.msra.mxu0 0.0
  %172 = vmatprep.subr.mxu0 0.0
  %173 = vmatpush1.msra.mxu0 0.0
  %174 = vmatprep.subr.mxu0 0.0
  %175 = vmatpush1.msra.mxu0 0.0
  %176 = vmatprep.subr.mxu0 0.0
  %177 = vmatpush1.msra.mxu0 0.0
  %178 = vmatprep.subr.mxu0 0.0
  %179 = vmatpush1.msra.mxu0 0.0
  %180 = vmatprep.subr.mxu0 0.0
  %181 = vmatpush1.msra.mxu0 0.0
  %182 = vmatprep.subr.mxu0 0.0
  %183 = vmatpush1.msra.mxu0 0.0
  %184 = vmatprep.subr.mxu0 0.0
  %185 = vmatpush1.msra.mxu0 0.0
  %186 = vmatprep.subr.mxu0 0.0
  %187 = vmatpush1.msra.mxu0 0.0
  %188 = vmatprep.subr.mxu0 0.0
  %189 = vmatpush1.msra.mxu0 0.0
  %190 = vmatprep.subr.mxu0 0.0
  %191 = vmatpush1.msra.mxu0 0.0
  %192 = vmatprep.subr.mxu0 0.0
  %193 = vmatpush1.msra.mxu0 0.0
  %194 = vmatprep.subr.mxu0 0.0
  %195 = vmatpush1.msra.mxu0 0.0
  %196 = vmatprep.subr.mxu0 0.0
  %197 = vmatpush1.msra.mxu0 0.0
  %198 = vmatprep.subr.mxu0 0.0
  %199 = vmatpush1.msra.mxu0 0.0
  %200 = vmatprep.subr.mxu0 0.0
  %201 = vmatpush1.msra.mxu0 0.0
  %202 = vmatprep.subr.mxu0 0.0
  %203 = vmatpush1.msra.mxu0 0.0
  %204 = vmatprep.subr.mxu0 0.0
  %205 = vmatpush1.msra.mxu0 0.0
  %206 = vmatprep.subr.mxu0 0.0
  %207 = vmatpush1.msra.mxu0 0.0
  %208 = vmatprep.subr.mxu0 0.0
  %209 = vmatpush1.msra.mxu0 0.0
  %210 = vmatprep.mubr.f32.mxu0 0.0
  %v211 = vand.u32 %v57, 4294901760
  %212 = vmatmul.mubr.f32.gmra.mrb[0].mxu0 %v211
  %v213 = vpop.f32.mrb[0].mxu0
  %v214 = vadd.f32 %v133, %v213
  %v215 = vpop.f32.mrb[0].mxu0
  %216 = vdwg.mxu0
  %217 = vmatprep.subr.mxu0 0.0
  %v218 = vand.u32 %v38, 4294901760
  %v219 = vsub.f32 %v38, %v218
  %220 = vmatpush1.msra.mxu0 %v219
  %221 = vmatprep.subr.mxu0 0.0
  %v222 = vand.u32 %v39, 4294901760
  %v223 = vsub.f32 %v39, %v222
  %224 = vmatpush1.msra.mxu0 %v223
  %225 = vmatprep.subr.mxu0 0.0
  %226 = vmatpush1.msra.mxu0 0.0
  %227 = vmatprep.subr.mxu0 0.0
  %228 = vmatpush1.msra.mxu0 0.0
  %229 = vmatprep.subr.mxu0 0.0
  %230 = vmatpush1.msra.mxu0 0.0
  %231 = vmatprep.subr.mxu0 0.0
  %232 = vmatpush1.msra.mxu0 0.0
  %233 = vmatprep.subr.mxu0 0.0
  %234 = vmatpush1.msra.mxu0 0.0
  %235 = vmatprep.subr.mxu0 0.0
  %236 = vmatpush1.msra.mxu0 0.0
  %237 = vmatprep.subr.mxu0 0.0
  %238 = vmatpush1.msra.mxu0 0.0
  %239 = vmatprep.subr.mxu0 0.0
  %240 = vmatpush1.msra.mxu0 0.0
  %241 = vmatprep.subr.mxu0 0.0
  %242 = vmatpush1.msra.mxu0 0.0
  %243 = vmatprep.subr.mxu0 0.0
  %244 = vmatpush1.msra.mxu0 0.0
  %245 = vmatprep.subr.mxu0 0.0
  %246 = vmatpush1.msra.mxu0 0.0
  %247 = vmatprep.subr.mxu0 0.0
  %248 = vmatpush1.msra.mxu0 0.0
  %249 = vmatprep.subr.mxu0 0.0
  %250 = vmatpush1.msra.mxu0 0.0
  %251 = vmatprep.subr.mxu0 0.0
  %252 = vmatpush1.msra.mxu0 0.0
  %253 = vmatprep.subr.mxu0 0.0
  %254 = vmatpush1.msra.mxu0 0.0
  %255 = vmatprep.subr.mxu0 0.0
  %256 = vmatpush1.msra.mxu0 0.0
  %257 = vmatprep.subr.mxu0 0.0
  %258 = vmatpush1.msra.mxu0 0.0
  %259 = vmatprep.subr.mxu0 0.0
  %260 = vmatpush1.msra.mxu0 0.0
  %261 = vmatprep.subr.mxu0 0.0
  %262 = vmatpush1.msra.mxu0 0.0
  %263 = vmatprep.subr.mxu0 0.0
  %264 = vmatpush1.msra.mxu0 0.0
  %265 = vmatprep.subr.mxu0 0.0
  %266 = vmatpush1.msra.mxu0 0.0
  %267 = vmatprep.subr.mxu0 0.0
  %268 = vmatpush1.msra.mxu0 0.0
  %269 = vmatprep.subr.mxu0 0.0
  %270 = vmatpush1.msra.mxu0 0.0
  %271 = vmatprep.subr.mxu0 0.0
  %272 = vmatpush1.msra.mxu0 0.0
  %273 = vmatprep.subr.mxu0 0.0
  %274 = vmatpush1.msra.mxu0 0.0
  %275 = vmatprep.subr.mxu0 0.0
  %276 = vmatpush1.msra.mxu0 0.0
  %277 = vmatprep.subr.mxu0 0.0
  %278 = vmatpush1.msra.mxu0 0.0
  %279 = vmatprep.subr.mxu0 0.0
  %280 = vmatpush1.msra.mxu0 0.0
  %281 = vmatprep.subr.mxu0 0.0
  %282 = vmatpush1.msra.mxu0 0.0
  %283 = vmatprep.subr.mxu0 0.0
  %284 = vmatpush1.msra.mxu0 0.0
  %285 = vmatprep.mubr.f32.mxu0 0.0
  %v286 = vand.u32 %v57, 4294901760
  %v287 = vsub.f32 %v57, %v286
  %288 = vmatmul.mubr.f32.gmra.mrb[0].mxu0 %v287
  %v289 = vpop.f32.mrb[0].mxu0
  %v290 = vadd.f32 %v214, %v289
  %v291 = vpop.f32.mrb[0].mxu0
  %292 = vdwg.mxu0
  %293 = vmatprep.subr.mxu0 0.0
  %v294 = vand.u32 %v38, 4294901760
  %295 = vmatpush1.msra.mxu0 %v294
  %296 = vmatprep.subr.mxu0 0.0
  %v297 = vand.u32 %v39, 4294901760
  %298 = vmatpush1.msra.mxu0 %v297
  %299 = vmatprep.subr.mxu0 0.0
  %300 = vmatpush1.msra.mxu0 0.0
  %301 = vmatprep.subr.mxu0 0.0
  %302 = vmatpush1.msra.mxu0 0.0
  %303 = vmatprep.subr.mxu0 0.0
  %304 = vmatpush1.msra.mxu0 0.0
  %305 = vmatprep.subr.mxu0 0.0
  %306 = vmatpush1.msra.mxu0 0.0
  %307 = vmatprep.subr.mxu0 0.0
  %308 = vmatpush1.msra.mxu0 0.0
  %309 = vmatprep.subr.mxu0 0.0
  %310 = vmatpush1.msra.mxu0 0.0
  %311 = vmatprep.subr.mxu0 0.0
  %312 = vmatpush1.msra.mxu0 0.0
  %313 = vmatprep.subr.mxu0 0.0
  %314 = vmatpush1.msra.mxu0 0.0
  %315 = vmatprep.subr.mxu0 0.0
  %316 = vmatpush1.msra.mxu0 0.0
  %317 = vmatprep.subr.mxu0 0.0
  %318 = vmatpush1.msra.mxu0 0.0
  %319 = vmatprep.subr.mxu0 0.0
  %320 = vmatpush1.msra.mxu0 0.0
  %321 = vmatprep.subr.mxu0 0.0
  %322 = vmatpush1.msra.mxu0 0.0
  %323 = vmatprep.subr.mxu0 0.0
  %324 = vmatpush1.msra.mxu0 0.0
  %325 = vmatprep.subr.mxu0 0.0
  %326 = vmatpush1.msra.mxu0 0.0
  %327 = vmatprep.subr.mxu0 0.0
  %328 = vmatpush1.msra.mxu0 0.0
  %329 = vmatprep.subr.mxu0 0.0
  %330 = vmatpush1.msra.mxu0 0.0
  %331 = vmatprep.subr.mxu0 0.0
  %332 = vmatpush1.msra.mxu0 0.0
  %333 = vmatprep.subr.mxu0 0.0
  %334 = vmatpush1.msra.mxu0 0.0
  %335 = vmatprep.subr.mxu0 0.0
  %336 = vmatpush1.msra.mxu0 0.0
  %337 = vmatprep.subr.mxu0 0.0
  %338 = vmatpush1.msra.mxu0 0.0
  %339 = vmatprep.subr.mxu0 0.0
  %340 = vmatpush1.msra.mxu0 0.0
  %341 = vmatprep.subr.mxu0 0.0
  %342 = vmatpush1.msra.mxu0 0.0
  %343 = vmatprep.subr.mxu0 0.0
  %344 = vmatpush1.msra.mxu0 0.0
  %345 = vmatprep.subr.mxu0 0.0
  %346 = vmatpush1.msra.mxu0 0.0
  %347 = vmatprep.subr.mxu0 0.0
  %348 = vmatpush1.msra.mxu0 0.0
  %349 = vmatprep.subr.mxu0 0.0
  %350 = vmatpush1.msra.mxu0 0.0
  %351 = vmatprep.subr.mxu0 0.0
  %352 = vmatpush1.msra.mxu0 0.0
  %353 = vmatprep.subr.mxu0 0.0
  %354 = vmatpush1.msra.mxu0 0.0
  %355 = vmatprep.subr.mxu0 0.0
  %356 = vmatpush1.msra.mxu0 0.0
  %357 = vmatprep.subr.mxu0 0.0
  %358 = vmatpush1.msra.mxu0 0.0
  %359 = vmatprep.mubr.f32.mxu0 0.0
  %v360 = vand.u32 %v57, 4294901760
  %v361 = vsub.f32 %v57, %v360
  %v362 = vand.u32 %v361, 4294901760
  %363 = vmatmul.mubr.f32.gmra.mrb[0].mxu0 %v362
  %v364 = vpop.f32.mrb[0].mxu0
  %v365 = vadd.f32 %v290, %v364
  %v366 = vpop.f32.mrb[0].mxu0
  %367 = vdwg.mxu0
  %368 = vmatprep.subr.mxu0 0.0
  %v369 = vand.u32 %v38, 4294901760
  %v370 = vsub.f32 %v38, %v369
  %v371 = vand.u32 %v370, 4294901760
  %372 = vmatpush1.msra.mxu0 %v371
  %373 = vmatprep.subr.mxu0 0.0
  %v374 = vand.u32 %v39, 4294901760
  %v375 = vsub.f32 %v39, %v374
  %v376 = vand.u32 %v375, 4294901760
  %377 = vmatpush1.msra.mxu0 %v376
  %378 = vmatprep.subr.mxu0 0.0
  %379 = vmatpush1.msra.mxu0 0.0
  %380 = vmatprep.subr.mxu0 0.0
  %381 = vmatpush1.msra.mxu0 0.0
  %382 = vmatprep.subr.mxu0 0.0
  %383 = vmatpush1.msra.mxu0 0.0
  %384 = vmatprep.subr.mxu0 0.0
  %385 = vmatpush1.msra.mxu0 0.0
  %386 = vmatprep.subr.mxu0 0.0
  %387 = vmatpush1.msra.mxu0 0.0
  %388 = vmatprep.subr.mxu0 0.0
  %389 = vmatpush1.msra.mxu0 0.0
  %390 = vmatprep.subr.mxu0 0.0
  %391 = vmatpush1.msra.mxu0 0.0
  %392 = vmatprep.subr.mxu0 0.0
  %393 = vmatpush1.msra.mxu0 0.0
  %394 = vmatprep.subr.mxu0 0.0
  %395 = vmatpush1.msra.mxu0 0.0
  %396 = vmatprep.subr.mxu0 0.0
  %397 = vmatpush1.msra.mxu0 0.0
  %398 = vmatprep.subr.mxu0 0.0
  %399 = vmatpush1.msra.mxu0 0.0
  %400 = vmatprep.subr.mxu0 0.0
  %401 = vmatpush1.msra.mxu0 0.0
  %402 = vmatprep.subr.mxu0 0.0
  %403 = vmatpush1.msra.mxu0 0.0
  %404 = vmatprep.subr.mxu0 0.0
  %405 = vmatpush1.msra.mxu0 0.0
  %406 = vmatprep.subr.mxu0 0.0
  %407 = vmatpush1.msra.mxu0 0.0
  %408 = vmatprep.subr.mxu0 0.0
  %409 = vmatpush1.msra.mxu0 0.0
  %410 = vmatprep.subr.mxu0 0.0
  %411 = vmatpush1.msra.mxu0 0.0
  %412 = vmatprep.subr.mxu0 0.0
  %413 = vmatpush1.msra.mxu0 0.0
  %414 = vmatprep.subr.mxu0 0.0
  %415 = vmatpush1.msra.mxu0 0.0
  %416 = vmatprep.subr.mxu0 0.0
  %417 = vmatpush1.msra.mxu0 0.0
  %418 = vmatprep.subr.mxu0 0.0
  %419 = vmatpush1.msra.mxu0 0.0
  %420 = vmatprep.subr.mxu0 0.0
  %421 = vmatpush1.msra.mxu0 0.0
  %422 = vmatprep.subr.mxu0 0.0
  %423 = vmatpush1.msra.mxu0 0.0
  %424 = vmatprep.subr.mxu0 0.0
  %425 = vmatpush1.msra.mxu0 0.0
  %426 = vmatprep.subr.mxu0 0.0
  %427 = vmatpush1.msra.mxu0 0.0
  %428 = vmatprep.subr.mxu0 0.0
  %429 = vmatpush1.msra.mxu0 0.0
  %430 = vmatprep.subr.mxu0 0.0
  %431 = vmatpush1.msra.mxu0 0.0
  %432 = vmatprep.subr.mxu0 0.0
  %433 = vmatpush1.msra.mxu0 0.0
  %434 = vmatprep.subr.mxu0 0.0
  %435 = vmatpush1.msra.mxu0 0.0
  %436 = vmatprep.subr.mxu0 0.0
  %437 = vmatpush1.msra.mxu0 0.0
  %438 = vmatprep.mubr.f32.mxu0 0.0
  %v439 = vand.u32 %v57, 4294901760
  %440 = vmatmul.mubr.f32.gmra.mrb[0].mxu0 %v439
  %v441 = vpop.f32.mrb[0].mxu0
  %v442 = vadd.f32 %v365, %v441
  %v443 = vpop.f32.mrb[0].mxu0
  %444 = vdwg.mxu0
  %445 = vmatprep.subr.mxu0 0.0
  %v446 = vand.u32 %v38, 4294901760
  %447 = vmatpush1.msra.mxu0 %v446
  %448 = vmatprep.subr.mxu0 0.0
  %v449 = vand.u32 %v39, 4294901760
  %450 = vmatpush1.msra.mxu0 %v449
  %451 = vmatprep.subr.mxu0 0.0
  %452 = vmatpush1.msra.mxu0 0.0
  %453 = vmatprep.subr.mxu0 0.0
  %454 = vmatpush1.msra.mxu0 0.0
  %455 = vmatprep.subr.mxu0 0.0
  %456 = vmatpush1.msra.mxu0 0.0
  %457 = vmatprep.subr.mxu0 0.0
  %458 = vmatpush1.msra.mxu0 0.0
  %459 = vmatprep.subr.mxu0 0.0
  %460 = vmatpush1.msra.mxu0 0.0
  %461 = vmatprep.subr.mxu0 0.0
  %462 = vmatpush1.msra.mxu0 0.0
  %463 = vmatprep.subr.mxu0 0.0
  %464 = vmatpush1.msra.mxu0 0.0
  %465 = vmatprep.subr.mxu0 0.0
  %466 = vmatpush1.msra.mxu0 0.0
  %467 = vmatprep.subr.mxu0 0.0
  %468 = vmatpush1.msra.mxu0 0.0
  %469 = vmatprep.subr.mxu0 0.0
  %470 = vmatpush1.msra.mxu0 0.0
  %471 = vmatprep.subr.mxu0 0.0
  %472 = vmatpush1.msra.mxu0 0.0
  %473 = vmatprep.subr.mxu0 0.0
  %474 = vmatpush1.msra.mxu0 0.0
  %475 = vmatprep.subr.mxu0 0.0
  %476 = vmatpush1.msra.mxu0 0.0
  %477 = vmatprep.subr.mxu0 0.0
  %478 = vmatpush1.msra.mxu0 0.0
  %479 = vmatprep.subr.mxu0 0.0
  %480 = vmatpush1.msra.mxu0 0.0
  %481 = vmatprep.subr.mxu0 0.0
  %482 = vmatpush1.msra.mxu0 0.0
  %483 = vmatprep.subr.mxu0 0.0
  %484 = vmatpush1.msra.mxu0 0.0
  %485 = vmatprep.subr.mxu0 0.0
  %486 = vmatpush1.msra.mxu0 0.0
  %487 = vmatprep.subr.mxu0 0.0
  %488 = vmatpush1.msra.mxu0 0.0
  %489 = vmatprep.subr.mxu0 0.0
  %490 = vmatpush1.msra.mxu0 0.0
  %491 = vmatprep.subr.mxu0 0.0
  %492 = vmatpush1.msra.mxu0 0.0
  %493 = vmatprep.subr.mxu0 0.0
  %494 = vmatpush1.msra.mxu0 0.0
  %495 = vmatprep.subr.mxu0 0.0
  %496 = vmatpush1.msra.mxu0 0.0
  %497 = vmatprep.subr.mxu0 0.0
  %498 = vmatpush1.msra.mxu0 0.0
  %499 = vmatprep.subr.mxu0 0.0
  %500 = vmatpush1.msra.mxu0 0.0
  %501 = vmatprep.subr.mxu0 0.0
  %502 = vmatpush1.msra.mxu0 0.0
  %503 = vmatprep.subr.mxu0 0.0
  %504 = vmatpush1.msra.mxu0 0.0
  %505 = vmatprep.subr.mxu0 0.0
  %506 = vmatpush1.msra.mxu0 0.0
  %507 = vmatprep.subr.mxu0 0.0
  %508 = vmatpush1.msra.mxu0 0.0
  %509 = vmatprep.subr.mxu0 0.0
  %510 = vmatpush1.msra.mxu0 0.0
  %511 = vmatprep.mubr.f32.mxu0 0.0
  %v512 = vand.u32 %v57, 4294901760
  %513 = vmatmul.mubr.f32.gmra.mrb[0].mxu0 %v512
  %v514 = vpop.f32.mrb[0].mxu0
  %v515 = vadd.f32 %v442, %v514
  %v516 = vpop.f32.mrb[0].mxu0
  %517 = vdwg.mxu0
  %v518 = vmax.f32 %v515, 0.0
  %vm519 = vcmask 523264
  %520 = vst.msk [vmem:[%s9] sm:$0xff] %vm519, %v518
  %v521 = vld [vmem:[%s4] sm:$0xff]
  %v522 = vld [vmem:[%s8] sm:$0xff]
  %524 = vset.pattern.permute.xlu0 0
  %525 = vperm.xlu0 %524, %v522
  %v526 = vpop.permute.xlu0 %525
  %v529 = vsel %vm55, %v521, 0
  %v531 = vand.u32 %v41, 4294901760
  %532 = vmatprep.subr.mxu0 %v531
  %v533 = vand.u32 %v40, 4294901760
  %534 = vmatpush1.msra.mxu0 %v533
  %v535 = vand.u32 %v43, 4294901760
  %536 = vmatprep.subr.mxu0 %v535
  %v537 = vand.u32 %v42, 4294901760
  %538 = vmatpush1.msra.mxu0 %v537
  %539 = vmatprep.subr.mxu0 0.0
  %540 = vmatpush1.msra.mxu0 0.0
  %541 = vmatprep.subr.mxu0 0.0
  %542 = vmatpush1.msra.mxu0 0.0
  %543 = vmatprep.subr.mxu0 0.0
  %544 = vmatpush1.msra.mxu0 0.0
  %545 = vmatprep.subr.mxu0 0.0
  %546 = vmatpush1.msra.mxu0 0.0
  %547 = vmatprep.subr.mxu0 0.0
  %548 = vmatpush1.msra.mxu0 0.0
  %549 = vmatprep.subr.mxu0 0.0
  %550 = vmatpush1.msra.mxu0 0.0
  %551 = vmatprep.subr.mxu0 0.0
  %552 = vmatpush1.msra.mxu0 0.0
  %553 = vmatprep.subr.mxu0 0.0
  %554 = vmatpush1.msra.mxu0 0.0
  %555 = vmatprep.subr.mxu0 0.0
  %556 = vmatpush1.msra.mxu0 0.0
  %557 = vmatprep.subr.mxu0 0.0
  %558 = vmatpush1.msra.mxu0 0.0
  %559 = vmatprep.subr.mxu0 0.0
  %560 = vmatpush1.msra.mxu0 0.0
  %561 = vmatprep.subr.mxu0 0.0
  %562 = vmatpush1.msra.mxu0 0.0
  %563 = vmatprep.subr.mxu0 0.0
  %564 = vmatpush1.msra.mxu0 0.0
  %565 = vmatprep.subr.mxu0 0.0
  %566 = vmatpush1.msra.mxu0 0.0
  %567 = vmatprep.subr.mxu0 0.0
  %568 = vmatpush1.msra.mxu0 0.0
  %569 = vmatprep.subr.mxu0 0.0
  %570 = vmatpush1.msra.mxu0 0.0
  %571 = vmatprep.subr.mxu0 0.0
  %572 = vmatpush1.msra.mxu0 0.0
  %573 = vmatprep.subr.mxu0 0.0
  %574 = vmatpush1.msra.mxu0 0.0
  %575 = vmatprep.subr.mxu0 0.0
  %576 = vmatpush1.msra.mxu0 0.0
  %577 = vmatprep.subr.mxu0 0.0
  %578 = vmatpush1.msra.mxu0 0.0
  %579 = vmatprep.subr.mxu0 0.0
  %580 = vmatpush1.msra.mxu0 0.0
  %581 = vmatprep.subr.mxu0 0.0
  %582 = vmatpush1.msra.mxu0 0.0
  %583 = vmatprep.subr.mxu0 0.0
  %584 = vmatpush1.msra.mxu0 0.0
  %585 = vmatprep.subr.mxu0 0.0
  %586 = vmatpush1.msra.mxu0 0.0
  %587 = vmatprep.subr.mxu0 0.0
  %588 = vmatpush1.msra.mxu0 0.0
  %589 = vmatprep.subr.mxu0 0.0
  %590 = vmatpush1.msra.mxu0 0.0
  %591 = vmatprep.subr.mxu0 0.0
  %592 = vmatpush1.msra.mxu0 0.0
  %593 = vmatprep.subr.mxu0 0.0
  %594 = vmatpush1.msra.mxu0 0.0
  %595 = vmatprep.subr.mxu0 0.0
  %596 = vmatpush1.msra.mxu0 0.0
  %597 = vmatprep.subr.mxu0 0.0
  %598 = vmatpush1.msra.mxu0 0.0
  %599 = vmatprep.mubr.f32.mxu0 0.0
  %v600 = vand.u32 %v529, 4294901760
  %v601 = vsub.f32 %v529, %v600
  %v602 = vand.u32 %v601, 4294901760
  %v603 = vsub.f32 %v601, %v602
  %v604 = vand.u32 %v603, 4294901760
  %605 = vmatmul.mubr.f32.gmra.mrb[0].mxu0 %v604
  %v606 = vpop.f32.mrb[0].mxu0
  %v607 = vadd.f32 %v526, %v606
  %v608 = vpop.f32.mrb[0].mxu0
  %v609 = vadd.f32 %v526, %v608
  %610 = vdwg.mxu0
  %v611 = vand.u32 %v41, 4294901760
  %v612 = vsub.f32 %v41, %v611
  %v613 = vand.u32 %v612, 4294901760
  %v614 = vsub.f32 %v612, %v613
  %v615 = vand.u32 %v614, 4294901760
  %616 = vmatprep.subr.mxu0 %v615
  %v617 = vand.u32 %v40, 4294901760
  %v618 = vsub.f32 %v40, %v617
  %v619 = vand.u32 %v618, 4294901760
  %v620 = vsub.f32 %v618, %v619
  %v621 = vand.u32 %v620, 4294901760
  %622 = vmatpush1.msra.mxu0 %v621
  %v623 = vand.u32 %v43, 4294901760
  %v624 = vsub.f32 %v43, %v623
  %v625 = vand.u32 %v624, 4294901760
  %v626 = vsub.f32 %v624, %v625
  %v627 = vand.u32 %v626, 4294901760
  %628 = vmatprep.subr.mxu0 %v627
  %v629 = vand.u32 %v42, 4294901760
  %v630 = vsub.f32 %v42, %v629
  %v631 = vand.u32 %v630, 4294901760
  %v632 = vsub.f32 %v630, %v631
  %v633 = vand.u32 %v632, 4294901760
  %634 = vmatpush1.msra.mxu0 %v633
  %635 = vmatprep.subr.mxu0 0.0
  %636 = vmatpush1.msra.mxu0 0.0
  %637 = vmatprep.subr.mxu0 0.0
  %638 = vmatpush1.msra.mxu0 0.0
  %639 = vmatprep.subr.mxu0 0.0
  %640 = vmatpush1.msra.mxu0 0.0
  %641 = vmatprep.subr.mxu0 0.0
  %642 = vmatpush1.msra.mxu0 0.0
  %643 = vmatprep.subr.mxu0 0.0
  %644 = vmatpush1.msra.mxu0 0.0
  %645 = vmatprep.subr.mxu0 0.0
  %646 = vmatpush1.msra.mxu0 0.0
  %647 = vmatprep.subr.mxu0 0.0
  %648 = vmatpush1.msra.mxu0 0.0
  %649 = vmatprep.subr.mxu0 0.0
  %650 = vmatpush1.msra.mxu0 0.0
  %651 = vmatprep.subr.mxu0 0.0
  %652 = vmatpush1.msra.mxu0 0.0
  %653 = vmatprep.subr.mxu0 0.0
  %654 = vmatpush1.msra.mxu0 0.0
  %655 = vmatprep.subr.mxu0 0.0
  %656 = vmatpush1.msra.mxu0 0.0
  %657 = vmatprep.subr.mxu0 0.0
  %658 = vmatpush1.msra.mxu0 0.0
  %659 = vmatprep.subr.mxu0 0.0
  %660 = vmatpush1.msra.mxu0 0.0
  %661 = vmatprep.subr.mxu0 0.0
  %662 = vmatpush1.msra.mxu0 0.0
  %663 = vmatprep.subr.mxu0 0.0
  %664 = vmatpush1.msra.mxu0 0.0
  %665 = vmatprep.subr.mxu0 0.0
  %666 = vmatpush1.msra.mxu0 0.0
  %667 = vmatprep.subr.mxu0 0.0
  %668 = vmatpush1.msra.mxu0 0.0
  %669 = vmatprep.subr.mxu0 0.0
  %670 = vmatpush1.msra.mxu0 0.0
  %671 = vmatprep.subr.mxu0 0.0
  %672 = vmatpush1.msra.mxu0 0.0
  %673 = vmatprep.subr.mxu0 0.0
  %674 = vmatpush1.msra.mxu0 0.0
  %675 = vmatprep.subr.mxu0 0.0
  %676 = vmatpush1.msra.mxu0 0.0
  %677 = vmatprep.subr.mxu0 0.0
  %678 = vmatpush1.msra.mxu0 0.0
  %679 = vmatprep.subr.mxu0 0.0
  %680 = vmatpush1.msra.mxu0 0.0
  %681 = vmatprep.subr.mxu0 0.0
  %682 = vmatpush1.msra.mxu0 0.0
  %683 = vmatprep.subr.mxu0 0.0
  %684 = vmatpush1.msra.mxu0 0.0
  %685 = vmatprep.subr.mxu0 0.0
  %686 = vmatpush1.msra.mxu0 0.0
  %687 = vmatprep.subr.mxu0 0.0
  %688 = vmatpush1.msra.mxu0 0.0
  %689 = vmatprep.subr.mxu0 0.0
  %690 = vmatpush1.msra.mxu0 0.0
  %691 = vmatprep.subr.mxu0 0.0
  %692 = vmatpush1.msra.mxu0 0.0
  %693 = vmatprep.subr.mxu0 0.0
  %694 = vmatpush1.msra.mxu0 0.0
  %695 = vmatprep.mubr.f32.mxu0 0.0
  %v696 = vand.u32 %v529, 4294901760
  %697 = vmatmul.mubr.f32.gmra.mrb[0].mxu0 %v696
  %v698 = vpop.f32.mrb[0].mxu0
  %v699 = vadd.f32 %v607, %v698
  %v700 = vpop.f32.mrb[0].mxu0
  %v701 = vadd.f32 %v609, %v700
  %702 = vdwg.mxu0
  %v703 = vand.u32 %v41, 4294901760
  %v704 = vsub.f32 %v41, %v703
  %705 = vmatprep.subr.mxu0 %v704
  %v706 = vand.u32 %v40, 4294901760
  %v707 = vsub.f32 %v40, %v706
  %708 = vmatpush1.msra.mxu0 %v707
  %v709 = vand.u32 %v43, 4294901760
  %v710 = vsub.f32 %v43, %v709
  %711 = vmatprep.subr.mxu0 %v710
  %v712 = vand.u32 %v42, 4294901760
  %v713 = vsub.f32 %v42, %v712
  %714 = vmatpush1.msra.mxu0 %v713
  %715 = vmatprep.subr.mxu0 0.0
  %716 = vmatpush1.msra.mxu0 0.0
  %717 = vmatprep.subr.mxu0 0.0
  %718 = vmatpush1.msra.mxu0 0.0
  %719 = vmatprep.subr.mxu0 0.0
  %720 = vmatpush1.msra.mxu0 0.0
  %721 = vmatprep.subr.mxu0 0.0
  %722 = vmatpush1.msra.mxu0 0.0
  %723 = vmatprep.subr.mxu0 0.0
  %724 = vmatpush1.msra.mxu0 0.0
  %725 = vmatprep.subr.mxu0 0.0
  %726 = vmatpush1.msra.mxu0 0.0
  %727 = vmatprep.subr.mxu0 0.0
  %728 = vmatpush1.msra.mxu0 0.0
  %729 = vmatprep.subr.mxu0 0.0
  %730 = vmatpush1.msra.mxu0 0.0
  %731 = vmatprep.subr.mxu0 0.0
  %732 = vmatpush1.msra.mxu0 0.0
  %733 = vmatprep.subr.mxu0 0.0
  %734 = vmatpush1.msra.mxu0 0.0
  %735 = vmatprep.subr.mxu0 0.0
  %736 = vmatpush1.msra.mxu0 0.0
  %737 = vmatprep.subr.mxu0 0.0
  %738 = vmatpush1.msra.mxu0 0.0
  %739 = vmatprep.subr.mxu0 0.0
  %740 = vmatpush1.msra.mxu0 0.0
  %741 = vmatprep.subr.mxu0 0.0
  %742 = vmatpush1.msra.mxu0 0.0
  %743 = vmatprep.subr.mxu0 0.0
  %744 = vmatpush1.msra.mxu0 0.0
  %745 = vmatprep.subr.mxu0 0.0
  %746 = vmatpush1.msra.mxu0 0.0
  %747 = vmatprep.subr.mxu0 0.0
  %748 = vmatpush1.msra.mxu0 0.0
  %749 = vmatprep.subr.mxu0 0.0
  %750 = vmatpush1.msra.mxu0 0.0
  %751 = vmatprep.subr.mxu0 0.0
  %752 = vmatpush1.msra.mxu0 0.0
  %753 = vmatprep.subr.mxu0 0.0
  %754 = vmatpush1.msra.mxu0 0.0
  %755 = vmatprep.subr.mxu0 0.0
  %756 = vmatpush1.msra.mxu0 0.0
  %757 = vmatprep.subr.mxu0 0.0
  %758 = vmatpush1.msra.mxu0 0.0
  %759 = vmatprep.subr.mxu0 0.0
  %760 = vmatpush1.msra.mxu0 0.0
  %761 = vmatprep.subr.mxu0 0.0
  %762 = vmatpush1.msra.mxu0 0.0
  %763 = vmatprep.subr.mxu0 0.0
  %764 = vmatpush1.msra.mxu0 0.0
  %765 = vmatprep.subr.mxu0 0.0
  %766 = vmatpush1.msra.mxu0 0.0
  %767 = vmatprep.subr.mxu0 0.0
  %768 = vmatpush1.msra.mxu0 0.0
  %769 = vmatprep.subr.mxu0 0.0
  %770 = vmatpush1.msra.mxu0 0.0
  %771 = vmatprep.subr.mxu0 0.0
  %772 = vmatpush1.msra.mxu0 0.0
  %773 = vmatprep.subr.mxu0 0.0
  %774 = vmatpush1.msra.mxu0 0.0
  %775 = vmatprep.mubr.f32.mxu0 0.0
  %v776 = vand.u32 %v529, 4294901760
  %v777 = vsub.f32 %v529, %v776
  %778 = vmatmul.mubr.f32.gmra.mrb[0].mxu0 %v777
  %v779 = vpop.f32.mrb[0].mxu0
  %v780 = vadd.f32 %v699, %v779
  %v781 = vpop.f32.mrb[0].mxu0
  %v782 = vadd.f32 %v701, %v781
  %783 = vdwg.mxu0
  %v784 = vand.u32 %v41, 4294901760
  %785 = vmatprep.subr.mxu0 %v784
  %v786 = vand.u32 %v40, 4294901760
  %787 = vmatpush1.msra.mxu0 %v786
  %v788 = vand.u32 %v43, 4294901760
  %789 = vmatprep.subr.mxu0 %v788
  %v790 = vand.u32 %v42, 4294901760
  %791 = vmatpush1.msra.mxu0 %v790
  %792 = vmatprep.subr.mxu0 0.0
  %793 = vmatpush1.msra.mxu0 0.0
  %794 = vmatprep.subr.mxu0 0.0
  %795 = vmatpush1.msra.mxu0 0.0
  %796 = vmatprep.subr.mxu0 0.0
  %797 = vmatpush1.msra.mxu0 0.0
  %798 = vmatprep.subr.mxu0 0.0
  %799 = vmatpush1.msra.mxu0 0.0
  %800 = vmatprep.subr.mxu0 0.0
  %801 = vmatpush1.msra.mxu0 0.0
  %802 = vmatprep.subr.mxu0 0.0
  %803 = vmatpush1.msra.mxu0 0.0
  %804 = vmatprep.subr.mxu0 0.0
  %805 = vmatpush1.msra.mxu0 0.0
  %806 = vmatprep.subr.mxu0 0.0
  %807 = vmatpush1.msra.mxu0 0.0
  %808 = vmatprep.subr.mxu0 0.0
  %809 = vmatpush1.msra.mxu0 0.0
  %810 = vmatprep.subr.mxu0 0.0
  %811 = vmatpush1.msra.mxu0 0.0
  %812 = vmatprep.subr.mxu0 0.0
  %813 = vmatpush1.msra.mxu0 0.0
  %814 = vmatprep.subr.mxu0 0.0
  %815 = vmatpush1.msra.mxu0 0.0
  %816 = vmatprep.subr.mxu0 0.0
  %817 = vmatpush1.msra.mxu0 0.0
  %818 = vmatprep.subr.mxu0 0.0
  %819 = vmatpush1.msra.mxu0 0.0
  %820 = vmatprep.subr.mxu0 0.0
  %821 = vmatpush1.msra.mxu0 0.0
  %822 = vmatprep.subr.mxu0 0.0
  %823 = vmatpush1.msra.mxu0 0.0
  %824 = vmatprep.subr.mxu0 0.0
  %825 = vmatpush1.msra.mxu0 0.0
  %826 = vmatprep.subr.mxu0 0.0
  %827 = vmatpush1.msra.mxu0 0.0
  %828 = vmatprep.subr.mxu0 0.0
  %829 = vmatpush1.msra.mxu0 0.0
  %830 = vmatprep.subr.mxu0 0.0
  %831 = vmatpush1.msra.mxu0 0.0
  %832 = vmatprep.subr.mxu0 0.0
  %833 = vmatpush1.msra.mxu0 0.0
  %834 = vmatprep.subr.mxu0 0.0
  %835 = vmatpush1.msra.mxu0 0.0
  %836 = vmatprep.subr.mxu0 0.0
  %837 = vmatpush1.msra.mxu0 0.0
  %838 = vmatprep.subr.mxu0 0.0
  %839 = vmatpush1.msra.mxu0 0.0
  %840 = vmatprep.subr.mxu0 0.0
  %841 = vmatpush1.msra.mxu0 0.0
  %842 = vmatprep.subr.mxu0 0.0
  %843 = vmatpush1.msra.mxu0 0.0
  %844 = vmatprep.subr.mxu0 0.0
  %845 = vmatpush1.msra.mxu0 0.0
  %846 = vmatprep.subr.mxu0 0.0
  %847 = vmatpush1.msra.mxu0 0.0
  %848 = vmatprep.subr.mxu0 0.0
  %849 = vmatpush1.msra.mxu0 0.0
  %850 = vmatprep.subr.mxu0 0.0
  %851 = vmatpush1.msra.mxu0 0.0
  %852 = vmatprep.mubr.f32.mxu0 0.0
  %v853 = vand.u32 %v529, 4294901760
  %v854 = vsub.f32 %v529, %v853
  %v855 = vand.u32 %v854, 4294901760
  %856 = vmatmul.mubr.f32.gmra.mrb[0].mxu0 %v855
  %v857 = vpop.f32.mrb[0].mxu0
  %v858 = vadd.f32 %v780, %v857
  %v859 = vpop.f32.mrb[0].mxu0
  %v860 = vadd.f32 %v782, %v859
  %861 = vdwg.mxu0
  %v862 = vand.u32 %v41, 4294901760
  %v863 = vsub.f32 %v41, %v862
  %v864 = vand.u32 %v863, 4294901760
  %865 = vmatprep.subr.mxu0 %v864
  %v866 = vand.u32 %v40, 4294901760
  %v867 = vsub.f32 %v40, %v866
  %v868 = vand.u32 %v867, 4294901760
  %869 = vmatpush1.msra.mxu0 %v868
  %v870 = vand.u32 %v43, 4294901760
  %v871 = vsub.f32 %v43, %v870
  %v872 = vand.u32 %v871, 4294901760
  %873 = vmatprep.subr.mxu0 %v872
  %v874 = vand.u32 %v42, 4294901760
  %v875 = vsub.f32 %v42, %v874
  %v876 = vand.u32 %v875, 4294901760
  %877 = vmatpush1.msra.mxu0 %v876
  %878 = vmatprep.subr.mxu0 0.0
  %879 = vmatpush1.msra.mxu0 0.0
  %880 = vmatprep.subr.mxu0 0.0
  %881 = vmatpush1.msra.mxu0 0.0
  %882 = vmatprep.subr.mxu0 0.0
  %883 = vmatpush1.msra.mxu0 0.0
  %884 = vmatprep.subr.mxu0 0.0
  %885 = vmatpush1.msra.mxu0 0.0
  %886 = vmatprep.subr.mxu0 0.0
  %887 = vmatpush1.msra.mxu0 0.0
  %888 = vmatprep.subr.mxu0 0.0
  %889 = vmatpush1.msra.mxu0 0.0
  %890 = vmatprep.subr.mxu0 0.0
  %891 = vmatpush1.msra.mxu0 0.0
  %892 = vmatprep.subr.mxu0 0.0
  %893 = vmatpush1.msra.mxu0 0.0
  %894 = vmatprep.subr.mxu0 0.0
  %895 = vmatpush1.msra.mxu0 0.0
  %896 = vmatprep.subr.mxu0 0.0
  %897 = vmatpush1.msra.mxu0 0.0
  %898 = vmatprep.subr.mxu0 0.0
  %899 = vmatpush1.msra.mxu0 0.0
  %900 = vmatprep.subr.mxu0 0.0
  %901 = vmatpush1.msra.mxu0 0.0
  %902 = vmatprep.subr.mxu0 0.0
  %903 = vmatpush1.msra.mxu0 0.0
  %904 = vmatprep.subr.mxu0 0.0
  %905 = vmatpush1.msra.mxu0 0.0
  %906 = vmatprep.subr.mxu0 0.0
  %907 = vmatpush1.msra.mxu0 0.0
  %908 = vmatprep.subr.mxu0 0.0
  %909 = vmatpush1.msra.mxu0 0.0
  %910 = vmatprep.subr.mxu0 0.0
  %911 = vmatpush1.msra.mxu0 0.0
  %912 = vmatprep.subr.mxu0 0.0
  %913 = vmatpush1.msra.mxu0 0.0
  %914 = vmatprep.subr.mxu0 0.0
  %915 = vmatpush1.msra.mxu0 0.0
  %916 = vmatprep.subr.mxu0 0.0
  %917 = vmatpush1.msra.mxu0 0.0
  %918 = vmatprep.subr.mxu0 0.0
  %919 = vmatpush1.msra.mxu0 0.0
  %920 = vmatprep.subr.mxu0 0.0
  %921 = vmatpush1.msra.mxu0 0.0
  %922 = vmatprep.subr.mxu0 0.0
  %923 = vmatpush1.msra.mxu0 0.0
  %924 = vmatprep.subr.mxu0 0.0
  %925 = vmatpush1.msra.mxu0 0.0
  %926 = vmatprep.subr.mxu0 0.0
  %927 = vmatpush1.msra.mxu0 0.0
  %928 = vmatprep.subr.mxu0 0.0
  %929 = vmatpush1.msra.mxu0 0.0
  %930 = vmatprep.subr.mxu0 0.0
  %931 = vmatpush1.msra.mxu0 0.0
  %932 = vmatprep.subr.mxu0 0.0
  %933 = vmatpush1.msra.mxu0 0.0
  %934 = vmatprep.subr.mxu0 0.0
  %935 = vmatpush1.msra.mxu0 0.0
  %936 = vmatprep.subr.mxu0 0.0
  %937 = vmatpush1.msra.mxu0 0.0
  %938 = vmatprep.mubr.f32.mxu0 0.0
  %v939 = vand.u32 %v529, 4294901760
  %940 = vmatmul.mubr.f32.gmra.mrb[0].mxu0 %v939
  %v941 = vpop.f32.mrb[0].mxu0
  %v942 = vadd.f32 %v858, %v941
  %v943 = vpop.f32.mrb[0].mxu0
  %v944 = vadd.f32 %v860, %v943
  %945 = vdwg.mxu0
  %v946 = vand.u32 %v41, 4294901760
  %947 = vmatprep.subr.mxu0 %v946
  %v948 = vand.u32 %v40, 4294901760
  %949 = vmatpush1.msra.mxu0 %v948
  %v950 = vand.u32 %v43, 4294901760
  %951 = vmatprep.subr.mxu0 %v950
  %v952 = vand.u32 %v42, 4294901760
  %953 = vmatpush1.msra.mxu0 %v952
  %954 = vmatprep.subr.mxu0 0.0
  %955 = vmatpush1.msra.mxu0 0.0
  %956 = vmatprep.subr.mxu0 0.0
  %957 = vmatpush1.msra.mxu0 0.0
  %958 = vmatprep.subr.mxu0 0.0
  %959 = vmatpush1.msra.mxu0 0.0
  %960 = vmatprep.subr.mxu0 0.0
  %961 = vmatpush1.msra.mxu0 0.0
  %962 = vmatprep.subr.mxu0 0.0
  %963 = vmatpush1.msra.mxu0 0.0
  %964 = vmatprep.subr.mxu0 0.0
  %965 = vmatpush1.msra.mxu0 0.0
  %966 = vmatprep.subr.mxu0 0.0
  %967 = vmatpush1.msra.mxu0 0.0
  %968 = vmatprep.subr.mxu0 0.0
  %969 = vmatpush1.msra.mxu0 0.0
  %970 = vmatprep.subr.mxu0 0.0
  %971 = vmatpush1.msra.mxu0 0.0
  %972 = vmatprep.subr.mxu0 0.0
  %973 = vmatpush1.msra.mxu0 0.0
  %974 = vmatprep.subr.mxu0 0.0
  %975 = vmatpush1.msra.mxu0 0.0
  %976 = vmatprep.subr.mxu0 0.0
  %977 = vmatpush1.msra.mxu0 0.0
  %978 = vmatprep.subr.mxu0 0.0
  %979 = vmatpush1.msra.mxu0 0.0
  %980 = vmatprep.subr.mxu0 0.0
  %981 = vmatpush1.msra.mxu0 0.0
  %982 = vmatprep.subr.mxu0 0.0
  %983 = vmatpush1.msra.mxu0 0.0
  %984 = vmatprep.subr.mxu0 0.0
  %985 = vmatpush1.msra.mxu0 0.0
  %986 = vmatprep.subr.mxu0 0.0
  %987 = vmatpush1.msra.mxu0 0.0
  %988 = vmatprep.subr.mxu0 0.0
  %989 = vmatpush1.msra.mxu0 0.0
  %990 = vmatprep.subr.mxu0 0.0
  %991 = vmatpush1.msra.mxu0 0.0
  %992 = vmatprep.subr.mxu0 0.0
  %993 = vmatpush1.msra.mxu0 0.0
  %994 = vmatprep.subr.mxu0 0.0
  %995 = vmatpush1.msra.mxu0 0.0
  %996 = vmatprep.subr.mxu0 0.0
  %997 = vmatpush1.msra.mxu0 0.0
  %998 = vmatprep.subr.mxu0 0.0
  %999 = vmatpush1.msra.mxu0 0.0
  %1000 = vmatprep.subr.mxu0 0.0
  %1001 = vmatpush1.msra.mxu0 0.0
  %1002 = vmatprep.subr.mxu0 0.0
  %1003 = vmatpush1.msra.mxu0 0.0
  %1004 = vmatprep.subr.mxu0 0.0
  %1005 = vmatpush1.msra.mxu0 0.0
  %1006 = vmatprep.subr.mxu0 0.0
  %1007 = vmatpush1.msra.mxu0 0.0
  %1008 = vmatprep.subr.mxu0 0.0
  %1009 = vmatpush1.msra.mxu0 0.0
  %1010 = vmatprep.subr.mxu0 0.0
  %1011 = vmatpush1.msra.mxu0 0.0
  %1012 = vmatprep.subr.mxu0 0.0
  %1013 = vmatpush1.msra.mxu0 0.0
  %1014 = vmatprep.mubr.f32.mxu0 0.0
  %v1015 = vand.u32 %v529, 4294901760
  %1016 = vmatmul.mubr.f32.gmra.mrb[0].mxu0 %v1015
  %v1017 = vpop.f32.mrb[0].mxu0
  %v1018 = vadd.f32 %v942, %v1017
  %v1019 = vpop.f32.mrb[0].mxu0
  %v1020 = vadd.f32 %v944, %v1019
  %1021 = vdwg.mxu0
  %v1022 = vmax.f32 %v1018, 0.0
  %v1023 = vmax.f32 %v1020, 0.0
  %1024 = vst [vmem:[%s10] sm:$0xff] %v1022
  %1025 = vst [vmem:[%s10 + $0x8] sm:$0xff] %v1023
  %s1026 = scalar_lea.vmem %s4, 8
  %v1027 = vld [vmem:[%s1026] sm:$0xff]
  %s1028 = scalar_lea.vmem %s8, 8
  %v1029 = vld [vmem:[%s1028] sm:$0xff]
  %1031 = vset.pattern.permute.xlu0 0
  %1032 = vperm.xlu0 %1031, %v1029
  %v1033 = vpop.permute.xlu0 %1032
  %v1036 = vsel %vm55, %v1027, 0
  %v1038 = vand.u32 %v45, 4294901760
  %1039 = vmatprep.subr.mxu0 %v1038
  %v1040 = vand.u32 %v44, 4294901760
  %1041 = vmatpush1.msra.mxu0 %v1040
  %v1042 = vand.u32 %v47, 4294901760
  %1043 = vmatprep.subr.mxu0 %v1042
  %v1044 = vand.u32 %v46, 4294901760
  %1045 = vmatpush1.msra.mxu0 %v1044
  %1046 = vmatprep.subr.mxu0 0.0
  %1047 = vmatpush1.msra.mxu0 0.0
  %1048 = vmatprep.subr.mxu0 0.0
  %1049 = vmatpush1.msra.mxu0 0.0
  %1050 = vmatprep.subr.mxu0 0.0
  %1051 = vmatpush1.msra.mxu0 0.0
  %1052 = vmatprep.subr.mxu0 0.0
  %1053 = vmatpush1.msra.mxu0 0.0
  %1054 = vmatprep.subr.mxu0 0.0
  %1055 = vmatpush1.msra.mxu0 0.0
  %1056 = vmatprep.subr.mxu0 0.0
  %1057 = vmatpush1.msra.mxu0 0.0
  %1058 = vmatprep.subr.mxu0 0.0
  %1059 = vmatpush1.msra.mxu0 0.0
  %1060 = vmatprep.subr.mxu0 0.0
  %1061 = vmatpush1.msra.mxu0 0.0
  %1062 = vmatprep.subr.mxu0 0.0
  %1063 = vmatpush1.msra.mxu0 0.0
  %1064 = vmatprep.subr.mxu0 0.0
  %1065 = vmatpush1.msra.mxu0 0.0
  %1066 = vmatprep.subr.mxu0 0.0
  %1067 = vmatpush1.msra.mxu0 0.0
  %1068 = vmatprep.subr.mxu0 0.0
  %1069 = vmatpush1.msra.mxu0 0.0
  %1070 = vmatprep.subr.mxu0 0.0
  %1071 = vmatpush1.msra.mxu0 0.0
  %1072 = vmatprep.subr.mxu0 0.0
  %1073 = vmatpush1.msra.mxu0 0.0
  %1074 = vmatprep.subr.mxu0 0.0
  %1075 = vmatpush1.msra.mxu0 0.0
  %1076 = vmatprep.subr.mxu0 0.0
  %1077 = vmatpush1.msra.mxu0 0.0
  %1078 = vmatprep.subr.mxu0 0.0
  %1079 = vmatpush1.msra.mxu0 0.0
  %1080 = vmatprep.subr.mxu0 0.0
  %1081 = vmatpush1.msra.mxu0 0.0
  %1082 = vmatprep.subr.mxu0 0.0
  %1083 = vmatpush1.msra.mxu0 0.0
  %1084 = vmatprep.subr.mxu0 0.0
  %1085 = vmatpush1.msra.mxu0 0.0
  %1086 = vmatprep.subr.mxu0 0.0
  %1087 = vmatpush1.msra.mxu0 0.0
  %1088 = vmatprep.subr.mxu0 0.0
  %1089 = vmatpush1.msra.mxu0 0.0
  %1090 = vmatprep.subr.mxu0 0.0
  %1091 = vmatpush1.msra.mxu0 0.0
  %1092 = vmatprep.subr.mxu0 0.0
  %1093 = vmatpush1.msra.mxu0 0.0
  %1094 = vmatprep.subr.mxu0 0.0
  %1095 = vmatpush1.msra.mxu0 0.0
  %1096 = vmatprep.subr.mxu0 0.0
  %1097 = vmatpush1.msra.mxu0 0.0
  %1098 = vmatprep.subr.mxu0 0.0
  %1099 = vmatpush1.msra.mxu0 0.0
  %1100 = vmatprep.subr.mxu0 0.0
  %1101 = vmatpush1.msra.mxu0 0.0
  %1102 = vmatprep.subr.mxu0 0.0
  %1103 = vmatpush1.msra.mxu0 0.0
  %1104 = vmatprep.subr.mxu0 0.0
  %1105 = vmatpush1.msra.mxu0 0.0
  %1106 = vmatprep.mubr.f32.mxu0 0.0
  %v1107 = vand.u32 %v1036, 4294901760
  %v1108 = vsub.f32 %v1036, %v1107
  %v1109 = vand.u32 %v1108, 4294901760
  %v1110 = vsub.f32 %v1108, %v1109
  %v1111 = vand.u32 %v1110, 4294901760
  %1112 = vmatmul.mubr.f32.gmra.mrb[0].mxu0 %v1111
  %v1113 = vpop.f32.mrb[0].mxu0
  %v1114 = vadd.f32 %v1033, %v1113
  %v1115 = vpop.f32.mrb[0].mxu0
  %v1116 = vadd.f32 %v1033, %v1115
  %1117 = vdwg.mxu0
  %v1118 = vand.u32 %v45, 4294901760
  %v1119 = vsub.f32 %v45, %v1118
  %v1120 = vand.u32 %v1119, 4294901760
  %v1121 = vsub.f32 %v1119, %v1120
  %v1122 = vand.u32 %v1121, 4294901760
  %1123 = vmatprep.subr.mxu0 %v1122
  %v1124 = vand.u32 %v44, 4294901760
  %v1125 = vsub.f32 %v44, %v1124
  %v1126 = vand.u32 %v1125, 4294901760
  %v1127 = vsub.f32 %v1125, %v1126
  %v1128 = vand.u32 %v1127, 4294901760
  %1129 = vmatpush1.msra.mxu0 %v1128
  %v1130 = vand.u32 %v47, 4294901760
  %v1131 = vsub.f32 %v47, %v1130
  %v1132 = vand.u32 %v1131, 4294901760
  %v1133 = vsub.f32 %v1131, %v1132
  %v1134 = vand.u32 %v1133, 4294901760
  %1135 = vmatprep.subr.mxu0 %v1134
  %v1136 = vand.u32 %v46, 4294901760
  %v1137 = vsub.f32 %v46, %v1136
  %v1138 = vand.u32 %v1137, 4294901760
  %v1139 = vsub.f32 %v1137, %v1138
  %v1140 = vand.u32 %v1139, 4294901760
  %1141 = vmatpush1.msra.mxu0 %v1140
  %1142 = vmatprep.subr.mxu0 0.0
  %1143 = vmatpush1.msra.mxu0 0.0
  %1144 = vmatprep.subr.mxu0 0.0
  %1145 = vmatpush1.msra.mxu0 0.0
  %1146 = vmatprep.subr.mxu0 0.0
  %1147 = vmatpush1.msra.mxu0 0.0
  %1148 = vmatprep.subr.mxu0 0.0
  %1149 = vmatpush1.msra.mxu0 0.0
  %1150 = vmatprep.subr.mxu0 0.0
  %1151 = vmatpush1.msra.mxu0 0.0
  %1152 = vmatprep.subr.mxu0 0.0
  %1153 = vmatpush1.msra.mxu0 0.0
  %1154 = vmatprep.subr.mxu0 0.0
  %1155 = vmatpush1.msra.mxu0 0.0
  %1156 = vmatprep.subr.mxu0 0.0
  %1157 = vmatpush1.msra.mxu0 0.0
  %1158 = vmatprep.subr.mxu0 0.0
  %1159 = vmatpush1.msra.mxu0 0.0
  %1160 = vmatprep.subr.mxu0 0.0
  %1161 = vmatpush1.msra.mxu0 0.0
  %1162 = vmatprep.subr.mxu0 0.0
  %1163 = vmatpush1.msra.mxu0 0.0
  %1164 = vmatprep.subr.mxu0 0.0
  %1165 = vmatpush1.msra.mxu0 0.0
  %1166 = vmatprep.subr.mxu0 0.0
  %1167 = vmatpush1.msra.mxu0 0.0
  %1168 = vmatprep.subr.mxu0 0.0
  %1169 = vmatpush1.msra.mxu0 0.0
  %1170 = vmatprep.subr.mxu0 0.0
  %1171 = vmatpush1.msra.mxu0 0.0
  %1172 = vmatprep.subr.mxu0 0.0
  %1173 = vmatpush1.msra.mxu0 0.0
  %1174 = vmatprep.subr.mxu0 0.0
  %1175 = vmatpush1.msra.mxu0 0.0
  %1176 = vmatprep.subr.mxu0 0.0
  %1177 = vmatpush1.msra.mxu0 0.0
  %1178 = vmatprep.subr.mxu0 0.0
  %1179 = vmatpush1.msra.mxu0 0.0
  %1180 = vmatprep.subr.mxu0 0.0
  %1181 = vmatpush1.msra.mxu0 0.0
  %1182 = vmatprep.subr.mxu0 0.0
  %1183 = vmatpush1.msra.mxu0 0.0
  %1184 = vmatprep.subr.mxu0 0.0
  %1185 = vmatpush1.msra.mxu0 0.0
  %1186 = vmatprep.subr.mxu0 0.0
  %1187 = vmatpush1.msra.mxu0 0.0
  %1188 = vmatprep.subr.mxu0 0.0
  %1189 = vmatpush1.msra.mxu0 0.0
  %1190 = vmatprep.subr.mxu0 0.0
  %1191 = vmatpush1.msra.mxu0 0.0
  %1192 = vmatprep.subr.mxu0 0.0
  %1193 = vmatpush1.msra.mxu0 0.0
  %1194 = vmatprep.subr.mxu0 0.0
  %1195 = vmatpush1.msra.mxu0 0.0
  %1196 = vmatprep.subr.mxu0 0.0
  %1197 = vmatpush1.msra.mxu0 0.0
  %1198 = vmatprep.subr.mxu0 0.0
  %1199 = vmatpush1.msra.mxu0 0.0
  %1200 = vmatprep.subr.mxu0 0.0
  %1201 = vmatpush1.msra.mxu0 0.0
  %1202 = vmatprep.mubr.f32.mxu0 0.0
  %v1203 = vand.u32 %v1036, 4294901760
  %1204 = vmatmul.mubr.f32.gmra.mrb[0].mxu0 %v1203
  %v1205 = vpop.f32.mrb[0].mxu0
  %v1206 = vadd.f32 %v1114, %v1205
  %v1207 = vpop.f32.mrb[0].mxu0
  %v1208 = vadd.f32 %v1116, %v1207
  %1209 = vdwg.mxu0
  %v1210 = vand.u32 %v45, 4294901760
  %v1211 = vsub.f32 %v45, %v1210
  %1212 = vmatprep.subr.mxu0 %v1211
  %v1213 = vand.u32 %v44, 4294901760
  %v1214 = vsub.f32 %v44, %v1213
  %1215 = vmatpush1.msra.mxu0 %v1214
  %v1216 = vand.u32 %v47, 4294901760
  %v1217 = vsub.f32 %v47, %v1216
  %1218 = vmatprep.subr.mxu0 %v1217
  %v1219 = vand.u32 %v46, 4294901760
  %v1220 = vsub.f32 %v46, %v1219
  %1221 = vmatpush1.msra.mxu0 %v1220
  %1222 = vmatprep.subr.mxu0 0.0
  %1223 = vmatpush1.msra.mxu0 0.0
  %1224 = vmatprep.subr.mxu0 0.0
  %1225 = vmatpush1.msra.mxu0 0.0
  %1226 = vmatprep.subr.mxu0 0.0
  %1227 = vmatpush1.msra.mxu0 0.0
  %1228 = vmatprep.subr.mxu0 0.0
  %1229 = vmatpush1.msra.mxu0 0.0
  %1230 = vmatprep.subr.mxu0 0.0
  %1231 = vmatpush1.msra.mxu0 0.0
  %1232 = vmatprep.subr.mxu0 0.0
  %1233 = vmatpush1.msra.mxu0 0.0
  %1234 = vmatprep.subr.mxu0 0.0
  %1235 = vmatpush1.msra.mxu0 0.0
  %1236 = vmatprep.subr.mxu0 0.0
  %1237 = vmatpush1.msra.mxu0 0.0
  %1238 = vmatprep.subr.mxu0 0.0
  %1239 = vmatpush1.msra.mxu0 0.0
  %1240 = vmatprep.subr.mxu0 0.0
  %1241 = vmatpush1.msra.mxu0 0.0
  %1242 = vmatprep.subr.mxu0 0.0
  %1243 = vmatpush1.msra.mxu0 0.0
  %1244 = vmatprep.subr.mxu0 0.0
  %1245 = vmatpush1.msra.mxu0 0.0
  %1246 = vmatprep.subr.mxu0 0.0
  %1247 = vmatpush1.msra.mxu0 0.0
  %1248 = vmatprep.subr.mxu0 0.0
  %1249 = vmatpush1.msra.mxu0 0.0
  %1250 = vmatprep.subr.mxu0 0.0
  %1251 = vmatpush1.msra.mxu0 0.0
  %1252 = vmatprep.subr.mxu0 0.0
  %1253 = vmatpush1.msra.mxu0 0.0
  %1254 = vmatprep.subr.mxu0 0.0
  %1255 = vmatpush1.msra.mxu0 0.0
  %1256 = vmatprep.subr.mxu0 0.0
  %1257 = vmatpush1.msra.mxu0 0.0
  %1258 = vmatprep.subr.mxu0 0.0
  %1259 = vmatpush1.msra.mxu0 0.0
  %1260 = vmatprep.subr.mxu0 0.0
  %1261 = vmatpush1.msra.mxu0 0.0
  %1262 = vmatprep.subr.mxu0 0.0
  %1263 = vmatpush1.msra.mxu0 0.0
  %1264 = vmatprep.subr.mxu0 0.0
  %1265 = vmatpush1.msra.mxu0 0.0
  %1266 = vmatprep.subr.mxu0 0.0
  %1267 = vmatpush1.msra.mxu0 0.0
  %1268 = vmatprep.subr.mxu0 0.0
  %1269 = vmatpush1.msra.mxu0 0.0
  %1270 = vmatprep.subr.mxu0 0.0
  %1271 = vmatpush1.msra.mxu0 0.0
  %1272 = vmatprep.subr.mxu0 0.0
  %1273 = vmatpush1.msra.mxu0 0.0
  %1274 = vmatprep.subr.mxu0 0.0
  %1275 = vmatpush1.msra.mxu0 0.0
  %1276 = vmatprep.subr.mxu0 0.0
  %1277 = vmatpush1.msra.mxu0 0.0
  %1278 = vmatprep.subr.mxu0 0.0
  %1279 = vmatpush1.msra.mxu0 0.0
  %1280 = vmatprep.subr.mxu0 0.0
  %1281 = vmatpush1.msra.mxu0 0.0
  %1282 = vmatprep.mubr.f32.mxu0 0.0
  %v1283 = vand.u32 %v1036, 4294901760
  %v1284 = vsub.f32 %v1036, %v1283
  %1285 = vmatmul.mubr.f32.gmra.mrb[0].mxu0 %v1284
  %v1286 = vpop.f32.mrb[0].mxu0
  %v1287 = vadd.f32 %v1206, %v1286
  %v1288 = vpop.f32.mrb[0].mxu0
  %v1289 = vadd.f32 %v1208, %v1288
  %1290 = vdwg.mxu0
  %v1291 = vand.u32 %v45, 4294901760
  %1292 = vmatprep.subr.mxu0 %v1291
  %v1293 = vand.u32 %v44, 4294901760
  %1294 = vmatpush1.msra.mxu0 %v1293
  %v1295 = vand.u32 %v47, 4294901760
  %1296 = vmatprep.subr.mxu0 %v1295
  %v1297 = vand.u32 %v46, 4294901760
  %1298 = vmatpush1.msra.mxu0 %v1297
  %1299 = vmatprep.subr.mxu0 0.0
  %1300 = vmatpush1.msra.mxu0 0.0
  %1301 = vmatprep.subr.mxu0 0.0
  %1302 = vmatpush1.msra.mxu0 0.0
  %1303 = vmatprep.subr.mxu0 0.0
  %1304 = vmatpush1.msra.mxu0 0.0
  %1305 = vmatprep.subr.mxu0 0.0
  %1306 = vmatpush1.msra.mxu0 0.0
  %1307 = vmatprep.subr.mxu0 0.0
  %1308 = vmatpush1.msra.mxu0 0.0
  %1309 = vmatprep.subr.mxu0 0.0
  %1310 = vmatpush1.msra.mxu0 0.0
  %1311 = vmatprep.subr.mxu0 0.0
  %1312 = vmatpush1.msra.mxu0 0.0
  %1313 = vmatprep.subr.mxu0 0.0
  %1314 = vmatpush1.msra.mxu0 0.0
  %1315 = vmatprep.subr.mxu0 0.0
  %1316 = vmatpush1.msra.mxu0 0.0
  %1317 = vmatprep.subr.mxu0 0.0
  %1318 = vmatpush1.msra.mxu0 0.0
  %1319 = vmatprep.subr.mxu0 0.0
  %1320 = vmatpush1.msra.mxu0 0.0
  %1321 = vmatprep.subr.mxu0 0.0
  %1322 = vmatpush1.msra.mxu0 0.0
  %1323 = vmatprep.subr.mxu0 0.0
  %1324 = vmatpush1.msra.mxu0 0.0
  %1325 = vmatprep.subr.mxu0 0.0
  %1326 = vmatpush1.msra.mxu0 0.0
  %1327 = vmatprep.subr.mxu0 0.0
  %1328 = vmatpush1.msra.mxu0 0.0
  %1329 = vmatprep.subr.mxu0 0.0
  %1330 = vmatpush1.msra.mxu0 0.0
  %1331 = vmatprep.subr.mxu0 0.0
  %1332 = vmatpush1.msra.mxu0 0.0
  %1333 = vmatprep.subr.mxu0 0.0
  %1334 = vmatpush1.msra.mxu0 0.0
  %1335 = vmatprep.subr.mxu0 0.0
  %1336 = vmatpush1.msra.mxu0 0.0
  %1337 = vmatprep.subr.mxu0 0.0
  %1338 = vmatpush1.msra.mxu0 0.0
  %1339 = vmatprep.subr.mxu0 0.0
  %1340 = vmatpush1.msra.mxu0 0.0
  %1341 = vmatprep.subr.mxu0 0.0
  %1342 = vmatpush1.msra.mxu0 0.0
  %1343 = vmatprep.subr.mxu0 0.0
  %1344 = vmatpush1.msra.mxu0 0.0
  %1345 = vmatprep.subr.mxu0 0.0
  %1346 = vmatpush1.msra.mxu0 0.0
  %1347 = vmatprep.subr.mxu0 0.0
  %1348 = vmatpush1.msra.mxu0 0.0
  %1349 = vmatprep.subr.mxu0 0.0
  %1350 = vmatpush1.msra.mxu0 0.0
  %1351 = vmatprep.subr.mxu0 0.0
  %1352 = vmatpush1.msra.mxu0 0.0
  %1353 = vmatprep.subr.mxu0 0.0
  %1354 = vmatpush1.msra.mxu0 0.0
  %1355 = vmatprep.subr.mxu0 0.0
  %1356 = vmatpush1.msra.mxu0 0.0
  %1357 = vmatprep.subr.mxu0 0.0
  %1358 = vmatpush1.msra.mxu0 0.0
  %1359 = vmatprep.mubr.f32.mxu0 0.0
  %v1360 = vand.u32 %v1036, 4294901760
  %v1361 = vsub.f32 %v1036, %v1360
  %v1362 = vand.u32 %v1361, 4294901760
  %1363 = vmatmul.mubr.f32.gmra.mrb[0].mxu0 %v1362
  %v1364 = vpop.f32.mrb[0].mxu0
  %v1365 = vadd.f32 %v1287, %v1364
  %v1366 = vpop.f32.mrb[0].mxu0
  %v1367 = vadd.f32 %v1289, %v1366
  %1368 = vdwg.mxu0
  %v1369 = vand.u32 %v45, 4294901760
  %v1370 = vsub.f32 %v45, %v1369
  %v1371 = vand.u32 %v1370, 4294901760
  %1372 = vmatprep.subr.mxu0 %v1371
  %v1373 = vand.u32 %v44, 4294901760
  %v1374 = vsub.f32 %v44, %v1373
  %v1375 = vand.u32 %v1374, 4294901760
  %1376 = vmatpush1.msra.mxu0 %v1375
  %v1377 = vand.u32 %v47, 4294901760
  %v1378 = vsub.f32 %v47, %v1377
  %v1379 = vand.u32 %v1378, 4294901760
  %1380 = vmatprep.subr.mxu0 %v1379
  %v1381 = vand.u32 %v46, 4294901760
  %v1382 = vsub.f32 %v46, %v1381
  %v1383 = vand.u32 %v1382, 4294901760
  %1384 = vmatpush1.msra.mxu0 %v1383
  %1385 = vmatprep.subr.mxu0 0.0
  %1386 = vmatpush1.msra.mxu0 0.0
  %1387 = vmatprep.subr.mxu0 0.0
  %1388 = vmatpush1.msra.mxu0 0.0
  %1389 = vmatprep.subr.mxu0 0.0
  %1390 = vmatpush1.msra.mxu0 0.0
  %1391 = vmatprep.subr.mxu0 0.0
  %1392 = vmatpush1.msra.mxu0 0.0
  %1393 = vmatprep.subr.mxu0 0.0
  %1394 = vmatpush1.msra.mxu0 0.0
  %1395 = vmatprep.subr.mxu0 0.0
  %1396 = vmatpush1.msra.mxu0 0.0
  %1397 = vmatprep.subr.mxu0 0.0
  %1398 = vmatpush1.msra.mxu0 0.0
  %1399 = vmatprep.subr.mxu0 0.0
  %1400 = vmatpush1.msra.mxu0 0.0
  %1401 = vmatprep.subr.mxu0 0.0
  %1402 = vmatpush1.msra.mxu0 0.0
  %1403 = vmatprep.subr.mxu0 0.0
  %1404 = vmatpush1.msra.mxu0 0.0
  %1405 = vmatprep.subr.mxu0 0.0
  %1406 = vmatpush1.msra.mxu0 0.0
  %1407 = vmatprep.subr.mxu0 0.0
  %1408 = vmatpush1.msra.mxu0 0.0
  %1409 = vmatprep.subr.mxu0 0.0
  %1410 = vmatpush1.msra.mxu0 0.0
  %1411 = vmatprep.subr.mxu0 0.0
  %1412 = vmatpush1.msra.mxu0 0.0
  %1413 = vmatprep.subr.mxu0 0.0
  %1414 = vmatpush1.msra.mxu0 0.0
  %1415 = vmatprep.subr.mxu0 0.0
  %1416 = vmatpush1.msra.mxu0 0.0
  %1417 = vmatprep.subr.mxu0 0.0
  %1418 = vmatpush1.msra.mxu0 0.0
  %1419 = vmatprep.subr.mxu0 0.0
  %1420 = vmatpush1.msra.mxu0 0.0
  %1421 = vmatprep.subr.mxu0 0.0
  %1422 = vmatpush1.msra.mxu0 0.0
  %1423 = vmatprep.subr.mxu0 0.0
  %1424 = vmatpush1.msra.mxu0 0.0
  %1425 = vmatprep.subr.mxu0 0.0
  %1426 = vmatpush1.msra.mxu0 0.0
  %1427 = vmatprep.subr.mxu0 0.0
  %1428 = vmatpush1.msra.mxu0 0.0
  %1429 = vmatprep.subr.mxu0 0.0
  %1430 = vmatpush1.msra.mxu0 0.0
  %1431 = vmatprep.subr.mxu0 0.0
  %1432 = vmatpush1.msra.mxu0 0.0
  %1433 = vmatprep.subr.mxu0 0.0
  %1434 = vmatpush1.msra.mxu0 0.0
  %1435 = vmatprep.subr.mxu0 0.0
  %1436 = vmatpush1.msra.mxu0 0.0
  %1437 = vmatprep.subr.mxu0 0.0
  %1438 = vmatpush1.msra.mxu0 0.0
  %1439 = vmatprep.subr.mxu0 0.0
  %1440 = vmatpush1.msra.mxu0 0.0
  %1441 = vmatprep.subr.mxu0 0.0
  %1442 = vmatpush1.msra.mxu0 0.0
  %1443 = vmatprep.subr.mxu0 0.0
  %1444 = vmatpush1.msra.mxu0 0.0
  %1445 = vmatprep.mubr.f32.mxu0 0.0
  %v1446 = vand.u32 %v1036, 4294901760
  %1447 = vmatmul.mubr.f32.gmra.mrb[0].mxu0 %v1446
  %v1448 = vpop.f32.mrb[0].mxu0
  %v1449 = vadd.f32 %v1365, %v1448
  %v1450 = vpop.f32.mrb[0].mxu0
  %v1451 = vadd.f32 %v1367, %v1450
  %1452 = vdwg.mxu0
  %v1453 = vand.u32 %v45, 4294901760
  %1454 = vmatprep.subr.mxu0 %v1453
  %v1455 = vand.u32 %v44, 4294901760
  %1456 = vmatpush1.msra.mxu0 %v1455
  %v1457 = vand.u32 %v47, 4294901760
  %1458 = vmatprep.subr.mxu0 %v1457
  %v1459 = vand.u32 %v46, 4294901760
  %1460 = vmatpush1.msra.mxu0 %v1459
  %1461 = vmatprep.subr.mxu0 0.0
  %1462 = vmatpush1.msra.mxu0 0.0
  %1463 = vmatprep.subr.mxu0 0.0
  %1464 = vmatpush1.msra.mxu0 0.0
  %1465 = vmatprep.subr.mxu0 0.0
  %1466 = vmatpush1.msra.mxu0 0.0
  %1467 = vmatprep.subr.mxu0 0.0
  %1468 = vmatpush1.msra.mxu0 0.0
  %1469 = vmatprep.subr.mxu0 0.0
  %1470 = vmatpush1.msra.mxu0 0.0
  %1471 = vmatprep.subr.mxu0 0.0
  %1472 = vmatpush1.msra.mxu0 0.0
  %1473 = vmatprep.subr.mxu0 0.0
  %1474 = vmatpush1.msra.mxu0 0.0
  %1475 = vmatprep.subr.mxu0 0.0
  %1476 = vmatpush1.msra.mxu0 0.0
  %1477 = vmatprep.subr.mxu0 0.0
  %1478 = vmatpush1.msra.mxu0 0.0
  %1479 = vmatprep.subr.mxu0 0.0
  %1480 = vmatpush1.msra.mxu0 0.0
  %1481 = vmatprep.subr.mxu0 0.0
  %1482 = vmatpush1.msra.mxu0 0.0
  %1483 = vmatprep.subr.mxu0 0.0
  %1484 = vmatpush1.msra.mxu0 0.0
  %1485 = vmatprep.subr.mxu0 0.0
  %1486 = vmatpush1.msra.mxu0 0.0
  %1487 = vmatprep.subr.mxu0 0.0
  %1488 = vmatpush1.msra.mxu0 0.0
  %1489 = vmatprep.subr.mxu0 0.0
  %1490 = vmatpush1.msra.mxu0 0.0
  %1491 = vmatprep.subr.mxu0 0.0
  %1492 = vmatpush1.msra.mxu0 0.0
  %1493 = vmatprep.subr.mxu0 0.0
  %1494 = vmatpush1.msra.mxu0 0.0
  %1495 = vmatprep.subr.mxu0 0.0
  %1496 = vmatpush1.msra.mxu0 0.0
  %1497 = vmatprep.subr.mxu0 0.0
  %1498 = vmatpush1.msra.mxu0 0.0
  %1499 = vmatprep.subr.mxu0 0.0
  %1500 = vmatpush1.msra.mxu0 0.0
  %1501 = vmatprep.subr.mxu0 0.0
  %1502 = vmatpush1.msra.mxu0 0.0
  %1503 = vmatprep.subr.mxu0 0.0
  %1504 = vmatpush1.msra.mxu0 0.0
  %1505 = vmatprep.subr.mxu0 0.0
  %1506 = vmatpush1.msra.mxu0 0.0
  %1507 = vmatprep.subr.mxu0 0.0
  %1508 = vmatpush1.msra.mxu0 0.0
  %1509 = vmatprep.subr.mxu0 0.0
  %1510 = vmatpush1.msra.mxu0 0.0
  %1511 = vmatprep.subr.mxu0 0.0
  %1512 = vmatpush1.msra.mxu0 0.0
  %1513 = vmatprep.subr.mxu0 0.0
  %1514 = vmatpush1.msra.mxu0 0.0
  %1515 = vmatprep.subr.mxu0 0.0
  %1516 = vmatpush1.msra.mxu0 0.0
  %1517 = vmatprep.subr.mxu0 0.0
  %1518 = vmatpush1.msra.mxu0 0.0
  %1519 = vmatprep.subr.mxu0 0.0
  %1520 = vmatpush1.msra.mxu0 0.0
  %1521 = vmatprep.mubr.f32.mxu0 0.0
  %v1522 = vand.u32 %v1036, 4294901760
  %1523 = vmatmul.mubr.f32.gmra.mrb[0].mxu0 %v1522
  %v1524 = vpop.f32.mrb[0].mxu0
  %v1525 = vadd.f32 %v1449, %v1524
  %v1526 = vpop.f32.mrb[0].mxu0
  %v1527 = vadd.f32 %v1451, %v1526
  %1528 = vdwg.mxu0
  %v1529 = vmax.f32 %v1525, 0.0
  %v1530 = vmax.f32 %v1527, 0.0
  %1531 = vst [vmem:[%s13] sm:$0xff] %v1529
  %1532 = vst [vmem:[%s13 + $0x8] sm:$0xff] %v1530
  %v1533 = vld [vmem:[%s3] sm:$0xff]
  %v1534 = vld [vmem:[%s3 + $0x8] sm:$0xff]
  %v1535 = vld [vmem:[%s3 + $0x10] sm:$0xff]
  %v1536 = vld [vmem:[%s3 + $0x18] sm:$0xff]
  %v1537 = vld [vmem:[%s3 + $0x20] sm:$0xff]
  %v1538 = vld [vmem:[%s3 + $0x28] sm:$0xff]
  %v1539 = vld [vmem:[%s3 + $0x30] sm:$0xff]
  %v1540 = vld [vmem:[%s3 + $0x38] sm:$0xff]
  %v1541 = vld [vmem:[%s3 + $0x40] sm:$0xff]
  %v1542 = vld [vmem:[%s3 + $0x48] sm:$0xff]
  %v1543 = vld [vmem:[%s3 + $0x50] sm:$0xff]
  %v1544 = vld [vmem:[%s3 + $0x58] sm:$0xff]
  %v1545 = vld [vmem:[%s3 + $0x60] sm:$0xff]
  %v1546 = vld [vmem:[%s3 + $0x68] sm:$0xff]
  %v1547 = vld [vmem:[%s3 + $0x70] sm:$0xff]
  %v1548 = vld [vmem:[%s3 + $0x78] sm:$0xff]
  %v1549 = vld [vmem:[%s3 + $0x80] sm:$0xff]
  %v1550 = vld [vmem:[%s3 + $0x88] sm:$0xff]
  %v1551 = vld [vmem:[%s3 + $0x90] sm:$0xff]
  %v1552 = vld [vmem:[%s3 + $0x98] sm:$0xff]
  %v1553 = vld [vmem:[%s3 + $0xa0] sm:$0xff]
  %v1554 = vld [vmem:[%s3 + $0xa8] sm:$0xff]
  %v1555 = vld [vmem:[%s3 + $0xb0] sm:$0xff]
  %v1556 = vld [vmem:[%s3 + $0xb8] sm:$0xff]
  %v1557 = vld [vmem:[%s3 + $0xc0] sm:$0xff]
  %v1558 = vld [vmem:[%s3 + $0xc8] sm:$0xff]
  %v1559 = vld [vmem:[%s3 + $0xd0] sm:$0xff]
  %v1560 = vld [vmem:[%s3 + $0xd8] sm:$0xff]
  %v1561 = vld [vmem:[%s3 + $0xe0] sm:$0xff]
  %v1562 = vld [vmem:[%s3 + $0xe8] sm:$0xff]
  %v1563 = vld [vmem:[%s3 + $0xf0] sm:$0xff]
  %v1564 = vld [vmem:[%s3 + $0xf8] sm:$0xff]
  %1565 = vmatprep.subr.mxu0 0.0
  %v1566 = vand.u32 %v1533, 4294901760
  %1567 = vmatpush1.msra.mxu0 %v1566
  %1568 = vmatprep.subr.mxu0 0.0
  %v1569 = vand.u32 %v1534, 4294901760
  %1570 = vmatpush1.msra.mxu0 %v1569
  %1571 = vmatprep.subr.mxu0 0.0
  %v1572 = vand.u32 %v1535, 4294901760
  %1573 = vmatpush1.msra.mxu0 %v1572
  %1574 = vmatprep.subr.mxu0 0.0
  %v1575 = vand.u32 %v1536, 4294901760
  %1576 = vmatpush1.msra.mxu0 %v1575
  %1577 = vmatprep.subr.mxu0 0.0
  %v1578 = vand.u32 %v1537, 4294901760
  %1579 = vmatpush1.msra.mxu0 %v1578
  %1580 = vmatprep.subr.mxu0 0.0
  %v1581 = vand.u32 %v1538, 4294901760
  %1582 = vmatpush1.msra.mxu0 %v1581
  %1583 = vmatprep.subr.mxu0 0.0
  %v1584 = vand.u32 %v1539, 4294901760
  %1585 = vmatpush1.msra.mxu0 %v1584
  %1586 = vmatprep.subr.mxu0 0.0
  %v1587 = vand.u32 %v1540, 4294901760
  %1588 = vmatpush1.msra.mxu0 %v1587
  %1589 = vmatprep.subr.mxu0 0.0
  %v1590 = vand.u32 %v1541, 4294901760
  %1591 = vmatpush1.msra.mxu0 %v1590
  %1592 = vmatprep.subr.mxu0 0.0
  %v1593 = vand.u32 %v1542, 4294901760
  %1594 = vmatpush1.msra.mxu0 %v1593
  %1595 = vmatprep.subr.mxu0 0.0
  %v1596 = vand.u32 %v1543, 4294901760
  %1597 = vmatpush1.msra.mxu0 %v1596
  %1598 = vmatprep.subr.mxu0 0.0
  %v1599 = vand.u32 %v1544, 4294901760
  %1600 = vmatpush1.msra.mxu0 %v1599
  %1601 = vmatprep.subr.mxu0 0.0
  %v1602 = vand.u32 %v1545, 4294901760
  %1603 = vmatpush1.msra.mxu0 %v1602
  %1604 = vmatprep.subr.mxu0 0.0
  %v1605 = vand.u32 %v1546, 4294901760
  %1606 = vmatpush1.msra.mxu0 %v1605
  %1607 = vmatprep.subr.mxu0 0.0
  %v1608 = vand.u32 %v1547, 4294901760
  %1609 = vmatpush1.msra.mxu0 %v1608
  %1610 = vmatprep.subr.mxu0 0.0
  %v1611 = vand.u32 %v1548, 4294901760
  %1612 = vmatpush1.msra.mxu0 %v1611
  %1613 = vmatprep.subr.mxu0 0.0
  %v1614 = vand.u32 %v1549, 4294901760
  %1615 = vmatpush1.msra.mxu0 %v1614
  %1616 = vmatprep.subr.mxu0 0.0
  %v1617 = vand.u32 %v1550, 4294901760
  %1618 = vmatpush1.msra.mxu0 %v1617
  %1619 = vmatprep.subr.mxu0 0.0
  %v1620 = vand.u32 %v1551, 4294901760
  %1621 = vmatpush1.msra.mxu0 %v1620
  %1622 = vmatprep.subr.mxu0 0.0
  %v1623 = vand.u32 %v1552, 4294901760
  %1624 = vmatpush1.msra.mxu0 %v1623
  %1625 = vmatprep.subr.mxu0 0.0
  %v1626 = vand.u32 %v1553, 4294901760
  %1627 = vmatpush1.msra.mxu0 %v1626
  %1628 = vmatprep.subr.mxu0 0.0
  %v1629 = vand.u32 %v1554, 4294901760
  %1630 = vmatpush1.msra.mxu0 %v1629
  %1631 = vmatprep.subr.mxu0 0.0
  %v1632 = vand.u32 %v1555, 4294901760
  %1633 = vmatpush1.msra.mxu0 %v1632
  %1634 = vmatprep.subr.mxu0 0.0
  %v1635 = vand.u32 %v1556, 4294901760
  %1636 = vmatpush1.msra.mxu0 %v1635
  %1637 = vmatprep.subr.mxu0 0.0
  %v1638 = vand.u32 %v1557, 4294901760
  %1639 = vmatpush1.msra.mxu0 %v1638
  %1640 = vmatprep.subr.mxu0 0.0
  %v1641 = vand.u32 %v1558, 4294901760
  %1642 = vmatpush1.msra.mxu0 %v1641
  %1643 = vmatprep.subr.mxu0 0.0
  %v1644 = vand.u32 %v1559, 4294901760
  %1645 = vmatpush1.msra.mxu0 %v1644
  %1646 = vmatprep.subr.mxu0 0.0
  %v1647 = vand.u32 %v1560, 4294901760
  %1648 = vmatpush1.msra.mxu0 %v1647
  %1649 = vmatprep.subr.mxu0 0.0
  %v1650 = vand.u32 %v1561, 4294901760
  %1651 = vmatpush1.msra.mxu0 %v1650
  %1652 = vmatprep.subr.mxu0 0.0
  %v1653 = vand.u32 %v1562, 4294901760
  %1654 = vmatpush1.msra.mxu0 %v1653
  %1655 = vmatprep.subr.mxu0 0.0
  %v1656 = vand.u32 %v1563, 4294901760
  %1657 = vmatpush1.msra.mxu0 %v1656
  %1658 = vmatprep.subr.mxu0 0.0
  %v1659 = vand.u32 %v1564, 4294901760
  %1660 = vmatpush1.msra.mxu0 %v1659
  %v1661 = vand.u32 %v1023, 4294901760
  %v1662 = vsub.f32 %v1023, %v1661
  %v1663 = vand.u32 %v1662, 4294901760
  %v1664 = vsub.f32 %v1662, %v1663
  %v1665 = vand.u32 %v1664, 4294901760
  %1666 = vmatprep.mubr.f32.mxu0 %v1665
  %v1667 = vand.u32 %v1022, 4294901760
  %v1668 = vsub.f32 %v1022, %v1667
  %v1669 = vand.u32 %v1668, 4294901760
  %v1670 = vsub.f32 %v1668, %v1669
  %v1671 = vand.u32 %v1670, 4294901760
  %1672 = vmatmul.mubr.f32.gmra.mrb[0].mxu0 %v1671
  %v1673 = vpop.f32.mrb[0].mxu0
  %v1674 = vadd.f32 0.0, %v1673
  %v1675 = vpop.f32.mrb[0].mxu0
  %1676 = vdwg.mxu0
  %1677 = vmatprep.subr.mxu0 0.0
  %v1678 = vand.u32 %v1533, 4294901760
  %v1679 = vsub.f32 %v1533, %v1678
  %v1680 = vand.u32 %v1679, 4294901760
  %v1681 = vsub.f32 %v1679, %v1680
  %v1682 = vand.u32 %v1681, 4294901760
  %1683 = vmatpush1.msra.mxu0 %v1682
  %1684 = vmatprep.subr.mxu0 0.0
  %v1685 = vand.u32 %v1534, 4294901760
  %v1686 = vsub.f32 %v1534, %v1685
  %v1687 = vand.u32 %v1686, 4294901760
  %v1688 = vsub.f32 %v1686, %v1687
  %v1689 = vand.u32 %v1688, 4294901760
  %1690 = vmatpush1.msra.mxu0 %v1689
  %1691 = vmatprep.subr.mxu0 0.0
  %v1692 = vand.u32 %v1535, 4294901760
  %v1693 = vsub.f32 %v1535, %v1692
  %v1694 = vand.u32 %v1693, 4294901760
  %v1695 = vsub.f32 %v1693, %v1694
  %v1696 = vand.u32 %v1695, 4294901760
  %1697 = vmatpush1.msra.mxu0 %v1696
  %1698 = vmatprep.subr.mxu0 0.0
  %v1699 = vand.u32 %v1536, 4294901760
  %v1700 = vsub.f32 %v1536, %v1699
  %v1701 = vand.u32 %v1700, 4294901760
  %v1702 = vsub.f32 %v1700, %v1701
  %v1703 = vand.u32 %v1702, 4294901760
  %1704 = vmatpush1.msra.mxu0 %v1703
  %1705 = vmatprep.subr.mxu0 0.0
  %v1706 = vand.u32 %v1537, 4294901760
  %v1707 = vsub.f32 %v1537, %v1706
  %v1708 = vand.u32 %v1707, 4294901760
  %v1709 = vsub.f32 %v1707, %v1708
  %v1710 = vand.u32 %v1709, 4294901760
  %1711 = vmatpush1.msra.mxu0 %v1710
  %1712 = vmatprep.subr.mxu0 0.0
  %v1713 = vand.u32 %v1538, 4294901760
  %v1714 = vsub.f32 %v1538, %v1713
  %v1715 = vand.u32 %v1714, 4294901760
  %v1716 = vsub.f32 %v1714, %v1715
  %v1717 = vand.u32 %v1716, 4294901760
  %1718 = vmatpush1.msra.mxu0 %v1717
  %1719 = vmatprep.subr.mxu0 0.0
  %v1720 = vand.u32 %v1539, 4294901760
  %v1721 = vsub.f32 %v1539, %v1720
  %v1722 = vand.u32 %v1721, 4294901760
  %v1723 = vsub.f32 %v1721, %v1722
  %v1724 = vand.u32 %v1723, 4294901760
  %1725 = vmatpush1.msra.mxu0 %v1724
  %1726 = vmatprep.subr.mxu0 0.0
  %v1727 = vand.u32 %v1540, 4294901760
  %v1728 = vsub.f32 %v1540, %v1727
  %v1729 = vand.u32 %v1728, 4294901760
  %v1730 = vsub.f32 %v1728, %v1729
  %v1731 = vand.u32 %v1730, 4294901760
  %1732 = vmatpush1.msra.mxu0 %v1731
  %1733 = vmatprep.subr.mxu0 0.0
  %v1734 = vand.u32 %v1541, 4294901760
  %v1735 = vsub.f32 %v1541, %v1734
  %v1736 = vand.u32 %v1735, 4294901760
  %v1737 = vsub.f32 %v1735, %v1736
  %v1738 = vand.u32 %v1737, 4294901760
  %1739 = vmatpush1.msra.mxu0 %v1738
  %1740 = vmatprep.subr.mxu0 0.0
  %v1741 = vand.u32 %v1542, 4294901760
  %v1742 = vsub.f32 %v1542, %v1741
  %v1743 = vand.u32 %v1742, 4294901760
  %v1744 = vsub.f32 %v1742, %v1743
  %v1745 = vand.u32 %v1744, 4294901760
  %1746 = vmatpush1.msra.mxu0 %v1745
  %1747 = vmatprep.subr.mxu0 0.0
  %v1748 = vand.u32 %v1543, 4294901760
  %v1749 = vsub.f32 %v1543, %v1748
  %v1750 = vand.u32 %v1749, 4294901760
  %v1751 = vsub.f32 %v1749, %v1750
  %v1752 = vand.u32 %v1751, 4294901760
  %1753 = vmatpush1.msra.mxu0 %v1752
  %1754 = vmatprep.subr.mxu0 0.0
  %v1755 = vand.u32 %v1544, 4294901760
  %v1756 = vsub.f32 %v1544, %v1755
  %v1757 = vand.u32 %v1756, 4294901760
  %v1758 = vsub.f32 %v1756, %v1757
  %v1759 = vand.u32 %v1758, 4294901760
  %1760 = vmatpush1.msra.mxu0 %v1759
  %1761 = vmatprep.subr.mxu0 0.0
  %v1762 = vand.u32 %v1545, 4294901760
  %v1763 = vsub.f32 %v1545, %v1762
  %v1764 = vand.u32 %v1763, 4294901760
  %v1765 = vsub.f32 %v1763, %v1764
  %v1766 = vand.u32 %v1765, 4294901760
  %1767 = vmatpush1.msra.mxu0 %v1766
  %1768 = vmatprep.subr.mxu0 0.0
  %v1769 = vand.u32 %v1546, 4294901760
  %v1770 = vsub.f32 %v1546, %v1769
  %v1771 = vand.u32 %v1770, 4294901760
  %v1772 = vsub.f32 %v1770, %v1771
  %v1773 = vand.u32 %v1772, 4294901760
  %1774 = vmatpush1.msra.mxu0 %v1773
  %1775 = vmatprep.subr.mxu0 0.0
  %v1776 = vand.u32 %v1547, 4294901760
  %v1777 = vsub.f32 %v1547, %v1776
  %v1778 = vand.u32 %v1777, 4294901760
  %v1779 = vsub.f32 %v1777, %v1778
  %v1780 = vand.u32 %v1779, 4294901760
  %1781 = vmatpush1.msra.mxu0 %v1780
  %1782 = vmatprep.subr.mxu0 0.0
  %v1783 = vand.u32 %v1548, 4294901760
  %v1784 = vsub.f32 %v1548, %v1783
  %v1785 = vand.u32 %v1784, 4294901760
  %v1786 = vsub.f32 %v1784, %v1785
  %v1787 = vand.u32 %v1786, 4294901760
  %1788 = vmatpush1.msra.mxu0 %v1787
  %1789 = vmatprep.subr.mxu0 0.0
  %v1790 = vand.u32 %v1549, 4294901760
  %v1791 = vsub.f32 %v1549, %v1790
  %v1792 = vand.u32 %v1791, 4294901760
  %v1793 = vsub.f32 %v1791, %v1792
  %v1794 = vand.u32 %v1793, 4294901760
  %1795 = vmatpush1.msra.mxu0 %v1794
  %1796 = vmatprep.subr.mxu0 0.0
  %v1797 = vand.u32 %v1550, 4294901760
  %v1798 = vsub.f32 %v1550, %v1797
  %v1799 = vand.u32 %v1798, 4294901760
  %v1800 = vsub.f32 %v1798, %v1799
  %v1801 = vand.u32 %v1800, 4294901760
  %1802 = vmatpush1.msra.mxu0 %v1801
  %1803 = vmatprep.subr.mxu0 0.0
  %v1804 = vand.u32 %v1551, 4294901760
  %v1805 = vsub.f32 %v1551, %v1804
  %v1806 = vand.u32 %v1805, 4294901760
  %v1807 = vsub.f32 %v1805, %v1806
  %v1808 = vand.u32 %v1807, 4294901760
  %1809 = vmatpush1.msra.mxu0 %v1808
  %1810 = vmatprep.subr.mxu0 0.0
  %v1811 = vand.u32 %v1552, 4294901760
  %v1812 = vsub.f32 %v1552, %v1811
  %v1813 = vand.u32 %v1812, 4294901760
  %v1814 = vsub.f32 %v1812, %v1813
  %v1815 = vand.u32 %v1814, 4294901760
  %1816 = vmatpush1.msra.mxu0 %v1815
  %1817 = vmatprep.subr.mxu0 0.0
  %v1818 = vand.u32 %v1553, 4294901760
  %v1819 = vsub.f32 %v1553, %v1818
  %v1820 = vand.u32 %v1819, 4294901760
  %v1821 = vsub.f32 %v1819, %v1820
  %v1822 = vand.u32 %v1821, 4294901760
  %1823 = vmatpush1.msra.mxu0 %v1822
  %1824 = vmatprep.subr.mxu0 0.0
  %v1825 = vand.u32 %v1554, 4294901760
  %v1826 = vsub.f32 %v1554, %v1825
  %v1827 = vand.u32 %v1826, 4294901760
  %v1828 = vsub.f32 %v1826, %v1827
  %v1829 = vand.u32 %v1828, 4294901760
  %1830 = vmatpush1.msra.mxu0 %v1829
  %1831 = vmatprep.subr.mxu0 0.0
  %v1832 = vand.u32 %v1555, 4294901760
  %v1833 = vsub.f32 %v1555, %v1832
  %v1834 = vand.u32 %v1833, 4294901760
  %v1835 = vsub.f32 %v1833, %v1834
  %v1836 = vand.u32 %v1835, 4294901760
  %1837 = vmatpush1.msra.mxu0 %v1836
  %1838 = vmatprep.subr.mxu0 0.0
  %v1839 = vand.u32 %v1556, 4294901760
  %v1840 = vsub.f32 %v1556, %v1839
  %v1841 = vand.u32 %v1840, 4294901760
  %v1842 = vsub.f32 %v1840, %v1841
  %v1843 = vand.u32 %v1842, 4294901760
  %1844 = vmatpush1.msra.mxu0 %v1843
  %1845 = vmatprep.subr.mxu0 0.0
  %v1846 = vand.u32 %v1557, 4294901760
  %v1847 = vsub.f32 %v1557, %v1846
  %v1848 = vand.u32 %v1847, 4294901760
  %v1849 = vsub.f32 %v1847, %v1848
  %v1850 = vand.u32 %v1849, 4294901760
  %1851 = vmatpush1.msra.mxu0 %v1850
  %1852 = vmatprep.subr.mxu0 0.0
  %v1853 = vand.u32 %v1558, 4294901760
  %v1854 = vsub.f32 %v1558, %v1853
  %v1855 = vand.u32 %v1854, 4294901760
  %v1856 = vsub.f32 %v1854, %v1855
  %v1857 = vand.u32 %v1856, 4294901760
  %1858 = vmatpush1.msra.mxu0 %v1857
  %1859 = vmatprep.subr.mxu0 0.0
  %v1860 = vand.u32 %v1559, 4294901760
  %v1861 = vsub.f32 %v1559, %v1860
  %v1862 = vand.u32 %v1861, 4294901760
  %v1863 = vsub.f32 %v1861, %v1862
  %v1864 = vand.u32 %v1863, 4294901760
  %1865 = vmatpush1.msra.mxu0 %v1864
  %1866 = vmatprep.subr.mxu0 0.0
  %v1867 = vand.u32 %v1560, 4294901760
  %v1868 = vsub.f32 %v1560, %v1867
  %v1869 = vand.u32 %v1868, 4294901760
  %v1870 = vsub.f32 %v1868, %v1869
  %v1871 = vand.u32 %v1870, 4294901760
  %1872 = vmatpush1.msra.mxu0 %v1871
  %1873 = vmatprep.subr.mxu0 0.0
  %v1874 = vand.u32 %v1561, 4294901760
  %v1875 = vsub.f32 %v1561, %v1874
  %v1876 = vand.u32 %v1875, 4294901760
  %v1877 = vsub.f32 %v1875, %v1876
  %v1878 = vand.u32 %v1877, 4294901760
  %1879 = vmatpush1.msra.mxu0 %v1878
  %1880 = vmatprep.subr.mxu0 0.0
  %v1881 = vand.u32 %v1562, 4294901760
  %v1882 = vsub.f32 %v1562, %v1881
  %v1883 = vand.u32 %v1882, 4294901760
  %v1884 = vsub.f32 %v1882, %v1883
  %v1885 = vand.u32 %v1884, 4294901760
  %1886 = vmatpush1.msra.mxu0 %v1885
  %1887 = vmatprep.subr.mxu0 0.0
  %v1888 = vand.u32 %v1563, 4294901760
  %v1889 = vsub.f32 %v1563, %v1888
  %v1890 = vand.u32 %v1889, 4294901760
  %v1891 = vsub.f32 %v1889, %v1890
  %v1892 = vand.u32 %v1891, 4294901760
  %1893 = vmatpush1.msra.mxu0 %v1892
  %1894 = vmatprep.subr.mxu0 0.0
  %v1895 = vand.u32 %v1564, 4294901760
  %v1896 = vsub.f32 %v1564, %v1895
  %v1897 = vand.u32 %v1896, 4294901760
  %v1898 = vsub.f32 %v1896, %v1897
  %v1899 = vand.u32 %v1898, 4294901760
  %1900 = vmatpush1.msra.mxu0 %v1899
  %v1901 = vand.u32 %v1023, 4294901760
  %1902 = vmatprep.mubr.f32.mxu0 %v1901
  %v1903 = vand.u32 %v1022, 4294901760
  %1904 = vmatmul.mubr.f32.gmra.mrb[0].mxu0 %v1903
  %v1905 = vpop.f32.mrb[0].mxu0
  %v1906 = vadd.f32 %v1674, %v1905
  %v1907 = vpop.f32.mrb[0].mxu0
  %1908 = vdwg.mxu0
  %1909 = vmatprep.subr.mxu0 0.0
  %v1910 = vand.u32 %v1533, 4294901760
  %v1911 = vsub.f32 %v1533, %v1910
  %1912 = vmatpush1.msra.mxu0 %v1911
  %1913 = vmatprep.subr.mxu0 0.0
  %v1914 = vand.u32 %v1534, 4294901760
  %v1915 = vsub.f32 %v1534, %v1914
  %1916 = vmatpush1.msra.mxu0 %v1915
  %1917 = vmatprep.subr.mxu0 0.0
  %v1918 = vand.u32 %v1535, 4294901760
  %v1919 = vsub.f32 %v1535, %v1918
  %1920 = vmatpush1.msra.mxu0 %v1919
  %1921 = vmatprep.subr.mxu0 0.0
  %v1922 = vand.u32 %v1536, 4294901760
  %v1923 = vsub.f32 %v1536, %v1922
  %1924 = vmatpush1.msra.mxu0 %v1923
  %1925 = vmatprep.subr.mxu0 0.0
  %v1926 = vand.u32 %v1537, 4294901760
  %v1927 = vsub.f32 %v1537, %v1926
  %1928 = vmatpush1.msra.mxu0 %v1927
  %1929 = vmatprep.subr.mxu0 0.0
  %v1930 = vand.u32 %v1538, 4294901760
  %v1931 = vsub.f32 %v1538, %v1930
  %1932 = vmatpush1.msra.mxu0 %v1931
  %1933 = vmatprep.subr.mxu0 0.0
  %v1934 = vand.u32 %v1539, 4294901760
  %v1935 = vsub.f32 %v1539, %v1934
  %1936 = vmatpush1.msra.mxu0 %v1935
  %1937 = vmatprep.subr.mxu0 0.0
  %v1938 = vand.u32 %v1540, 4294901760
  %v1939 = vsub.f32 %v1540, %v1938
  %1940 = vmatpush1.msra.mxu0 %v1939
  %1941 = vmatprep.subr.mxu0 0.0
  %v1942 = vand.u32 %v1541, 4294901760
  %v1943 = vsub.f32 %v1541, %v1942
  %1944 = vmatpush1.msra.mxu0 %v1943
  %1945 = vmatprep.subr.mxu0 0.0
  %v1946 = vand.u32 %v1542, 4294901760
  %v1947 = vsub.f32 %v1542, %v1946
  %1948 = vmatpush1.msra.mxu0 %v1947
  %1949 = vmatprep.subr.mxu0 0.0
  %v1950 = vand.u32 %v1543, 4294901760
  %v1951 = vsub.f32 %v1543, %v1950
  %1952 = vmatpush1.msra.mxu0 %v1951
  %1953 = vmatprep.subr.mxu0 0.0
  %v1954 = vand.u32 %v1544, 4294901760
  %v1955 = vsub.f32 %v1544, %v1954
  %1956 = vmatpush1.msra.mxu0 %v1955
  %1957 = vmatprep.subr.mxu0 0.0
  %v1958 = vand.u32 %v1545, 4294901760
  %v1959 = vsub.f32 %v1545, %v1958
  %1960 = vmatpush1.msra.mxu0 %v1959
  %1961 = vmatprep.subr.mxu0 0.0
  %v1962 = vand.u32 %v1546, 4294901760
  %v1963 = vsub.f32 %v1546, %v1962
  %1964 = vmatpush1.msra.mxu0 %v1963
  %1965 = vmatprep.subr.mxu0 0.0
  %v1966 = vand.u32 %v1547, 4294901760
  %v1967 = vsub.f32 %v1547, %v1966
  %1968 = vmatpush1.msra.mxu0 %v1967
  %1969 = vmatprep.subr.mxu0 0.0
  %v1970 = vand.u32 %v1548, 4294901760
  %v1971 = vsub.f32 %v1548, %v1970
  %1972 = vmatpush1.msra.mxu0 %v1971
  %1973 = vmatprep.subr.mxu0 0.0
  %v1974 = vand.u32 %v1549, 4294901760
  %v1975 = vsub.f32 %v1549, %v1974
  %1976 = vmatpush1.msra.mxu0 %v1975
  %1977 = vmatprep.subr.mxu0 0.0
  %v1978 = vand.u32 %v1550, 4294901760
  %v1979 = vsub.f32 %v1550, %v1978
  %1980 = vmatpush1.msra.mxu0 %v1979
  %1981 = vmatprep.subr.mxu0 0.0
  %v1982 = vand.u32 %v1551, 4294901760
  %v1983 = vsub.f32 %v1551, %v1982
  %1984 = vmatpush1.msra.mxu0 %v1983
  %1985 = vmatprep.subr.mxu0 0.0
  %v1986 = vand.u32 %v1552, 4294901760
  %v1987 = vsub.f32 %v1552, %v1986
  %1988 = vmatpush1.msra.mxu0 %v1987
  %1989 = vmatprep.subr.mxu0 0.0
  %v1990 = vand.u32 %v1553, 4294901760
  %v1991 = vsub.f32 %v1553, %v1990
  %1992 = vmatpush1.msra.mxu0 %v1991
  %1993 = vmatprep.subr.mxu0 0.0
  %v1994 = vand.u32 %v1554, 4294901760
  %v1995 = vsub.f32 %v1554, %v1994
  %1996 = vmatpush1.msra.mxu0 %v1995
  %1997 = vmatprep.subr.mxu0 0.0
  %v1998 = vand.u32 %v1555, 4294901760
  %v1999 = vsub.f32 %v1555, %v1998
  %2000 = vmatpush1.msra.mxu0 %v1999
  %2001 = vmatprep.subr.mxu0 0.0
  %v2002 = vand.u32 %v1556, 4294901760
  %v2003 = vsub.f32 %v1556, %v2002
  %2004 = vmatpush1.msra.mxu0 %v2003
  %2005 = vmatprep.subr.mxu0 0.0
  %v2006 = vand.u32 %v1557, 4294901760
  %v2007 = vsub.f32 %v1557, %v2006
  %2008 = vmatpush1.msra.mxu0 %v2007
  %2009 = vmatprep.subr.mxu0 0.0
  %v2010 = vand.u32 %v1558, 4294901760
  %v2011 = vsub.f32 %v1558, %v2010
  %2012 = vmatpush1.msra.mxu0 %v2011
  %2013 = vmatprep.subr.mxu0 0.0
  %v2014 = vand.u32 %v1559, 4294901760
  %v2015 = vsub.f32 %v1559, %v2014
  %2016 = vmatpush1.msra.mxu0 %v2015
  %2017 = vmatprep.subr.mxu0 0.0
  %v2018 = vand.u32 %v1560, 4294901760
  %v2019 = vsub.f32 %v1560, %v2018
  %2020 = vmatpush1.msra.mxu0 %v2019
  %2021 = vmatprep.subr.mxu0 0.0
  %v2022 = vand.u32 %v1561, 4294901760
  %v2023 = vsub.f32 %v1561, %v2022
  %2024 = vmatpush1.msra.mxu0 %v2023
  %2025 = vmatprep.subr.mxu0 0.0
  %v2026 = vand.u32 %v1562, 4294901760
  %v2027 = vsub.f32 %v1562, %v2026
  %2028 = vmatpush1.msra.mxu0 %v2027
  %2029 = vmatprep.subr.mxu0 0.0
  %v2030 = vand.u32 %v1563, 4294901760
  %v2031 = vsub.f32 %v1563, %v2030
  %2032 = vmatpush1.msra.mxu0 %v2031
  %2033 = vmatprep.subr.mxu0 0.0
  %v2034 = vand.u32 %v1564, 4294901760
  %v2035 = vsub.f32 %v1564, %v2034
  %2036 = vmatpush1.msra.mxu0 %v2035
  %v2037 = vand.u32 %v1023, 4294901760
  %v2038 = vsub.f32 %v1023, %v2037
  %2039 = vmatprep.mubr.f32.mxu0 %v2038
  %v2040 = vand.u32 %v1022, 4294901760
  %v2041 = vsub.f32 %v1022, %v2040
  %2042 = vmatmul.mubr.f32.gmra.mrb[0].mxu0 %v2041
  %v2043 = vpop.f32.mrb[0].mxu0
  %v2044 = vadd.f32 %v1906, %v2043
  %v2045 = vpop.f32.mrb[0].mxu0
  %2046 = vdwg.mxu0
  %2047 = vmatprep.subr.mxu0 0.0
  %v2048 = vand.u32 %v1533, 4294901760
  %2049 = vmatpush1.msra.mxu0 %v2048
  %2050 = vmatprep.subr.mxu0 0.0
  %v2051 = vand.u32 %v1534, 4294901760
  %2052 = vmatpush1.msra.mxu0 %v2051
  %2053 = vmatprep.subr.mxu0 0.0
  %v2054 = vand.u32 %v1535, 4294901760
  %2055 = vmatpush1.msra.mxu0 %v2054
  %2056 = vmatprep.subr.mxu0 0.0
  %v2057 = vand.u32 %v1536, 4294901760
  %2058 = vmatpush1.msra.mxu0 %v2057
  %2059 = vmatprep.subr.mxu0 0.0
  %v2060 = vand.u32 %v1537, 4294901760
  %2061 = vmatpush1.msra.mxu0 %v2060
  %2062 = vmatprep.subr.mxu0 0.0
  %v2063 = vand.u32 %v1538, 4294901760
  %2064 = vmatpush1.msra.mxu0 %v2063
  %2065 = vmatprep.subr.mxu0 0.0
  %v2066 = vand.u32 %v1539, 4294901760
  %2067 = vmatpush1.msra.mxu0 %v2066
  %2068 = vmatprep.subr.mxu0 0.0
  %v2069 = vand.u32 %v1540, 4294901760
  %2070 = vmatpush1.msra.mxu0 %v2069
  %2071 = vmatprep.subr.mxu0 0.0
  %v2072 = vand.u32 %v1541, 4294901760
  %2073 = vmatpush1.msra.mxu0 %v2072
  %2074 = vmatprep.subr.mxu0 0.0
  %v2075 = vand.u32 %v1542, 4294901760
  %2076 = vmatpush1.msra.mxu0 %v2075
  %2077 = vmatprep.subr.mxu0 0.0
  %v2078 = vand.u32 %v1543, 4294901760
  %2079 = vmatpush1.msra.mxu0 %v2078
  %2080 = vmatprep.subr.mxu0 0.0
  %v2081 = vand.u32 %v1544, 4294901760
  %2082 = vmatpush1.msra.mxu0 %v2081
  %2083 = vmatprep.subr.mxu0 0.0
  %v2084 = vand.u32 %v1545, 4294901760
  %2085 = vmatpush1.msra.mxu0 %v2084
  %2086 = vmatprep.subr.mxu0 0.0
  %v2087 = vand.u32 %v1546, 4294901760
  %2088 = vmatpush1.msra.mxu0 %v2087
  %2089 = vmatprep.subr.mxu0 0.0
  %v2090 = vand.u32 %v1547, 4294901760
  %2091 = vmatpush1.msra.mxu0 %v2090
  %2092 = vmatprep.subr.mxu0 0.0
  %v2093 = vand.u32 %v1548, 4294901760
  %2094 = vmatpush1.msra.mxu0 %v2093
  %2095 = vmatprep.subr.mxu0 0.0
  %v2096 = vand.u32 %v1549, 4294901760
  %2097 = vmatpush1.msra.mxu0 %v2096
  %2098 = vmatprep.subr.mxu0 0.0
  %v2099 = vand.u32 %v1550, 4294901760
  %2100 = vmatpush1.msra.mxu0 %v2099
  %2101 = vmatprep.subr.mxu0 0.0
  %v2102 = vand.u32 %v1551, 4294901760
  %2103 = vmatpush1.msra.mxu0 %v2102
  %2104 = vmatprep.subr.mxu0 0.0
  %v2105 = vand.u32 %v1552, 4294901760
  %2106 = vmatpush1.msra.mxu0 %v2105
  %2107 = vmatprep.subr.mxu0 0.0
  %v2108 = vand.u32 %v1553, 4294901760
  %2109 = vmatpush1.msra.mxu0 %v2108
  %2110 = vmatprep.subr.mxu0 0.0
  %v2111 = vand.u32 %v1554, 4294901760
  %2112 = vmatpush1.msra.mxu0 %v2111
  %2113 = vmatprep.subr.mxu0 0.0
  %v2114 = vand.u32 %v1555, 4294901760
  %2115 = vmatpush1.msra.mxu0 %v2114
  %2116 = vmatprep.subr.mxu0 0.0
  %v2117 = vand.u32 %v1556, 4294901760
  %2118 = vmatpush1.msra.mxu0 %v2117
  %2119 = vmatprep.subr.mxu0 0.0
  %v2120 = vand.u32 %v1557, 4294901760
  %2121 = vmatpush1.msra.mxu0 %v2120
  %2122 = vmatprep.subr.mxu0 0.0
  %v2123 = vand.u32 %v1558, 4294901760
  %2124 = vmatpush1.msra.mxu0 %v2123
  %2125 = vmatprep.subr.mxu0 0.0
  %v2126 = vand.u32 %v1559, 4294901760
  %2127 = vmatpush1.msra.mxu0 %v2126
  %2128 = vmatprep.subr.mxu0 0.0
  %v2129 = vand.u32 %v1560, 4294901760
  %2130 = vmatpush1.msra.mxu0 %v2129
  %2131 = vmatprep.subr.mxu0 0.0
  %v2132 = vand.u32 %v1561, 4294901760
  %2133 = vmatpush1.msra.mxu0 %v2132
  %2134 = vmatprep.subr.mxu0 0.0
  %v2135 = vand.u32 %v1562, 4294901760
  %2136 = vmatpush1.msra.mxu0 %v2135
  %2137 = vmatprep.subr.mxu0 0.0
  %v2138 = vand.u32 %v1563, 4294901760
  %2139 = vmatpush1.msra.mxu0 %v2138
  %2140 = vmatprep.subr.mxu0 0.0
  %v2141 = vand.u32 %v1564, 4294901760
  %2142 = vmatpush1.msra.mxu0 %v2141
  %v2143 = vand.u32 %v1023, 4294901760
  %v2144 = vsub.f32 %v1023, %v2143
  %v2145 = vand.u32 %v2144, 4294901760
  %2146 = vmatprep.mubr.f32.mxu0 %v2145
  %v2147 = vand.u32 %v1022, 4294901760
  %v2148 = vsub.f32 %v1022, %v2147
  %v2149 = vand.u32 %v2148, 4294901760
  %2150 = vmatmul.mubr.f32.gmra.mrb[0].mxu0 %v2149
  %v2151 = vpop.f32.mrb[0].mxu0
  %v2152 = vadd.f32 %v2044, %v2151
  %v2153 = vpop.f32.mrb[0].mxu0
  %2154 = vdwg.mxu0
  %2155 = vmatprep.subr.mxu0 0.0
  %v2156 = vand.u32 %v1533, 4294901760
  %v2157 = vsub.f32 %v1533, %v2156
  %v2158 = vand.u32 %v2157, 4294901760
  %2159 = vmatpush1.msra.mxu0 %v2158
  %2160 = vmatprep.subr.mxu0 0.0
  %v2161 = vand.u32 %v1534, 4294901760
  %v2162 = vsub.f32 %v1534, %v2161
  %v2163 = vand.u32 %v2162, 4294901760
  %2164 = vmatpush1.msra.mxu0 %v2163
  %2165 = vmatprep.subr.mxu0 0.0
  %v2166 = vand.u32 %v1535, 4294901760
  %v2167 = vsub.f32 %v1535, %v2166
  %v2168 = vand.u32 %v2167, 4294901760
  %2169 = vmatpush1.msra.mxu0 %v2168
  %2170 = vmatprep.subr.mxu0 0.0
  %v2171 = vand.u32 %v1536, 4294901760
  %v2172 = vsub.f32 %v1536, %v2171
  %v2173 = vand.u32 %v2172, 4294901760
  %2174 = vmatpush1.msra.mxu0 %v2173
  %2175 = vmatprep.subr.mxu0 0.0
  %v2176 = vand.u32 %v1537, 4294901760
  %v2177 = vsub.f32 %v1537, %v2176
  %v2178 = vand.u32 %v2177, 4294901760
  %2179 = vmatpush1.msra.mxu0 %v2178
  %2180 = vmatprep.subr.mxu0 0.0
  %v2181 = vand.u32 %v1538, 4294901760
  %v2182 = vsub.f32 %v1538, %v2181
  %v2183 = vand.u32 %v2182, 4294901760
  %2184 = vmatpush1.msra.mxu0 %v2183
  %2185 = vmatprep.subr.mxu0 0.0
  %v2186 = vand.u32 %v1539, 4294901760
  %v2187 = vsub.f32 %v1539, %v2186
  %v2188 = vand.u32 %v2187, 4294901760
  %2189 = vmatpush1.msra.mxu0 %v2188
  %2190 = vmatprep.subr.mxu0 0.0
  %v2191 = vand.u32 %v1540, 4294901760
  %v2192 = vsub.f32 %v1540, %v2191
  %v2193 = vand.u32 %v2192, 4294901760
  %2194 = vmatpush1.msra.mxu0 %v2193
  %2195 = vmatprep.subr.mxu0 0.0
  %v2196 = vand.u32 %v1541, 4294901760
  %v2197 = vsub.f32 %v1541, %v2196
  %v2198 = vand.u32 %v2197, 4294901760
  %2199 = vmatpush1.msra.mxu0 %v2198
  %2200 = vmatprep.subr.mxu0 0.0
  %v2201 = vand.u32 %v1542, 4294901760
  %v2202 = vsub.f32 %v1542, %v2201
  %v2203 = vand.u32 %v2202, 4294901760
  %2204 = vmatpush1.msra.mxu0 %v2203
  %2205 = vmatprep.subr.mxu0 0.0
  %v2206 = vand.u32 %v1543, 4294901760
  %v2207 = vsub.f32 %v1543, %v2206
  %v2208 = vand.u32 %v2207, 4294901760
  %2209 = vmatpush1.msra.mxu0 %v2208
  %2210 = vmatprep.subr.mxu0 0.0
  %v2211 = vand.u32 %v1544, 4294901760
  %v2212 = vsub.f32 %v1544, %v2211
  %v2213 = vand.u32 %v2212, 4294901760
  %2214 = vmatpush1.msra.mxu0 %v2213
  %2215 = vmatprep.subr.mxu0 0.0
  %v2216 = vand.u32 %v1545, 4294901760
  %v2217 = vsub.f32 %v1545, %v2216
  %v2218 = vand.u32 %v2217, 4294901760
  %2219 = vmatpush1.msra.mxu0 %v2218
  %2220 = vmatprep.subr.mxu0 0.0
  %v2221 = vand.u32 %v1546, 4294901760
  %v2222 = vsub.f32 %v1546, %v2221
  %v2223 = vand.u32 %v2222, 4294901760
  %2224 = vmatpush1.msra.mxu0 %v2223
  %2225 = vmatprep.subr.mxu0 0.0
  %v2226 = vand.u32 %v1547, 4294901760
  %v2227 = vsub.f32 %v1547, %v2226
  %v2228 = vand.u32 %v2227, 4294901760
  %2229 = vmatpush1.msra.mxu0 %v2228
  %2230 = vmatprep.subr.mxu0 0.0
  %v2231 = vand.u32 %v1548, 4294901760
  %v2232 = vsub.f32 %v1548, %v2231
  %v2233 = vand.u32 %v2232, 4294901760
  %2234 = vmatpush1.msra.mxu0 %v2233
  %2235 = vmatprep.subr.mxu0 0.0
  %v2236 = vand.u32 %v1549, 4294901760
  %v2237 = vsub.f32 %v1549, %v2236
  %v2238 = vand.u32 %v2237, 4294901760
  %2239 = vmatpush1.msra.mxu0 %v2238
  %2240 = vmatprep.subr.mxu0 0.0
  %v2241 = vand.u32 %v1550, 4294901760
  %v2242 = vsub.f32 %v1550, %v2241
  %v2243 = vand.u32 %v2242, 4294901760
  %2244 = vmatpush1.msra.mxu0 %v2243
  %2245 = vmatprep.subr.mxu0 0.0
  %v2246 = vand.u32 %v1551, 4294901760
  %v2247 = vsub.f32 %v1551, %v2246
  %v2248 = vand.u32 %v2247, 4294901760
  %2249 = vmatpush1.msra.mxu0 %v2248
  %2250 = vmatprep.subr.mxu0 0.0
  %v2251 = vand.u32 %v1552, 4294901760
  %v2252 = vsub.f32 %v1552, %v2251
  %v2253 = vand.u32 %v2252, 4294901760
  %2254 = vmatpush1.msra.mxu0 %v2253
  %2255 = vmatprep.subr.mxu0 0.0
  %v2256 = vand.u32 %v1553, 4294901760
  %v2257 = vsub.f32 %v1553, %v2256
  %v2258 = vand.u32 %v2257, 4294901760
  %2259 = vmatpush1.msra.mxu0 %v2258
  %2260 = vmatprep.subr.mxu0 0.0
  %v2261 = vand.u32 %v1554, 4294901760
  %v2262 = vsub.f32 %v1554, %v2261
  %v2263 = vand.u32 %v2262, 4294901760
  %2264 = vmatpush1.msra.mxu0 %v2263
  %2265 = vmatprep.subr.mxu0 0.0
  %v2266 = vand.u32 %v1555, 4294901760
  %v2267 = vsub.f32 %v1555, %v2266
  %v2268 = vand.u32 %v2267, 4294901760
  %2269 = vmatpush1.msra.mxu0 %v2268
  %2270 = vmatprep.subr.mxu0 0.0
  %v2271 = vand.u32 %v1556, 4294901760
  %v2272 = vsub.f32 %v1556, %v2271
  %v2273 = vand.u32 %v2272, 4294901760
  %2274 = vmatpush1.msra.mxu0 %v2273
  %2275 = vmatprep.subr.mxu0 0.0
  %v2276 = vand.u32 %v1557, 4294901760
  %v2277 = vsub.f32 %v1557, %v2276
  %v2278 = vand.u32 %v2277, 4294901760
  %2279 = vmatpush1.msra.mxu0 %v2278
  %2280 = vmatprep.subr.mxu0 0.0
  %v2281 = vand.u32 %v1558, 4294901760
  %v2282 = vsub.f32 %v1558, %v2281
  %v2283 = vand.u32 %v2282, 4294901760
  %2284 = vmatpush1.msra.mxu0 %v2283
  %2285 = vmatprep.subr.mxu0 0.0
  %v2286 = vand.u32 %v1559, 4294901760
  %v2287 = vsub.f32 %v1559, %v2286
  %v2288 = vand.u32 %v2287, 4294901760
  %2289 = vmatpush1.msra.mxu0 %v2288
  %2290 = vmatprep.subr.mxu0 0.0
  %v2291 = vand.u32 %v1560, 4294901760
  %v2292 = vsub.f32 %v1560, %v2291
  %v2293 = vand.u32 %v2292, 4294901760
  %2294 = vmatpush1.msra.mxu0 %v2293
  %2295 = vmatprep.subr.mxu0 0.0
  %v2296 = vand.u32 %v1561, 4294901760
  %v2297 = vsub.f32 %v1561, %v2296
  %v2298 = vand.u32 %v2297, 4294901760
  %2299 = vmatpush1.msra.mxu0 %v2298
  %2300 = vmatprep.subr.mxu0 0.0
  %v2301 = vand.u32 %v1562, 4294901760
  %v2302 = vsub.f32 %v1562, %v2301
  %v2303 = vand.u32 %v2302, 4294901760
  %2304 = vmatpush1.msra.mxu0 %v2303
  %2305 = vmatprep.subr.mxu0 0.0
  %v2306 = vand.u32 %v1563, 4294901760
  %v2307 = vsub.f32 %v1563, %v2306
  %v2308 = vand.u32 %v2307, 4294901760
  %2309 = vmatpush1.msra.mxu0 %v2308
  %2310 = vmatprep.subr.mxu0 0.0
  %v2311 = vand.u32 %v1564, 4294901760
  %v2312 = vsub.f32 %v1564, %v2311
  %v2313 = vand.u32 %v2312, 4294901760
  %2314 = vmatpush1.msra.mxu0 %v2313
  %v2315 = vand.u32 %v1023, 4294901760
  %2316 = vmatprep.mubr.f32.mxu0 %v2315
  %v2317 = vand.u32 %v1022, 4294901760
  %2318 = vmatmul.mubr.f32.gmra.mrb[0].mxu0 %v2317
  %v2319 = vpop.f32.mrb[0].mxu0
  %v2320 = vadd.f32 %v2152, %v2319
  %v2321 = vpop.f32.mrb[0].mxu0
  %2322 = vdwg.mxu0
  %2323 = vmatprep.subr.mxu0 0.0
  %v2324 = vand.u32 %v1533, 4294901760
  %2325 = vmatpush1.msra.mxu0 %v2324
  %2326 = vmatprep.subr.mxu0 0.0
  %v2327 = vand.u32 %v1534, 4294901760
  %2328 = vmatpush1.msra.mxu0 %v2327
  %2329 = vmatprep.subr.mxu0 0.0
  %v2330 = vand.u32 %v1535, 4294901760
  %2331 = vmatpush1.msra.mxu0 %v2330
  %2332 = vmatprep.subr.mxu0 0.0
  %v2333 = vand.u32 %v1536, 4294901760
  %2334 = vmatpush1.msra.mxu0 %v2333
  %2335 = vmatprep.subr.mxu0 0.0
  %v2336 = vand.u32 %v1537, 4294901760
  %2337 = vmatpush1.msra.mxu0 %v2336
  %2338 = vmatprep.subr.mxu0 0.0
  %v2339 = vand.u32 %v1538, 4294901760
  %2340 = vmatpush1.msra.mxu0 %v2339
  %2341 = vmatprep.subr.mxu0 0.0
  %v2342 = vand.u32 %v1539, 4294901760
  %2343 = vmatpush1.msra.mxu0 %v2342
  %2344 = vmatprep.subr.mxu0 0.0
  %v2345 = vand.u32 %v1540, 4294901760
  %2346 = vmatpush1.msra.mxu0 %v2345
  %2347 = vmatprep.subr.mxu0 0.0
  %v2348 = vand.u32 %v1541, 4294901760
  %2349 = vmatpush1.msra.mxu0 %v2348
  %2350 = vmatprep.subr.mxu0 0.0
  %v2351 = vand.u32 %v1542, 4294901760
  %2352 = vmatpush1.msra.mxu0 %v2351
  %2353 = vmatprep.subr.mxu0 0.0
  %v2354 = vand.u32 %v1543, 4294901760
  %2355 = vmatpush1.msra.mxu0 %v2354
  %2356 = vmatprep.subr.mxu0 0.0
  %v2357 = vand.u32 %v1544, 4294901760
  %2358 = vmatpush1.msra.mxu0 %v2357
  %2359 = vmatprep.subr.mxu0 0.0
  %v2360 = vand.u32 %v1545, 4294901760
  %2361 = vmatpush1.msra.mxu0 %v2360
  %2362 = vmatprep.subr.mxu0 0.0
  %v2363 = vand.u32 %v1546, 4294901760
  %2364 = vmatpush1.msra.mxu0 %v2363
  %2365 = vmatprep.subr.mxu0 0.0
  %v2366 = vand.u32 %v1547, 4294901760
  %2367 = vmatpush1.msra.mxu0 %v2366
  %2368 = vmatprep.subr.mxu0 0.0
  %v2369 = vand.u32 %v1548, 4294901760
  %2370 = vmatpush1.msra.mxu0 %v2369
  %2371 = vmatprep.subr.mxu0 0.0
  %v2372 = vand.u32 %v1549, 4294901760
  %2373 = vmatpush1.msra.mxu0 %v2372
  %2374 = vmatprep.subr.mxu0 0.0
  %v2375 = vand.u32 %v1550, 4294901760
  %2376 = vmatpush1.msra.mxu0 %v2375
  %2377 = vmatprep.subr.mxu0 0.0
  %v2378 = vand.u32 %v1551, 4294901760
  %2379 = vmatpush1.msra.mxu0 %v2378
  %2380 = vmatprep.subr.mxu0 0.0
  %v2381 = vand.u32 %v1552, 4294901760
  %2382 = vmatpush1.msra.mxu0 %v2381
  %2383 = vmatprep.subr.mxu0 0.0
  %v2384 = vand.u32 %v1553, 4294901760
  %2385 = vmatpush1.msra.mxu0 %v2384
  %2386 = vmatprep.subr.mxu0 0.0
  %v2387 = vand.u32 %v1554, 4294901760
  %2388 = vmatpush1.msra.mxu0 %v2387
  %2389 = vmatprep.subr.mxu0 0.0
  %v2390 = vand.u32 %v1555, 4294901760
  %2391 = vmatpush1.msra.mxu0 %v2390
  %2392 = vmatprep.subr.mxu0 0.0
  %v2393 = vand.u32 %v1556, 4294901760
  %2394 = vmatpush1.msra.mxu0 %v2393
  %2395 = vmatprep.subr.mxu0 0.0
  %v2396 = vand.u32 %v1557, 4294901760
  %2397 = vmatpush1.msra.mxu0 %v2396
  %2398 = vmatprep.subr.mxu0 0.0
  %v2399 = vand.u32 %v1558, 4294901760
  %2400 = vmatpush1.msra.mxu0 %v2399
  %2401 = vmatprep.subr.mxu0 0.0
  %v2402 = vand.u32 %v1559, 4294901760
  %2403 = vmatpush1.msra.mxu0 %v2402
  %2404 = vmatprep.subr.mxu0 0.0
  %v2405 = vand.u32 %v1560, 4294901760
  %2406 = vmatpush1.msra.mxu0 %v2405
  %2407 = vmatprep.subr.mxu0 0.0
  %v2408 = vand.u32 %v1561, 4294901760
  %2409 = vmatpush1.msra.mxu0 %v2408
  %2410 = vmatprep.subr.mxu0 0.0
  %v2411 = vand.u32 %v1562, 4294901760
  %2412 = vmatpush1.msra.mxu0 %v2411
  %2413 = vmatprep.subr.mxu0 0.0
  %v2414 = vand.u32 %v1563, 4294901760
  %2415 = vmatpush1.msra.mxu0 %v2414
  %2416 = vmatprep.subr.mxu0 0.0
  %v2417 = vand.u32 %v1564, 4294901760
  %2418 = vmatpush1.msra.mxu0 %v2417
  %v2419 = vand.u32 %v1023, 4294901760
  %2420 = vmatprep.mubr.f32.mxu0 %v2419
  %v2421 = vand.u32 %v1022, 4294901760
  %2422 = vmatmul.mubr.f32.gmra.mrb[0].mxu0 %v2421
  %v2423 = vpop.f32.mrb[0].mxu0
  %v2424 = vadd.f32 %v2320, %v2423
  %v2425 = vpop.f32.mrb[0].mxu0
  %2426 = vdwg.mxu0
  %v2427 = vld [vmem:[%s5] sm:$0xff]
  %v2428 = vld [vmem:[%s7] sm:$0xff]
  %vm2429 = vcmask 64512
  %v2431 = vsel %vm2429, %v2428, 0
  %2433 = vmatprep.subr.mxu0 0.0
  %v2434 = vand.u32 %v2424, 4294901760
  %2435 = vmatpush1.msra.mxu0 %v2434
  %2436 = vmatprep.subr.mxu0 0.0
  %2437 = vmatpush1.msra.mxu0 0.0
  %2438 = vmatprep.subr.mxu0 0.0
  %2439 = vmatpush1.msra.mxu0 0.0
  %2440 = vmatprep.subr.mxu0 0.0
  %2441 = vmatpush1.msra.mxu0 0.0
  %2442 = vmatprep.subr.mxu0 0.0
  %2443 = vmatpush1.msra.mxu0 0.0
  %2444 = vmatprep.subr.mxu0 0.0
  %2445 = vmatpush1.msra.mxu0 0.0
  %2446 = vmatprep.subr.mxu0 0.0
  %2447 = vmatpush1.msra.mxu0 0.0
  %2448 = vmatprep.subr.mxu0 0.0
  %2449 = vmatpush1.msra.mxu0 0.0
  %2450 = vmatprep.subr.mxu0 0.0
  %2451 = vmatpush1.msra.mxu0 0.0
  %2452 = vmatprep.subr.mxu0 0.0
  %2453 = vmatpush1.msra.mxu0 0.0
  %2454 = vmatprep.subr.mxu0 0.0
  %2455 = vmatpush1.msra.mxu0 0.0
  %2456 = vmatprep.subr.mxu0 0.0
  %2457 = vmatpush1.msra.mxu0 0.0
  %2458 = vmatprep.subr.mxu0 0.0
  %2459 = vmatpush1.msra.mxu0 0.0
  %2460 = vmatprep.subr.mxu0 0.0
  %2461 = vmatpush1.msra.mxu0 0.0
  %2462 = vmatprep.subr.mxu0 0.0
  %2463 = vmatpush1.msra.mxu0 0.0
  %2464 = vmatprep.subr.mxu0 0.0
  %2465 = vmatpush1.msra.mxu0 0.0
  %2466 = vmatprep.subr.mxu0 0.0
  %2467 = vmatpush1.msra.mxu0 0.0
  %2468 = vmatprep.subr.mxu0 0.0
  %2469 = vmatpush1.msra.mxu0 0.0
  %2470 = vmatprep.subr.mxu0 0.0
  %2471 = vmatpush1.msra.mxu0 0.0
  %2472 = vmatprep.subr.mxu0 0.0
  %2473 = vmatpush1.msra.mxu0 0.0
  %2474 = vmatprep.subr.mxu0 0.0
  %2475 = vmatpush1.msra.mxu0 0.0
  %2476 = vmatprep.subr.mxu0 0.0
  %2477 = vmatpush1.msra.mxu0 0.0
  %2478 = vmatprep.subr.mxu0 0.0
  %2479 = vmatpush1.msra.mxu0 0.0
  %2480 = vmatprep.subr.mxu0 0.0
  %2481 = vmatpush1.msra.mxu0 0.0
  %2482 = vmatprep.subr.mxu0 0.0
  %2483 = vmatpush1.msra.mxu0 0.0
  %2484 = vmatprep.subr.mxu0 0.0
  %2485 = vmatpush1.msra.mxu0 0.0
  %2486 = vmatprep.subr.mxu0 0.0
  %2487 = vmatpush1.msra.mxu0 0.0
  %2488 = vmatprep.subr.mxu0 0.0
  %2489 = vmatpush1.msra.mxu0 0.0
  %2490 = vmatprep.subr.mxu0 0.0
  %2491 = vmatpush1.msra.mxu0 0.0
  %2492 = vmatprep.subr.mxu0 0.0
  %2493 = vmatpush1.msra.mxu0 0.0
  %2494 = vmatprep.subr.mxu0 0.0
  %2495 = vmatpush1.msra.mxu0 0.0
  %2496 = vmatprep.subr.mxu0 0.0
  %2497 = vmatpush1.msra.mxu0 0.0
  %2498 = vmatprep.mubr.f32.mxu0 0.0
  %v2499 = vand.u32 %v2431, 4294901760
  %v2500 = vsub.f32 %v2431, %v2499
  %v2501 = vand.u32 %v2500, 4294901760
  %v2502 = vsub.f32 %v2500, %v2501
  %v2503 = vand.u32 %v2502, 4294901760
  %2504 = vmatmul.mubr.f32.gmra.mrb[0].mxu0 %v2503
  %v2505 = vpop.f32.mrb[0].mxu0
  %v2506 = vadd.f32 0.0, %v2505
  %v2507 = vpop.f32.mrb[0].mxu0
  %2508 = vdwg.mxu0
  %2509 = vmatprep.subr.mxu0 0.0
  %v2510 = vand.u32 %v2424, 4294901760
  %v2511 = vsub.f32 %v2424, %v2510
  %v2512 = vand.u32 %v2511, 4294901760
  %v2513 = vsub.f32 %v2511, %v2512
  %v2514 = vand.u32 %v2513, 4294901760
  %2515 = vmatpush1.msra.mxu0 %v2514
  %2516 = vmatprep.subr.mxu0 0.0
  %2517 = vmatpush1.msra.mxu0 0.0
  %2518 = vmatprep.subr.mxu0 0.0
  %2519 = vmatpush1.msra.mxu0 0.0
  %2520 = vmatprep.subr.mxu0 0.0
  %2521 = vmatpush1.msra.mxu0 0.0
  %2522 = vmatprep.subr.mxu0 0.0
  %2523 = vmatpush1.msra.mxu0 0.0
  %2524 = vmatprep.subr.mxu0 0.0
  %2525 = vmatpush1.msra.mxu0 0.0
  %2526 = vmatprep.subr.mxu0 0.0
  %2527 = vmatpush1.msra.mxu0 0.0
  %2528 = vmatprep.subr.mxu0 0.0
  %2529 = vmatpush1.msra.mxu0 0.0
  %2530 = vmatprep.subr.mxu0 0.0
  %2531 = vmatpush1.msra.mxu0 0.0
  %2532 = vmatprep.subr.mxu0 0.0
  %2533 = vmatpush1.msra.mxu0 0.0
  %2534 = vmatprep.subr.mxu0 0.0
  %2535 = vmatpush1.msra.mxu0 0.0
  %2536 = vmatprep.subr.mxu0 0.0
  %2537 = vmatpush1.msra.mxu0 0.0
  %2538 = vmatprep.subr.mxu0 0.0
  %2539 = vmatpush1.msra.mxu0 0.0
  %2540 = vmatprep.subr.mxu0 0.0
  %2541 = vmatpush1.msra.mxu0 0.0
  %2542 = vmatprep.subr.mxu0 0.0
  %2543 = vmatpush1.msra.mxu0 0.0
  %2544 = vmatprep.subr.mxu0 0.0
  %2545 = vmatpush1.msra.mxu0 0.0
  %2546 = vmatprep.subr.mxu0 0.0
  %2547 = vmatpush1.msra.mxu0 0.0
  %2548 = vmatprep.subr.mxu0 0.0
  %2549 = vmatpush1.msra.mxu0 0.0
  %2550 = vmatprep.subr.mxu0 0.0
  %2551 = vmatpush1.msra.mxu0 0.0
  %2552 = vmatprep.subr.mxu0 0.0
  %2553 = vmatpush1.msra.mxu0 0.0
  %2554 = vmatprep.subr.mxu0 0.0
  %2555 = vmatpush1.msra.mxu0 0.0
  %2556 = vmatprep.subr.mxu0 0.0
  %2557 = vmatpush1.msra.mxu0 0.0
  %2558 = vmatprep.subr.mxu0 0.0
  %2559 = vmatpush1.msra.mxu0 0.0
  %2560 = vmatprep.subr.mxu0 0.0
  %2561 = vmatpush1.msra.mxu0 0.0
  %2562 = vmatprep.subr.mxu0 0.0
  %2563 = vmatpush1.msra.mxu0 0.0
  %2564 = vmatprep.subr.mxu0 0.0
  %2565 = vmatpush1.msra.mxu0 0.0
  %2566 = vmatprep.subr.mxu0 0.0
  %2567 = vmatpush1.msra.mxu0 0.0
  %2568 = vmatprep.subr.mxu0 0.0
  %2569 = vmatpush1.msra.mxu0 0.0
  %2570 = vmatprep.subr.mxu0 0.0
  %2571 = vmatpush1.msra.mxu0 0.0
  %2572 = vmatprep.subr.mxu0 0.0
  %2573 = vmatpush1.msra.mxu0 0.0
  %2574 = vmatprep.subr.mxu0 0.0
  %2575 = vmatpush1.msra.mxu0 0.0
  %2576 = vmatprep.subr.mxu0 0.0
  %2577 = vmatpush1.msra.mxu0 0.0
  %2578 = vmatprep.mubr.f32.mxu0 0.0
  %v2579 = vand.u32 %v2431, 4294901760
  %2580 = vmatmul.mubr.f32.gmra.mrb[0].mxu0 %v2579
  %v2581 = vpop.f32.mrb[0].mxu0
  %v2582 = vadd.f32 %v2506, %v2581
  %v2583 = vpop.f32.mrb[0].mxu0
  %2584 = vdwg.mxu0
  %2585 = vmatprep.subr.mxu0 0.0
  %v2586 = vand.u32 %v2424, 4294901760
  %v2587 = vsub.f32 %v2424, %v2586
  %2588 = vmatpush1.msra.mxu0 %v2587
  %2589 = vmatprep.subr.mxu0 0.0
  %2590 = vmatpush1.msra.mxu0 0.0
  %2591 = vmatprep.subr.mxu0 0.0
  %2592 = vmatpush1.msra.mxu0 0.0
  %2593 = vmatprep.subr.mxu0 0.0
  %2594 = vmatpush1.msra.mxu0 0.0
  %2595 = vmatprep.subr.mxu0 0.0
  %2596 = vmatpush1.msra.mxu0 0.0
  %2597 = vmatprep.subr.mxu0 0.0
  %2598 = vmatpush1.msra.mxu0 0.0
  %2599 = vmatprep.subr.mxu0 0.0
  %2600 = vmatpush1.msra.mxu0 0.0
  %2601 = vmatprep.subr.mxu0 0.0
  %2602 = vmatpush1.msra.mxu0 0.0
  %2603 = vmatprep.subr.mxu0 0.0
  %2604 = vmatpush1.msra.mxu0 0.0
  %2605 = vmatprep.subr.mxu0 0.0
  %2606 = vmatpush1.msra.mxu0 0.0
  %2607 = vmatprep.subr.mxu0 0.0
  %2608 = vmatpush1.msra.mxu0 0.0
  %2609 = vmatprep.subr.mxu0 0.0
  %2610 = vmatpush1.msra.mxu0 0.0
  %2611 = vmatprep.subr.mxu0 0.0
  %2612 = vmatpush1.msra.mxu0 0.0
  %2613 = vmatprep.subr.mxu0 0.0
  %2614 = vmatpush1.msra.mxu0 0.0
  %2615 = vmatprep.subr.mxu0 0.0
  %2616 = vmatpush1.msra.mxu0 0.0
  %2617 = vmatprep.subr.mxu0 0.0
  %2618 = vmatpush1.msra.mxu0 0.0
  %2619 = vmatprep.subr.mxu0 0.0
  %2620 = vmatpush1.msra.mxu0 0.0
  %2621 = vmatprep.subr.mxu0 0.0
  %2622 = vmatpush1.msra.mxu0 0.0
  %2623 = vmatprep.subr.mxu0 0.0
  %2624 = vmatpush1.msra.mxu0 0.0
  %2625 = vmatprep.subr.mxu0 0.0
  %2626 = vmatpush1.msra.mxu0 0.0
  %2627 = vmatprep.subr.mxu0 0.0
  %2628 = vmatpush1.msra.mxu0 0.0
  %2629 = vmatprep.subr.mxu0 0.0
  %2630 = vmatpush1.msra.mxu0 0.0
  %2631 = vmatprep.subr.mxu0 0.0
  %2632 = vmatpush1.msra.mxu0 0.0
  %2633 = vmatprep.subr.mxu0 0.0
  %2634 = vmatpush1.msra.mxu0 0.0
  %2635 = vmatprep.subr.mxu0 0.0
  %2636 = vmatpush1.msra.mxu0 0.0
  %2637 = vmatprep.subr.mxu0 0.0
  %2638 = vmatpush1.msra.mxu0 0.0
  %2639 = vmatprep.subr.mxu0 0.0
  %2640 = vmatpush1.msra.mxu0 0.0
  %2641 = vmatprep.subr.mxu0 0.0
  %2642 = vmatpush1.msra.mxu0 0.0
  %2643 = vmatprep.subr.mxu0 0.0
  %2644 = vmatpush1.msra.mxu0 0.0
  %2645 = vmatprep.subr.mxu0 0.0
  %2646 = vmatpush1.msra.mxu0 0.0
  %2647 = vmatprep.subr.mxu0 0.0
  %2648 = vmatpush1.msra.mxu0 0.0
  %2649 = vmatprep.subr.mxu0 0.0
  %2650 = vmatpush1.msra.mxu0 0.0
  %2651 = vmatprep.mubr.f32.mxu0 0.0
  %v2652 = vand.u32 %v2431, 4294901760
  %v2653 = vsub.f32 %v2431, %v2652
  %2654 = vmatmul.mubr.f32.gmra.mrb[0].mxu0 %v2653
  %v2655 = vpop.f32.mrb[0].mxu0
  %v2656 = vadd.f32 %v2582, %v2655
  %v2657 = vpop.f32.mrb[0].mxu0
  %2658 = vdwg.mxu0
  %2659 = vmatprep.subr.mxu0 0.0
  %v2660 = vand.u32 %v2424, 4294901760
  %2661 = vmatpush1.msra.mxu0 %v2660
  %2662 = vmatprep.subr.mxu0 0.0
  %2663 = vmatpush1.msra.mxu0 0.0
  %2664 = vmatprep.subr.mxu0 0.0
  %2665 = vmatpush1.msra.mxu0 0.0
  %2666 = vmatprep.subr.mxu0 0.0
  %2667 = vmatpush1.msra.mxu0 0.0
  %2668 = vmatprep.subr.mxu0 0.0
  %2669 = vmatpush1.msra.mxu0 0.0
  %2670 = vmatprep.subr.mxu0 0.0
  %2671 = vmatpush1.msra.mxu0 0.0
  %2672 = vmatprep.subr.mxu0 0.0
  %2673 = vmatpush1.msra.mxu0 0.0
  %2674 = vmatprep.subr.mxu0 0.0
  %2675 = vmatpush1.msra.mxu0 0.0
  %2676 = vmatprep.subr.mxu0 0.0
  %2677 = vmatpush1.msra.mxu0 0.0
  %2678 = vmatprep.subr.mxu0 0.0
  %2679 = vmatpush1.msra.mxu0 0.0
  %2680 = vmatprep.subr.mxu0 0.0
  %2681 = vmatpush1.msra.mxu0 0.0
  %2682 = vmatprep.subr.mxu0 0.0
  %2683 = vmatpush1.msra.mxu0 0.0
  %2684 = vmatprep.subr.mxu0 0.0
  %2685 = vmatpush1.msra.mxu0 0.0
  %2686 = vmatprep.subr.mxu0 0.0
  %2687 = vmatpush1.msra.mxu0 0.0
  %2688 = vmatprep.subr.mxu0 0.0
  %2689 = vmatpush1.msra.mxu0 0.0
  %2690 = vmatprep.subr.mxu0 0.0
  %2691 = vmatpush1.msra.mxu0 0.0
  %2692 = vmatprep.subr.mxu0 0.0
  %2693 = vmatpush1.msra.mxu0 0.0
  %2694 = vmatprep.subr.mxu0 0.0
  %2695 = vmatpush1.msra.mxu0 0.0
  %2696 = vmatprep.subr.mxu0 0.0
  %2697 = vmatpush1.msra.mxu0 0.0
  %2698 = vmatprep.subr.mxu0 0.0
  %2699 = vmatpush1.msra.mxu0 0.0
  %2700 = vmatprep.subr.mxu0 0.0
  %2701 = vmatpush1.msra.mxu0 0.0
  %2702 = vmatprep.subr.mxu0 0.0
  %2703 = vmatpush1.msra.mxu0 0.0
  %2704 = vmatprep.subr.mxu0 0.0
  %2705 = vmatpush1.msra.mxu0 0.0
  %2706 = vmatprep.subr.mxu0 0.0
  %2707 = vmatpush1.msra.mxu0 0.0
  %2708 = vmatprep.subr.mxu0 0.0
  %2709 = vmatpush1.msra.mxu0 0.0
  %2710 = vmatprep.subr.mxu0 0.0
  %2711 = vmatpush1.msra.mxu0 0.0
  %2712 = vmatprep.subr.mxu0 0.0
  %2713 = vmatpush1.msra.mxu0 0.0
  %2714 = vmatprep.subr.mxu0 0.0
  %2715 = vmatpush1.msra.mxu0 0.0
  %2716 = vmatprep.subr.mxu0 0.0
  %2717 = vmatpush1.msra.mxu0 0.0
  %2718 = vmatprep.subr.mxu0 0.0
  %2719 = vmatpush1.msra.mxu0 0.0
  %2720 = vmatprep.subr.mxu0 0.0
  %2721 = vmatpush1.msra.mxu0 0.0
  %2722 = vmatprep.subr.mxu0 0.0
  %2723 = vmatpush1.msra.mxu0 0.0
  %2724 = vmatprep.mubr.f32.mxu0 0.0
  %v2725 = vand.u32 %v2431, 4294901760
  %v2726 = vsub.f32 %v2431, %v2725
  %v2727 = vand.u32 %v2726, 4294901760
  %2728 = vmatmul.mubr.f32.gmra.mrb[0].mxu0 %v2727
  %v2729 = vpop.f32.mrb[0].mxu0
  %v2730 = vadd.f32 %v2656, %v2729
  %v2731 = vpop.f32.mrb[0].mxu0
  %2732 = vdwg.mxu0
  %2733 = vmatprep.subr.mxu0 0.0
  %v2734 = vand.u32 %v2424, 4294901760
  %v2735 = vsub.f32 %v2424, %v2734
  %v2736 = vand.u32 %v2735, 4294901760
  %2737 = vmatpush1.msra.mxu0 %v2736
  %2738 = vmatprep.subr.mxu0 0.0
  %2739 = vmatpush1.msra.mxu0 0.0
  %2740 = vmatprep.subr.mxu0 0.0
  %2741 = vmatpush1.msra.mxu0 0.0
  %2742 = vmatprep.subr.mxu0 0.0
  %2743 = vmatpush1.msra.mxu0 0.0
  %2744 = vmatprep.subr.mxu0 0.0
  %2745 = vmatpush1.msra.mxu0 0.0
  %2746 = vmatprep.subr.mxu0 0.0
  %2747 = vmatpush1.msra.mxu0 0.0
  %2748 = vmatprep.subr.mxu0 0.0
  %2749 = vmatpush1.msra.mxu0 0.0
  %2750 = vmatprep.subr.mxu0 0.0
  %2751 = vmatpush1.msra.mxu0 0.0
  %2752 = vmatprep.subr.mxu0 0.0
  %2753 = vmatpush1.msra.mxu0 0.0
  %2754 = vmatprep.subr.mxu0 0.0
  %2755 = vmatpush1.msra.mxu0 0.0
  %2756 = vmatprep.subr.mxu0 0.0
  %2757 = vmatpush1.msra.mxu0 0.0
  %2758 = vmatprep.subr.mxu0 0.0
  %2759 = vmatpush1.msra.mxu0 0.0
  %2760 = vmatprep.subr.mxu0 0.0
  %2761 = vmatpush1.msra.mxu0 0.0
  %2762 = vmatprep.subr.mxu0 0.0
  %2763 = vmatpush1.msra.mxu0 0.0
  %2764 = vmatprep.subr.mxu0 0.0
  %2765 = vmatpush1.msra.mxu0 0.0
  %2766 = vmatprep.subr.mxu0 0.0
  %2767 = vmatpush1.msra.mxu0 0.0
  %2768 = vmatprep.subr.mxu0 0.0
  %2769 = vmatpush1.msra.mxu0 0.0
  %2770 = vmatprep.subr.mxu0 0.0
  %2771 = vmatpush1.msra.mxu0 0.0
  %2772 = vmatprep.subr.mxu0 0.0
  %2773 = vmatpush1.msra.mxu0 0.0
  %2774 = vmatprep.subr.mxu0 0.0
  %2775 = vmatpush1.msra.mxu0 0.0
  %2776 = vmatprep.subr.mxu0 0.0
  %2777 = vmatpush1.msra.mxu0 0.0
  %2778 = vmatprep.subr.mxu0 0.0
  %2779 = vmatpush1.msra.mxu0 0.0
  %2780 = vmatprep.subr.mxu0 0.0
  %2781 = vmatpush1.msra.mxu0 0.0
  %2782 = vmatprep.subr.mxu0 0.0
  %2783 = vmatpush1.msra.mxu0 0.0
  %2784 = vmatprep.subr.mxu0 0.0
  %2785 = vmatpush1.msra.mxu0 0.0
  %2786 = vmatprep.subr.mxu0 0.0
  %2787 = vmatpush1.msra.mxu0 0.0
  %2788 = vmatprep.subr.mxu0 0.0
  %2789 = vmatpush1.msra.mxu0 0.0
  %2790 = vmatprep.subr.mxu0 0.0
  %2791 = vmatpush1.msra.mxu0 0.0
  %2792 = vmatprep.subr.mxu0 0.0
  %2793 = vmatpush1.msra.mxu0 0.0
  %2794 = vmatprep.subr.mxu0 0.0
  %2795 = vmatpush1.msra.mxu0 0.0
  %2796 = vmatprep.subr.mxu0 0.0
  %2797 = vmatpush1.msra.mxu0 0.0
  %2798 = vmatprep.subr.mxu0 0.0
  %2799 = vmatpush1.msra.mxu0 0.0
  %2800 = vmatprep.mubr.f32.mxu0 0.0
  %v2801 = vand.u32 %v2431, 4294901760
  %2802 = vmatmul.mubr.f32.gmra.mrb[0].mxu0 %v2801
  %v2803 = vpop.f32.mrb[0].mxu0
  %v2804 = vadd.f32 %v2730, %v2803
  %v2805 = vpop.f32.mrb[0].mxu0
  %2806 = vdwg.mxu0
  %2807 = vmatprep.subr.mxu0 0.0
  %v2808 = vand.u32 %v2424, 4294901760
  %2809 = vmatpush1.msra.mxu0 %v2808
  %2810 = vmatprep.subr.mxu0 0.0
  %2811 = vmatpush1.msra.mxu0 0.0
  %2812 = vmatprep.subr.mxu0 0.0
  %2813 = vmatpush1.msra.mxu0 0.0
  %2814 = vmatprep.subr.mxu0 0.0
  %2815 = vmatpush1.msra.mxu0 0.0
  %2816 = vmatprep.subr.mxu0 0.0
  %2817 = vmatpush1.msra.mxu0 0.0
  %2818 = vmatprep.subr.mxu0 0.0
  %2819 = vmatpush1.msra.mxu0 0.0
  %2820 = vmatprep.subr.mxu0 0.0
  %2821 = vmatpush1.msra.mxu0 0.0
  %2822 = vmatprep.subr.mxu0 0.0
  %2823 = vmatpush1.msra.mxu0 0.0
  %2824 = vmatprep.subr.mxu0 0.0
  %2825 = vmatpush1.msra.mxu0 0.0
  %2826 = vmatprep.subr.mxu0 0.0
  %2827 = vmatpush1.msra.mxu0 0.0
  %2828 = vmatprep.subr.mxu0 0.0
  %2829 = vmatpush1.msra.mxu0 0.0
  %2830 = vmatprep.subr.mxu0 0.0
  %2831 = vmatpush1.msra.mxu0 0.0
  %2832 = vmatprep.subr.mxu0 0.0
  %2833 = vmatpush1.msra.mxu0 0.0
  %2834 = vmatprep.subr.mxu0 0.0
  %2835 = vmatpush1.msra.mxu0 0.0
  %2836 = vmatprep.subr.mxu0 0.0
  %2837 = vmatpush1.msra.mxu0 0.0
  %2838 = vmatprep.subr.mxu0 0.0
  %2839 = vmatpush1.msra.mxu0 0.0
  %2840 = vmatprep.subr.mxu0 0.0
  %2841 = vmatpush1.msra.mxu0 0.0
  %2842 = vmatprep.subr.mxu0 0.0
  %2843 = vmatpush1.msra.mxu0 0.0
  %2844 = vmatprep.subr.mxu0 0.0
  %2845 = vmatpush1.msra.mxu0 0.0
  %2846 = vmatprep.subr.mxu0 0.0
  %2847 = vmatpush1.msra.mxu0 0.0
  %2848 = vmatprep.subr.mxu0 0.0
  %2849 = vmatpush1.msra.mxu0 0.0
  %2850 = vmatprep.subr.mxu0 0.0
  %2851 = vmatpush1.msra.mxu0 0.0
  %2852 = vmatprep.subr.mxu0 0.0
  %2853 = vmatpush1.msra.mxu0 0.0
  %2854 = vmatprep.subr.mxu0 0.0
  %2855 = vmatpush1.msra.mxu0 0.0
  %2856 = vmatprep.subr.mxu0 0.0
  %2857 = vmatpush1.msra.mxu0 0.0
  %2858 = vmatprep.subr.mxu0 0.0
  %2859 = vmatpush1.msra.mxu0 0.0
  %2860 = vmatprep.subr.mxu0 0.0
  %2861 = vmatpush1.msra.mxu0 0.0
  %2862 = vmatprep.subr.mxu0 0.0
  %2863 = vmatpush1.msra.mxu0 0.0
  %2864 = vmatprep.subr.mxu0 0.0
  %2865 = vmatpush1.msra.mxu0 0.0
  %2866 = vmatprep.subr.mxu0 0.0
  %2867 = vmatpush1.msra.mxu0 0.0
  %2868 = vmatprep.subr.mxu0 0.0
  %2869 = vmatpush1.msra.mxu0 0.0
  %2870 = vmatprep.subr.mxu0 0.0
  %2871 = vmatpush1.msra.mxu0 0.0
  %2872 = vmatprep.mubr.f32.mxu0 0.0
  %v2873 = vand.u32 %v2431, 4294901760
  %2874 = vmatmul.mubr.f32.gmra.mrb[0].mxu0 %v2873
  %v2875 = vpop.f32.mrb[0].mxu0
  %v2876 = vadd.f32 %v2804, %v2875
  %v2877 = vpop.f32.mrb[0].mxu0
  %2878 = vdwg.mxu0
  %v2880 = vsel %vm55, %v2427, 0
  %2882 = vmatprep.subr.mxu0 0.0
  %v2883 = vand.u32 %v38, 4294901760
  %2884 = vmatpush1.msra.mxu0 %v2883
  %2885 = vmatprep.subr.mxu0 0.0
  %v2886 = vand.u32 %v39, 4294901760
  %2887 = vmatpush1.msra.mxu0 %v2886
  %2888 = vmatprep.subr.mxu0 0.0
  %2889 = vmatpush1.msra.mxu0 0.0
  %2890 = vmatprep.subr.mxu0 0.0
  %2891 = vmatpush1.msra.mxu0 0.0
  %2892 = vmatprep.subr.mxu0 0.0
  %2893 = vmatpush1.msra.mxu0 0.0
  %2894 = vmatprep.subr.mxu0 0.0
  %2895 = vmatpush1.msra.mxu0 0.0
  %2896 = vmatprep.subr.mxu0 0.0
  %2897 = vmatpush1.msra.mxu0 0.0
  %2898 = vmatprep.subr.mxu0 0.0
  %2899 = vmatpush1.msra.mxu0 0.0
  %2900 = vmatprep.subr.mxu0 0.0
  %2901 = vmatpush1.msra.mxu0 0.0
  %2902 = vmatprep.subr.mxu0 0.0
  %2903 = vmatpush1.msra.mxu0 0.0
  %2904 = vmatprep.subr.mxu0 0.0
  %2905 = vmatpush1.msra.mxu0 0.0
  %2906 = vmatprep.subr.mxu0 0.0
  %2907 = vmatpush1.msra.mxu0 0.0
  %2908 = vmatprep.subr.mxu0 0.0
  %2909 = vmatpush1.msra.mxu0 0.0
  %2910 = vmatprep.subr.mxu0 0.0
  %2911 = vmatpush1.msra.mxu0 0.0
  %2912 = vmatprep.subr.mxu0 0.0
  %2913 = vmatpush1.msra.mxu0 0.0
  %2914 = vmatprep.subr.mxu0 0.0
  %2915 = vmatpush1.msra.mxu0 0.0
  %2916 = vmatprep.subr.mxu0 0.0
  %2917 = vmatpush1.msra.mxu0 0.0
  %2918 = vmatprep.subr.mxu0 0.0
  %2919 = vmatpush1.msra.mxu0 0.0
  %2920 = vmatprep.subr.mxu0 0.0
  %2921 = vmatpush1.msra.mxu0 0.0
  %2922 = vmatprep.subr.mxu0 0.0
  %2923 = vmatpush1.msra.mxu0 0.0
  %2924 = vmatprep.subr.mxu0 0.0
  %2925 = vmatpush1.msra.mxu0 0.0
  %2926 = vmatprep.subr.mxu0 0.0
  %2927 = vmatpush1.msra.mxu0 0.0
  %2928 = vmatprep.subr.mxu0 0.0
  %2929 = vmatpush1.msra.mxu0 0.0
  %2930 = vmatprep.subr.mxu0 0.0
  %2931 = vmatpush1.msra.mxu0 0.0
  %2932 = vmatprep.subr.mxu0 0.0
  %2933 = vmatpush1.msra.mxu0 0.0
  %2934 = vmatprep.subr.mxu0 0.0
  %2935 = vmatpush1.msra.mxu0 0.0
  %2936 = vmatprep.subr.mxu0 0.0
  %2937 = vmatpush1.msra.mxu0 0.0
  %2938 = vmatprep.subr.mxu0 0.0
  %2939 = vmatpush1.msra.mxu0 0.0
  %2940 = vmatprep.subr.mxu0 0.0
  %2941 = vmatpush1.msra.mxu0 0.0
  %2942 = vmatprep.subr.mxu0 0.0
  %2943 = vmatpush1.msra.mxu0 0.0
  %2944 = vmatprep.subr.mxu0 0.0
  %2945 = vmatpush1.msra.mxu0 0.0
  %2946 = vmatprep.subr.mxu0 0.0
  %2947 = vmatpush1.msra.mxu0 0.0
  %2948 = vmatprep.mubr.f32.mxu0 0.0
  %v2949 = vand.u32 %v2880, 4294901760
  %v2950 = vsub.f32 %v2880, %v2949
  %v2951 = vand.u32 %v2950, 4294901760
  %v2952 = vsub.f32 %v2950, %v2951
  %v2953 = vand.u32 %v2952, 4294901760
  %2954 = vmatmul.mubr.f32.gmra.mrb[0].mxu0 %v2953
  %v2955 = vpop.f32.mrb[0].mxu0
  %v2956 = vadd.f32 %v2876, %v2955
  %v2957 = vpop.f32.mrb[0].mxu0
  %2958 = vdwg.mxu0
  %2959 = vmatprep.subr.mxu0 0.0
  %v2960 = vand.u32 %v38, 4294901760
  %v2961 = vsub.f32 %v38, %v2960
  %v2962 = vand.u32 %v2961, 4294901760
  %v2963 = vsub.f32 %v2961, %v2962
  %v2964 = vand.u32 %v2963, 4294901760
  %2965 = vmatpush1.msra.mxu0 %v2964
  %2966 = vmatprep.subr.mxu0 0.0
  %v2967 = vand.u32 %v39, 4294901760
  %v2968 = vsub.f32 %v39, %v2967
  %v2969 = vand.u32 %v2968, 4294901760
  %v2970 = vsub.f32 %v2968, %v2969
  %v2971 = vand.u32 %v2970, 4294901760
  %2972 = vmatpush1.msra.mxu0 %v2971
  %2973 = vmatprep.subr.mxu0 0.0
  %2974 = vmatpush1.msra.mxu0 0.0
  %2975 = vmatprep.subr.mxu0 0.0
  %2976 = vmatpush1.msra.mxu0 0.0
  %2977 = vmatprep.subr.mxu0 0.0
  %2978 = vmatpush1.msra.mxu0 0.0
  %2979 = vmatprep.subr.mxu0 0.0
  %2980 = vmatpush1.msra.mxu0 0.0
  %2981 = vmatprep.subr.mxu0 0.0
  %2982 = vmatpush1.msra.mxu0 0.0
  %2983 = vmatprep.subr.mxu0 0.0
  %2984 = vmatpush1.msra.mxu0 0.0
  %2985 = vmatprep.subr.mxu0 0.0
  %2986 = vmatpush1.msra.mxu0 0.0
  %2987 = vmatprep.subr.mxu0 0.0
  %2988 = vmatpush1.msra.mxu0 0.0
  %2989 = vmatprep.subr.mxu0 0.0
  %2990 = vmatpush1.msra.mxu0 0.0
  %2991 = vmatprep.subr.mxu0 0.0
  %2992 = vmatpush1.msra.mxu0 0.0
  %2993 = vmatprep.subr.mxu0 0.0
  %2994 = vmatpush1.msra.mxu0 0.0
  %2995 = vmatprep.subr.mxu0 0.0
  %2996 = vmatpush1.msra.mxu0 0.0
  %2997 = vmatprep.subr.mxu0 0.0
  %2998 = vmatpush1.msra.mxu0 0.0
  %2999 = vmatprep.subr.mxu0 0.0
  %3000 = vmatpush1.msra.mxu0 0.0
  %3001 = vmatprep.subr.mxu0 0.0
  %3002 = vmatpush1.msra.mxu0 0.0
  %3003 = vmatprep.subr.mxu0 0.0
  %3004 = vmatpush1.msra.mxu0 0.0
  %3005 = vmatprep.subr.mxu0 0.0
  %3006 = vmatpush1.msra.mxu0 0.0
  %3007 = vmatprep.subr.mxu0 0.0
  %3008 = vmatpush1.msra.mxu0 0.0
  %3009 = vmatprep.subr.mxu0 0.0
  %3010 = vmatpush1.msra.mxu0 0.0
  %3011 = vmatprep.subr.mxu0 0.0
  %3012 = vmatpush1.msra.mxu0 0.0
  %3013 = vmatprep.subr.mxu0 0.0
  %3014 = vmatpush1.msra.mxu0 0.0
  %3015 = vmatprep.subr.mxu0 0.0
  %3016 = vmatpush1.msra.mxu0 0.0
  %3017 = vmatprep.subr.mxu0 0.0
  %3018 = vmatpush1.msra.mxu0 0.0
  %3019 = vmatprep.subr.mxu0 0.0
  %3020 = vmatpush1.msra.mxu0 0.0
  %3021 = vmatprep.subr.mxu0 0.0
  %3022 = vmatpush1.msra.mxu0 0.0
  %3023 = vmatprep.subr.mxu0 0.0
  %3024 = vmatpush1.msra.mxu0 0.0
  %3025 = vmatprep.subr.mxu0 0.0
  %3026 = vmatpush1.msra.mxu0 0.0
  %3027 = vmatprep.subr.mxu0 0.0
  %3028 = vmatpush1.msra.mxu0 0.0
  %3029 = vmatprep.subr.mxu0 0.0
  %3030 = vmatpush1.msra.mxu0 0.0
  %3031 = vmatprep.subr.mxu0 0.0
  %3032 = vmatpush1.msra.mxu0 0.0
  %3033 = vmatprep.mubr.f32.mxu0 0.0
  %v3034 = vand.u32 %v2880, 4294901760
  %3035 = vmatmul.mubr.f32.gmra.mrb[0].mxu0 %v3034
  %v3036 = vpop.f32.mrb[0].mxu0
  %v3037 = vadd.f32 %v2956, %v3036
  %v3038 = vpop.f32.mrb[0].mxu0
  %3039 = vdwg.mxu0
  %3040 = vmatprep.subr.mxu0 0.0
  %v3041 = vand.u32 %v38, 4294901760
  %v3042 = vsub.f32 %v38, %v3041
  %3043 = vmatpush1.msra.mxu0 %v3042
  %3044 = vmatprep.subr.mxu0 0.0
  %v3045 = vand.u32 %v39, 4294901760
  %v3046 = vsub.f32 %v39, %v3045
  %3047 = vmatpush1.msra.mxu0 %v3046
  %3048 = vmatprep.subr.mxu0 0.0
  %3049 = vmatpush1.msra.mxu0 0.0
  %3050 = vmatprep.subr.mxu0 0.0
  %3051 = vmatpush1.msra.mxu0 0.0
  %3052 = vmatprep.subr.mxu0 0.0
  %3053 = vmatpush1.msra.mxu0 0.0
  %3054 = vmatprep.subr.mxu0 0.0
  %3055 = vmatpush1.msra.mxu0 0.0
  %3056 = vmatprep.subr.mxu0 0.0
  %3057 = vmatpush1.msra.mxu0 0.0
  %3058 = vmatprep.subr.mxu0 0.0
  %3059 = vmatpush1.msra.mxu0 0.0
  %3060 = vmatprep.subr.mxu0 0.0
  %3061 = vmatpush1.msra.mxu0 0.0
  %3062 = vmatprep.subr.mxu0 0.0
  %3063 = vmatpush1.msra.mxu0 0.0
  %3064 = vmatprep.subr.mxu0 0.0
  %3065 = vmatpush1.msra.mxu0 0.0
  %3066 = vmatprep.subr.mxu0 0.0
  %3067 = vmatpush1.msra.mxu0 0.0
  %3068 = vmatprep.subr.mxu0 0.0
  %3069 = vmatpush1.msra.mxu0 0.0
  %3070 = vmatprep.subr.mxu0 0.0
  %3071 = vmatpush1.msra.mxu0 0.0
  %3072 = vmatprep.subr.mxu0 0.0
  %3073 = vmatpush1.msra.mxu0 0.0
  %3074 = vmatprep.subr.mxu0 0.0
  %3075 = vmatpush1.msra.mxu0 0.0
  %3076 = vmatprep.subr.mxu0 0.0
  %3077 = vmatpush1.msra.mxu0 0.0
  %3078 = vmatprep.subr.mxu0 0.0
  %3079 = vmatpush1.msra.mxu0 0.0
  %3080 = vmatprep.subr.mxu0 0.0
  %3081 = vmatpush1.msra.mxu0 0.0
  %3082 = vmatprep.subr.mxu0 0.0
  %3083 = vmatpush1.msra.mxu0 0.0
  %3084 = vmatprep.subr.mxu0 0.0
  %3085 = vmatpush1.msra.mxu0 0.0
  %3086 = vmatprep.subr.mxu0 0.0
  %3087 = vmatpush1.msra.mxu0 0.0
  %3088 = vmatprep.subr.mxu0 0.0
  %3089 = vmatpush1.msra.mxu0 0.0
  %3090 = vmatprep.subr.mxu0 0.0
  %3091 = vmatpush1.msra.mxu0 0.0
  %3092 = vmatprep.subr.mxu0 0.0
  %3093 = vmatpush1.msra.mxu0 0.0
  %3094 = vmatprep.subr.mxu0 0.0
  %3095 = vmatpush1.msra.mxu0 0.0
  %3096 = vmatprep.subr.mxu0 0.0
  %3097 = vmatpush1.msra.mxu0 0.0
  %3098 = vmatprep.subr.mxu0 0.0
  %3099 = vmatpush1.msra.mxu0 0.0
  %3100 = vmatprep.subr.mxu0 0.0
  %3101 = vmatpush1.msra.mxu0 0.0
  %3102 = vmatprep.subr.mxu0 0.0
  %3103 = vmatpush1.msra.mxu0 0.0
  %3104 = vmatprep.subr.mxu0 0.0
  %3105 = vmatpush1.msra.mxu0 0.0
  %3106 = vmatprep.subr.mxu0 0.0
  %3107 = vmatpush1.msra.mxu0 0.0
  %3108 = vmatprep.mubr.f32.mxu0 0.0
  %v3109 = vand.u32 %v2880, 4294901760
  %v3110 = vsub.f32 %v2880, %v3109
  %3111 = vmatmul.mubr.f32.gmra.mrb[0].mxu0 %v3110
  %v3112 = vpop.f32.mrb[0].mxu0
  %v3113 = vadd.f32 %v3037, %v3112
  %v3114 = vpop.f32.mrb[0].mxu0
  %3115 = vdwg.mxu0
  %3116 = vmatprep.subr.mxu0 0.0
  %v3117 = vand.u32 %v38, 4294901760
  %3118 = vmatpush1.msra.mxu0 %v3117
  %3119 = vmatprep.subr.mxu0 0.0
  %v3120 = vand.u32 %v39, 4294901760
  %3121 = vmatpush1.msra.mxu0 %v3120
  %3122 = vmatprep.subr.mxu0 0.0
  %3123 = vmatpush1.msra.mxu0 0.0
  %3124 = vmatprep.subr.mxu0 0.0
  %3125 = vmatpush1.msra.mxu0 0.0
  %3126 = vmatprep.subr.mxu0 0.0
  %3127 = vmatpush1.msra.mxu0 0.0
  %3128 = vmatprep.subr.mxu0 0.0
  %3129 = vmatpush1.msra.mxu0 0.0
  %3130 = vmatprep.subr.mxu0 0.0
  %3131 = vmatpush1.msra.mxu0 0.0
  %3132 = vmatprep.subr.mxu0 0.0
  %3133 = vmatpush1.msra.mxu0 0.0
  %3134 = vmatprep.subr.mxu0 0.0
  %3135 = vmatpush1.msra.mxu0 0.0
  %3136 = vmatprep.subr.mxu0 0.0
  %3137 = vmatpush1.msra.mxu0 0.0
  %3138 = vmatprep.subr.mxu0 0.0
  %3139 = vmatpush1.msra.mxu0 0.0
  %3140 = vmatprep.subr.mxu0 0.0
  %3141 = vmatpush1.msra.mxu0 0.0
  %3142 = vmatprep.subr.mxu0 0.0
  %3143 = vmatpush1.msra.mxu0 0.0
  %3144 = vmatprep.subr.mxu0 0.0
  %3145 = vmatpush1.msra.mxu0 0.0
  %3146 = vmatprep.subr.mxu0 0.0
  %3147 = vmatpush1.msra.mxu0 0.0
  %3148 = vmatprep.subr.mxu0 0.0
  %3149 = vmatpush1.msra.mxu0 0.0
  %3150 = vmatprep.subr.mxu0 0.0
  %3151 = vmatpush1.msra.mxu0 0.0
  %3152 = vmatprep.subr.mxu0 0.0
  %3153 = vmatpush1.msra.mxu0 0.0
  %3154 = vmatprep.subr.mxu0 0.0
  %3155 = vmatpush1.msra.mxu0 0.0
  %3156 = vmatprep.subr.mxu0 0.0
  %3157 = vmatpush1.msra.mxu0 0.0
  %3158 = vmatprep.subr.mxu0 0.0
  %3159 = vmatpush1.msra.mxu0 0.0
  %3160 = vmatprep.subr.mxu0 0.0
  %3161 = vmatpush1.msra.mxu0 0.0
  %3162 = vmatprep.subr.mxu0 0.0
  %3163 = vmatpush1.msra.mxu0 0.0
  %3164 = vmatprep.subr.mxu0 0.0
  %3165 = vmatpush1.msra.mxu0 0.0
  %3166 = vmatprep.subr.mxu0 0.0
  %3167 = vmatpush1.msra.mxu0 0.0
  %3168 = vmatprep.subr.mxu0 0.0
  %3169 = vmatpush1.msra.mxu0 0.0
  %3170 = vmatprep.subr.mxu0 0.0
  %3171 = vmatpush1.msra.mxu0 0.0
  %3172 = vmatprep.subr.mxu0 0.0
  %3173 = vmatpush1.msra.mxu0 0.0
  %3174 = vmatprep.subr.mxu0 0.0
  %3175 = vmatpush1.msra.mxu0 0.0
  %3176 = vmatprep.subr.mxu0 0.0
  %3177 = vmatpush1.msra.mxu0 0.0
  %3178 = vmatprep.subr.mxu0 0.0
  %3179 = vmatpush1.msra.mxu0 0.0
  %3180 = vmatprep.subr.mxu0 0.0
  %3181 = vmatpush1.msra.mxu0 0.0
  %3182 = vmatprep.mubr.f32.mxu0 0.0
  %v3183 = vand.u32 %v2880, 4294901760
  %v3184 = vsub.f32 %v2880, %v3183
  %v3185 = vand.u32 %v3184, 4294901760
  %3186 = vmatmul.mubr.f32.gmra.mrb[0].mxu0 %v3185
  %v3187 = vpop.f32.mrb[0].mxu0
  %v3188 = vadd.f32 %v3113, %v3187
  %v3189 = vpop.f32.mrb[0].mxu0
  %3190 = vdwg.mxu0
  %3191 = vmatprep.subr.mxu0 0.0
  %v3192 = vand.u32 %v38, 4294901760
  %v3193 = vsub.f32 %v38, %v3192
  %v3194 = vand.u32 %v3193, 4294901760
  %3195 = vmatpush1.msra.mxu0 %v3194
  %3196 = vmatprep.subr.mxu0 0.0
  %v3197 = vand.u32 %v39, 4294901760
  %v3198 = vsub.f32 %v39, %v3197
  %v3199 = vand.u32 %v3198, 4294901760
  %3200 = vmatpush1.msra.mxu0 %v3199
  %3201 = vmatprep.subr.mxu0 0.0
  %3202 = vmatpush1.msra.mxu0 0.0
  %3203 = vmatprep.subr.mxu0 0.0
  %3204 = vmatpush1.msra.mxu0 0.0
  %3205 = vmatprep.subr.mxu0 0.0
  %3206 = vmatpush1.msra.mxu0 0.0
  %3207 = vmatprep.subr.mxu0 0.0
  %3208 = vmatpush1.msra.mxu0 0.0
  %3209 = vmatprep.subr.mxu0 0.0
  %3210 = vmatpush1.msra.mxu0 0.0
  %3211 = vmatprep.subr.mxu0 0.0
  %3212 = vmatpush1.msra.mxu0 0.0
  %3213 = vmatprep.subr.mxu0 0.0
  %3214 = vmatpush1.msra.mxu0 0.0
  %3215 = vmatprep.subr.mxu0 0.0
  %3216 = vmatpush1.msra.mxu0 0.0
  %3217 = vmatprep.subr.mxu0 0.0
  %3218 = vmatpush1.msra.mxu0 0.0
  %3219 = vmatprep.subr.mxu0 0.0
  %3220 = vmatpush1.msra.mxu0 0.0
  %3221 = vmatprep.subr.mxu0 0.0
  %3222 = vmatpush1.msra.mxu0 0.0
  %3223 = vmatprep.subr.mxu0 0.0
  %3224 = vmatpush1.msra.mxu0 0.0
  %3225 = vmatprep.subr.mxu0 0.0
  %3226 = vmatpush1.msra.mxu0 0.0
  %3227 = vmatprep.subr.mxu0 0.0
  %3228 = vmatpush1.msra.mxu0 0.0
  %3229 = vmatprep.subr.mxu0 0.0
  %3230 = vmatpush1.msra.mxu0 0.0
  %3231 = vmatprep.subr.mxu0 0.0
  %3232 = vmatpush1.msra.mxu0 0.0
  %3233 = vmatprep.subr.mxu0 0.0
  %3234 = vmatpush1.msra.mxu0 0.0
  %3235 = vmatprep.subr.mxu0 0.0
  %3236 = vmatpush1.msra.mxu0 0.0
  %3237 = vmatprep.subr.mxu0 0.0
  %3238 = vmatpush1.msra.mxu0 0.0
  %3239 = vmatprep.subr.mxu0 0.0
  %3240 = vmatpush1.msra.mxu0 0.0
  %3241 = vmatprep.subr.mxu0 0.0
  %3242 = vmatpush1.msra.mxu0 0.0
  %3243 = vmatprep.subr.mxu0 0.0
  %3244 = vmatpush1.msra.mxu0 0.0
  %3245 = vmatprep.subr.mxu0 0.0
  %3246 = vmatpush1.msra.mxu0 0.0
  %3247 = vmatprep.subr.mxu0 0.0
  %3248 = vmatpush1.msra.mxu0 0.0
  %3249 = vmatprep.subr.mxu0 0.0
  %3250 = vmatpush1.msra.mxu0 0.0
  %3251 = vmatprep.subr.mxu0 0.0
  %3252 = vmatpush1.msra.mxu0 0.0
  %3253 = vmatprep.subr.mxu0 0.0
  %3254 = vmatpush1.msra.mxu0 0.0
  %3255 = vmatprep.subr.mxu0 0.0
  %3256 = vmatpush1.msra.mxu0 0.0
  %3257 = vmatprep.subr.mxu0 0.0
  %3258 = vmatpush1.msra.mxu0 0.0
  %3259 = vmatprep.subr.mxu0 0.0
  %3260 = vmatpush1.msra.mxu0 0.0
  %3261 = vmatprep.mubr.f32.mxu0 0.0
  %v3262 = vand.u32 %v2880, 4294901760
  %3263 = vmatmul.mubr.f32.gmra.mrb[0].mxu0 %v3262
  %v3264 = vpop.f32.mrb[0].mxu0
  %v3265 = vadd.f32 %v3188, %v3264
  %v3266 = vpop.f32.mrb[0].mxu0
  %3267 = vdwg.mxu0
  %3268 = vmatprep.subr.mxu0 0.0
  %v3269 = vand.u32 %v38, 4294901760
  %3270 = vmatpush1.msra.mxu0 %v3269
  %3271 = vmatprep.subr.mxu0 0.0
  %v3272 = vand.u32 %v39, 4294901760
  %3273 = vmatpush1.msra.mxu0 %v3272
  %3274 = vmatprep.subr.mxu0 0.0
  %3275 = vmatpush1.msra.mxu0 0.0
  %3276 = vmatprep.subr.mxu0 0.0
  %3277 = vmatpush1.msra.mxu0 0.0
  %3278 = vmatprep.subr.mxu0 0.0
  %3279 = vmatpush1.msra.mxu0 0.0
  %3280 = vmatprep.subr.mxu0 0.0
  %3281 = vmatpush1.msra.mxu0 0.0
  %3282 = vmatprep.subr.mxu0 0.0
  %3283 = vmatpush1.msra.mxu0 0.0
  %3284 = vmatprep.subr.mxu0 0.0
  %3285 = vmatpush1.msra.mxu0 0.0
  %3286 = vmatprep.subr.mxu0 0.0
  %3287 = vmatpush1.msra.mxu0 0.0
  %3288 = vmatprep.subr.mxu0 0.0
  %3289 = vmatpush1.msra.mxu0 0.0
  %3290 = vmatprep.subr.mxu0 0.0
  %3291 = vmatpush1.msra.mxu0 0.0
  %3292 = vmatprep.subr.mxu0 0.0
  %3293 = vmatpush1.msra.mxu0 0.0
  %3294 = vmatprep.subr.mxu0 0.0
  %3295 = vmatpush1.msra.mxu0 0.0
  %3296 = vmatprep.subr.mxu0 0.0
  %3297 = vmatpush1.msra.mxu0 0.0
  %3298 = vmatprep.subr.mxu0 0.0
  %3299 = vmatpush1.msra.mxu0 0.0
  %3300 = vmatprep.subr.mxu0 0.0
  %3301 = vmatpush1.msra.mxu0 0.0
  %3302 = vmatprep.subr.mxu0 0.0
  %3303 = vmatpush1.msra.mxu0 0.0
  %3304 = vmatprep.subr.mxu0 0.0
  %3305 = vmatpush1.msra.mxu0 0.0
  %3306 = vmatprep.subr.mxu0 0.0
  %3307 = vmatpush1.msra.mxu0 0.0
  %3308 = vmatprep.subr.mxu0 0.0
  %3309 = vmatpush1.msra.mxu0 0.0
  %3310 = vmatprep.subr.mxu0 0.0
  %3311 = vmatpush1.msra.mxu0 0.0
  %3312 = vmatprep.subr.mxu0 0.0
  %3313 = vmatpush1.msra.mxu0 0.0
  %3314 = vmatprep.subr.mxu0 0.0
  %3315 = vmatpush1.msra.mxu0 0.0
  %3316 = vmatprep.subr.mxu0 0.0
  %3317 = vmatpush1.msra.mxu0 0.0
  %3318 = vmatprep.subr.mxu0 0.0
  %3319 = vmatpush1.msra.mxu0 0.0
  %3320 = vmatprep.subr.mxu0 0.0
  %3321 = vmatpush1.msra.mxu0 0.0
  %3322 = vmatprep.subr.mxu0 0.0
  %3323 = vmatpush1.msra.mxu0 0.0
  %3324 = vmatprep.subr.mxu0 0.0
  %3325 = vmatpush1.msra.mxu0 0.0
  %3326 = vmatprep.subr.mxu0 0.0
  %3327 = vmatpush1.msra.mxu0 0.0
  %3328 = vmatprep.subr.mxu0 0.0
  %3329 = vmatpush1.msra.mxu0 0.0
  %3330 = vmatprep.subr.mxu0 0.0
  %3331 = vmatpush1.msra.mxu0 0.0
  %3332 = vmatprep.subr.mxu0 0.0
  %3333 = vmatpush1.msra.mxu0 0.0
  %3334 = vmatprep.mubr.f32.mxu0 0.0
  %v3335 = vand.u32 %v2880, 4294901760
  %3336 = vmatmul.mubr.f32.gmra.mrb[0].mxu0 %v3335
  %v3337 = vpop.f32.mrb[0].mxu0
  %v3338 = vadd.f32 %v3265, %v3337
  %v3339 = vpop.f32.mrb[0].mxu0
  %3340 = vdwg.mxu0
  %v3341 = vld [vmem:[%s8] sm:$0xff]
  %3343 = vset.pattern.permute.xlu0 0
  %3344 = vperm.xlu0 %3343, %v3341
  %v3345 = vpop.permute.xlu0 %3344
  %v3347 = vadd.f32 %v3338, %v3345
  %v3348 = vmax.f32 %v3347, 0.0
  %3349 = vst.msk [vmem:[%s11] sm:$0xff] %vm519, %v3348
  %v3350 = vld [vmem:[%s5] sm:$0xff]
  %v3351 = vld [vmem:[%s7] sm:$0xff]
  %v3353 = vsel %vm2429, %v3351, 0
  %v3355 = vand.u32 %v1023, 4294901760
  %3356 = vmatprep.subr.mxu0 %v3355
  %v3357 = vand.u32 %v1022, 4294901760
  %3358 = vmatpush1.msra.mxu0 %v3357
  %3359 = vmatprep.subr.mxu0 0.0
  %3360 = vmatpush1.msra.mxu0 0.0
  %3361 = vmatprep.subr.mxu0 0.0
  %3362 = vmatpush1.msra.mxu0 0.0
  %3363 = vmatprep.subr.mxu0 0.0
  %3364 = vmatpush1.msra.mxu0 0.0
  %3365 = vmatprep.subr.mxu0 0.0
  %3366 = vmatpush1.msra.mxu0 0.0
  %3367 = vmatprep.subr.mxu0 0.0
  %3368 = vmatpush1.msra.mxu0 0.0
  %3369 = vmatprep.subr.mxu0 0.0
  %3370 = vmatpush1.msra.mxu0 0.0
  %3371 = vmatprep.subr.mxu0 0.0
  %3372 = vmatpush1.msra.mxu0 0.0
  %3373 = vmatprep.subr.mxu0 0.0
  %3374 = vmatpush1.msra.mxu0 0.0
  %3375 = vmatprep.subr.mxu0 0.0
  %3376 = vmatpush1.msra.mxu0 0.0
  %3377 = vmatprep.subr.mxu0 0.0
  %3378 = vmatpush1.msra.mxu0 0.0
  %3379 = vmatprep.subr.mxu0 0.0
  %3380 = vmatpush1.msra.mxu0 0.0
  %3381 = vmatprep.subr.mxu0 0.0
  %3382 = vmatpush1.msra.mxu0 0.0
  %3383 = vmatprep.subr.mxu0 0.0
  %3384 = vmatpush1.msra.mxu0 0.0
  %3385 = vmatprep.subr.mxu0 0.0
  %3386 = vmatpush1.msra.mxu0 0.0
  %3387 = vmatprep.subr.mxu0 0.0
  %3388 = vmatpush1.msra.mxu0 0.0
  %3389 = vmatprep.subr.mxu0 0.0
  %3390 = vmatpush1.msra.mxu0 0.0
  %3391 = vmatprep.subr.mxu0 0.0
  %3392 = vmatpush1.msra.mxu0 0.0
  %3393 = vmatprep.subr.mxu0 0.0
  %3394 = vmatpush1.msra.mxu0 0.0
  %3395 = vmatprep.subr.mxu0 0.0
  %3396 = vmatpush1.msra.mxu0 0.0
  %3397 = vmatprep.subr.mxu0 0.0
  %3398 = vmatpush1.msra.mxu0 0.0
  %3399 = vmatprep.subr.mxu0 0.0
  %3400 = vmatpush1.msra.mxu0 0.0
  %3401 = vmatprep.subr.mxu0 0.0
  %3402 = vmatpush1.msra.mxu0 0.0
  %3403 = vmatprep.subr.mxu0 0.0
  %3404 = vmatpush1.msra.mxu0 0.0
  %3405 = vmatprep.subr.mxu0 0.0
  %3406 = vmatpush1.msra.mxu0 0.0
  %3407 = vmatprep.subr.mxu0 0.0
  %3408 = vmatpush1.msra.mxu0 0.0
  %3409 = vmatprep.subr.mxu0 0.0
  %3410 = vmatpush1.msra.mxu0 0.0
  %3411 = vmatprep.subr.mxu0 0.0
  %3412 = vmatpush1.msra.mxu0 0.0
  %3413 = vmatprep.subr.mxu0 0.0
  %3414 = vmatpush1.msra.mxu0 0.0
  %3415 = vmatprep.subr.mxu0 0.0
  %3416 = vmatpush1.msra.mxu0 0.0
  %3417 = vmatprep.subr.mxu0 0.0
  %3418 = vmatpush1.msra.mxu0 0.0
  %3419 = vmatprep.subr.mxu0 0.0
  %3420 = vmatpush1.msra.mxu0 0.0
  %3421 = vmatprep.mubr.f32.mxu0 0.0
  %v3422 = vand.u32 %v3353, 4294901760
  %v3423 = vsub.f32 %v3353, %v3422
  %v3424 = vand.u32 %v3423, 4294901760
  %v3425 = vsub.f32 %v3423, %v3424
  %v3426 = vand.u32 %v3425, 4294901760
  %3427 = vmatmul.mubr.f32.gmra.mrb[0].mxu0 %v3426
  %v3428 = vpop.f32.mrb[0].mxu0
  %v3429 = vadd.f32 0.0, %v3428
  %v3430 = vpop.f32.mrb[0].mxu0
  %v3431 = vadd.f32 0.0, %v3430
  %3432 = vdwg.mxu0
  %v3433 = vand.u32 %v1023, 4294901760
  %v3434 = vsub.f32 %v1023, %v3433
  %v3435 = vand.u32 %v3434, 4294901760
  %v3436 = vsub.f32 %v3434, %v3435
  %v3437 = vand.u32 %v3436, 4294901760
  %3438 = vmatprep.subr.mxu0 %v3437
  %v3439 = vand.u32 %v1022, 4294901760
  %v3440 = vsub.f32 %v1022, %v3439
  %v3441 = vand.u32 %v3440, 4294901760
  %v3442 = vsub.f32 %v3440, %v3441
  %v3443 = vand.u32 %v3442, 4294901760
  %3444 = vmatpush1.msra.mxu0 %v3443
  %3445 = vmatprep.subr.mxu0 0.0
  %3446 = vmatpush1.msra.mxu0 0.0
  %3447 = vmatprep.subr.mxu0 0.0
  %3448 = vmatpush1.msra.mxu0 0.0
  %3449 = vmatprep.subr.mxu0 0.0
  %3450 = vmatpush1.msra.mxu0 0.0
  %3451 = vmatprep.subr.mxu0 0.0
  %3452 = vmatpush1.msra.mxu0 0.0
  %3453 = vmatprep.subr.mxu0 0.0
  %3454 = vmatpush1.msra.mxu0 0.0
  %3455 = vmatprep.subr.mxu0 0.0
  %3456 = vmatpush1.msra.mxu0 0.0
  %3457 = vmatprep.subr.mxu0 0.0
  %3458 = vmatpush1.msra.mxu0 0.0
  %3459 = vmatprep.subr.mxu0 0.0
  %3460 = vmatpush1.msra.mxu0 0.0
  %3461 = vmatprep.subr.mxu0 0.0
  %3462 = vmatpush1.msra.mxu0 0.0
  %3463 = vmatprep.subr.mxu0 0.0
  %3464 = vmatpush1.msra.mxu0 0.0
  %3465 = vmatprep.subr.mxu0 0.0
  %3466 = vmatpush1.msra.mxu0 0.0
  %3467 = vmatprep.subr.mxu0 0.0
  %3468 = vmatpush1.msra.mxu0 0.0
  %3469 = vmatprep.subr.mxu0 0.0
  %3470 = vmatpush1.msra.mxu0 0.0
  %3471 = vmatprep.subr.mxu0 0.0
  %3472 = vmatpush1.msra.mxu0 0.0
  %3473 = vmatprep.subr.mxu0 0.0
  %3474 = vmatpush1.msra.mxu0 0.0
  %3475 = vmatprep.subr.mxu0 0.0
  %3476 = vmatpush1.msra.mxu0 0.0
  %3477 = vmatprep.subr.mxu0 0.0
  %3478 = vmatpush1.msra.mxu0 0.0
  %3479 = vmatprep.subr.mxu0 0.0
  %3480 = vmatpush1.msra.mxu0 0.0
  %3481 = vmatprep.subr.mxu0 0.0
  %3482 = vmatpush1.msra.mxu0 0.0
  %3483 = vmatprep.subr.mxu0 0.0
  %3484 = vmatpush1.msra.mxu0 0.0
  %3485 = vmatprep.subr.mxu0 0.0
  %3486 = vmatpush1.msra.mxu0 0.0
  %3487 = vmatprep.subr.mxu0 0.0
  %3488 = vmatpush1.msra.mxu0 0.0
  %3489 = vmatprep.subr.mxu0 0.0
  %3490 = vmatpush1.msra.mxu0 0.0
  %3491 = vmatprep.subr.mxu0 0.0
  %3492 = vmatpush1.msra.mxu0 0.0
  %3493 = vmatprep.subr.mxu0 0.0
  %3494 = vmatpush1.msra.mxu0 0.0
  %3495 = vmatprep.subr.mxu0 0.0
  %3496 = vmatpush1.msra.mxu0 0.0
  %3497 = vmatprep.subr.mxu0 0.0
  %3498 = vmatpush1.msra.mxu0 0.0
  %3499 = vmatprep.subr.mxu0 0.0
  %3500 = vmatpush1.msra.mxu0 0.0
  %3501 = vmatprep.subr.mxu0 0.0
  %3502 = vmatpush1.msra.mxu0 0.0
  %3503 = vmatprep.subr.mxu0 0.0
  %3504 = vmatpush1.msra.mxu0 0.0
  %3505 = vmatprep.subr.mxu0 0.0
  %3506 = vmatpush1.msra.mxu0 0.0
  %3507 = vmatprep.mubr.f32.mxu0 0.0
  %v3508 = vand.u32 %v3353, 4294901760
  %3509 = vmatmul.mubr.f32.gmra.mrb[0].mxu0 %v3508
  %v3510 = vpop.f32.mrb[0].mxu0
  %v3511 = vadd.f32 %v3429, %v3510
  %v3512 = vpop.f32.mrb[0].mxu0
  %v3513 = vadd.f32 %v3431, %v3512
  %3514 = vdwg.mxu0
  %v3515 = vand.u32 %v1023, 4294901760
  %v3516 = vsub.f32 %v1023, %v3515
  %3517 = vmatprep.subr.mxu0 %v3516
  %v3518 = vand.u32 %v1022, 4294901760
  %v3519 = vsub.f32 %v1022, %v3518
  %3520 = vmatpush1.msra.mxu0 %v3519
  %3521 = vmatprep.subr.mxu0 0.0
  %3522 = vmatpush1.msra.mxu0 0.0
  %3523 = vmatprep.subr.mxu0 0.0
  %3524 = vmatpush1.msra.mxu0 0.0
  %3525 = vmatprep.subr.mxu0 0.0
  %3526 = vmatpush1.msra.mxu0 0.0
  %3527 = vmatprep.subr.mxu0 0.0
  %3528 = vmatpush1.msra.mxu0 0.0
  %3529 = vmatprep.subr.mxu0 0.0
  %3530 = vmatpush1.msra.mxu0 0.0
  %3531 = vmatprep.subr.mxu0 0.0
  %3532 = vmatpush1.msra.mxu0 0.0
  %3533 = vmatprep.subr.mxu0 0.0
  %3534 = vmatpush1.msra.mxu0 0.0
  %3535 = vmatprep.subr.mxu0 0.0
  %3536 = vmatpush1.msra.mxu0 0.0
  %3537 = vmatprep.subr.mxu0 0.0
  %3538 = vmatpush1.msra.mxu0 0.0
  %3539 = vmatprep.subr.mxu0 0.0
  %3540 = vmatpush1.msra.mxu0 0.0
  %3541 = vmatprep.subr.mxu0 0.0
  %3542 = vmatpush1.msra.mxu0 0.0
  %3543 = vmatprep.subr.mxu0 0.0
  %3544 = vmatpush1.msra.mxu0 0.0
  %3545 = vmatprep.subr.mxu0 0.0
  %3546 = vmatpush1.msra.mxu0 0.0
  %3547 = vmatprep.subr.mxu0 0.0
  %3548 = vmatpush1.msra.mxu0 0.0
  %3549 = vmatprep.subr.mxu0 0.0
  %3550 = vmatpush1.msra.mxu0 0.0
  %3551 = vmatprep.subr.mxu0 0.0
  %3552 = vmatpush1.msra.mxu0 0.0
  %3553 = vmatprep.subr.mxu0 0.0
  %3554 = vmatpush1.msra.mxu0 0.0
  %3555 = vmatprep.subr.mxu0 0.0
  %3556 = vmatpush1.msra.mxu0 0.0
  %3557 = vmatprep.subr.mxu0 0.0
  %3558 = vmatpush1.msra.mxu0 0.0
  %3559 = vmatprep.subr.mxu0 0.0
  %3560 = vmatpush1.msra.mxu0 0.0
  %3561 = vmatprep.subr.mxu0 0.0
  %3562 = vmatpush1.msra.mxu0 0.0
  %3563 = vmatprep.subr.mxu0 0.0
  %3564 = vmatpush1.msra.mxu0 0.0
  %3565 = vmatprep.subr.mxu0 0.0
  %3566 = vmatpush1.msra.mxu0 0.0
  %3567 = vmatprep.subr.mxu0 0.0
  %3568 = vmatpush1.msra.mxu0 0.0
  %3569 = vmatprep.subr.mxu0 0.0
  %3570 = vmatpush1.msra.mxu0 0.0
  %3571 = vmatprep.subr.mxu0 0.0
  %3572 = vmatpush1.msra.mxu0 0.0
  %3573 = vmatprep.subr.mxu0 0.0
  %3574 = vmatpush1.msra.mxu0 0.0
  %3575 = vmatprep.subr.mxu0 0.0
  %3576 = vmatpush1.msra.mxu0 0.0
  %3577 = vmatprep.subr.mxu0 0.0
  %3578 = vmatpush1.msra.mxu0 0.0
  %3579 = vmatprep.subr.mxu0 0.0
  %3580 = vmatpush1.msra.mxu0 0.0
  %3581 = vmatprep.subr.mxu0 0.0
  %3582 = vmatpush1.msra.mxu0 0.0
  %3583 = vmatprep.mubr.f32.mxu0 0.0
  %v3584 = vand.u32 %v3353, 4294901760
  %v3585 = vsub.f32 %v3353, %v3584
  %3586 = vmatmul.mubr.f32.gmra.mrb[0].mxu0 %v3585
  %v3587 = vpop.f32.mrb[0].mxu0
  %v3588 = vadd.f32 %v3511, %v3587
  %v3589 = vpop.f32.mrb[0].mxu0
  %v3590 = vadd.f32 %v3513, %v3589
  %3591 = vdwg.mxu0
  %v3592 = vand.u32 %v1023, 4294901760
  %3593 = vmatprep.subr.mxu0 %v3592
  %v3594 = vand.u32 %v1022, 4294901760
  %3595 = vmatpush1.msra.mxu0 %v3594
  %3596 = vmatprep.subr.mxu0 0.0
  %3597 = vmatpush1.msra.mxu0 0.0
  %3598 = vmatprep.subr.mxu0 0.0
  %3599 = vmatpush1.msra.mxu0 0.0
  %3600 = vmatprep.subr.mxu0 0.0
  %3601 = vmatpush1.msra.mxu0 0.0
  %3602 = vmatprep.subr.mxu0 0.0
  %3603 = vmatpush1.msra.mxu0 0.0
  %3604 = vmatprep.subr.mxu0 0.0
  %3605 = vmatpush1.msra.mxu0 0.0
  %3606 = vmatprep.subr.mxu0 0.0
  %3607 = vmatpush1.msra.mxu0 0.0
  %3608 = vmatprep.subr.mxu0 0.0
  %3609 = vmatpush1.msra.mxu0 0.0
  %3610 = vmatprep.subr.mxu0 0.0
  %3611 = vmatpush1.msra.mxu0 0.0
  %3612 = vmatprep.subr.mxu0 0.0
  %3613 = vmatpush1.msra.mxu0 0.0
  %3614 = vmatprep.subr.mxu0 0.0
  %3615 = vmatpush1.msra.mxu0 0.0
  %3616 = vmatprep.subr.mxu0 0.0
  %3617 = vmatpush1.msra.mxu0 0.0
  %3618 = vmatprep.subr.mxu0 0.0
  %3619 = vmatpush1.msra.mxu0 0.0
  %3620 = vmatprep.subr.mxu0 0.0
  %3621 = vmatpush1.msra.mxu0 0.0
  %3622 = vmatprep.subr.mxu0 0.0
  %3623 = vmatpush1.msra.mxu0 0.0
  %3624 = vmatprep.subr.mxu0 0.0
  %3625 = vmatpush1.msra.mxu0 0.0
  %3626 = vmatprep.subr.mxu0 0.0
  %3627 = vmatpush1.msra.mxu0 0.0
  %3628 = vmatprep.subr.mxu0 0.0
  %3629 = vmatpush1.msra.mxu0 0.0
  %3630 = vmatprep.subr.mxu0 0.0
  %3631 = vmatpush1.msra.mxu0 0.0
  %3632 = vmatprep.subr.mxu0 0.0
  %3633 = vmatpush1.msra.mxu0 0.0
  %3634 = vmatprep.subr.mxu0 0.0
  %3635 = vmatpush1.msra.mxu0 0.0
  %3636 = vmatprep.subr.mxu0 0.0
  %3637 = vmatpush1.msra.mxu0 0.0
  %3638 = vmatprep.subr.mxu0 0.0
  %3639 = vmatpush1.msra.mxu0 0.0
  %3640 = vmatprep.subr.mxu0 0.0
  %3641 = vmatpush1.msra.mxu0 0.0
  %3642 = vmatprep.subr.mxu0 0.0
  %3643 = vmatpush1.msra.mxu0 0.0
  %3644 = vmatprep.subr.mxu0 0.0
  %3645 = vmatpush1.msra.mxu0 0.0
  %3646 = vmatprep.subr.mxu0 0.0
  %3647 = vmatpush1.msra.mxu0 0.0
  %3648 = vmatprep.subr.mxu0 0.0
  %3649 = vmatpush1.msra.mxu0 0.0
  %3650 = vmatprep.subr.mxu0 0.0
  %3651 = vmatpush1.msra.mxu0 0.0
  %3652 = vmatprep.subr.mxu0 0.0
  %3653 = vmatpush1.msra.mxu0 0.0
  %3654 = vmatprep.subr.mxu0 0.0
  %3655 = vmatpush1.msra.mxu0 0.0
  %3656 = vmatprep.subr.mxu0 0.0
  %3657 = vmatpush1.msra.mxu0 0.0
  %3658 = vmatprep.mubr.f32.mxu0 0.0
  %v3659 = vand.u32 %v3353, 4294901760
  %v3660 = vsub.f32 %v3353, %v3659
  %v3661 = vand.u32 %v3660, 4294901760
  %3662 = vmatmul.mubr.f32.gmra.mrb[0].mxu0 %v3661
  %v3663 = vpop.f32.mrb[0].mxu0
  %v3664 = vadd.f32 %v3588, %v3663
  %v3665 = vpop.f32.mrb[0].mxu0
  %v3666 = vadd.f32 %v3590, %v3665
  %3667 = vdwg.mxu0
  %v3668 = vand.u32 %v1023, 4294901760
  %v3669 = vsub.f32 %v1023, %v3668
  %v3670 = vand.u32 %v3669, 4294901760
  %3671 = vmatprep.subr.mxu0 %v3670
  %v3672 = vand.u32 %v1022, 4294901760
  %v3673 = vsub.f32 %v1022, %v3672
  %v3674 = vand.u32 %v3673, 4294901760
  %3675 = vmatpush1.msra.mxu0 %v3674
  %3676 = vmatprep.subr.mxu0 0.0
  %3677 = vmatpush1.msra.mxu0 0.0
  %3678 = vmatprep.subr.mxu0 0.0
  %3679 = vmatpush1.msra.mxu0 0.0
  %3680 = vmatprep.subr.mxu0 0.0
  %3681 = vmatpush1.msra.mxu0 0.0
  %3682 = vmatprep.subr.mxu0 0.0
  %3683 = vmatpush1.msra.mxu0 0.0
  %3684 = vmatprep.subr.mxu0 0.0
  %3685 = vmatpush1.msra.mxu0 0.0
  %3686 = vmatprep.subr.mxu0 0.0
  %3687 = vmatpush1.msra.mxu0 0.0
  %3688 = vmatprep.subr.mxu0 0.0
  %3689 = vmatpush1.msra.mxu0 0.0
  %3690 = vmatprep.subr.mxu0 0.0
  %3691 = vmatpush1.msra.mxu0 0.0
  %3692 = vmatprep.subr.mxu0 0.0
  %3693 = vmatpush1.msra.mxu0 0.0
  %3694 = vmatprep.subr.mxu0 0.0
  %3695 = vmatpush1.msra.mxu0 0.0
  %3696 = vmatprep.subr.mxu0 0.0
  %3697 = vmatpush1.msra.mxu0 0.0
  %3698 = vmatprep.subr.mxu0 0.0
  %3699 = vmatpush1.msra.mxu0 0.0
  %3700 = vmatprep.subr.mxu0 0.0
  %3701 = vmatpush1.msra.mxu0 0.0
  %3702 = vmatprep.subr.mxu0 0.0
  %3703 = vmatpush1.msra.mxu0 0.0
  %3704 = vmatprep.subr.mxu0 0.0
  %3705 = vmatpush1.msra.mxu0 0.0
  %3706 = vmatprep.subr.mxu0 0.0
  %3707 = vmatpush1.msra.mxu0 0.0
  %3708 = vmatprep.subr.mxu0 0.0
  %3709 = vmatpush1.msra.mxu0 0.0
  %3710 = vmatprep.subr.mxu0 0.0
  %3711 = vmatpush1.msra.mxu0 0.0
  %3712 = vmatprep.subr.mxu0 0.0
  %3713 = vmatpush1.msra.mxu0 0.0
  %3714 = vmatprep.subr.mxu0 0.0
  %3715 = vmatpush1.msra.mxu0 0.0
  %3716 = vmatprep.subr.mxu0 0.0
  %3717 = vmatpush1.msra.mxu0 0.0
  %3718 = vmatprep.subr.mxu0 0.0
  %3719 = vmatpush1.msra.mxu0 0.0
  %3720 = vmatprep.subr.mxu0 0.0
  %3721 = vmatpush1.msra.mxu0 0.0
  %3722 = vmatprep.subr.mxu0 0.0
  %3723 = vmatpush1.msra.mxu0 0.0
  %3724 = vmatprep.subr.mxu0 0.0
  %3725 = vmatpush1.msra.mxu0 0.0
  %3726 = vmatprep.subr.mxu0 0.0
  %3727 = vmatpush1.msra.mxu0 0.0
  %3728 = vmatprep.subr.mxu0 0.0
  %3729 = vmatpush1.msra.mxu0 0.0
  %3730 = vmatprep.subr.mxu0 0.0
  %3731 = vmatpush1.msra.mxu0 0.0
  %3732 = vmatprep.subr.mxu0 0.0
  %3733 = vmatpush1.msra.mxu0 0.0
  %3734 = vmatprep.subr.mxu0 0.0
  %3735 = vmatpush1.msra.mxu0 0.0
  %3736 = vmatprep.subr.mxu0 0.0
  %3737 = vmatpush1.msra.mxu0 0.0
  %3738 = vmatprep.mubr.f32.mxu0 0.0
  %v3739 = vand.u32 %v3353, 4294901760
  %3740 = vmatmul.mubr.f32.gmra.mrb[0].mxu0 %v3739
  %v3741 = vpop.f32.mrb[0].mxu0
  %v3742 = vadd.f32 %v3664, %v3741
  %v3743 = vpop.f32.mrb[0].mxu0
  %v3744 = vadd.f32 %v3666, %v3743
  %3745 = vdwg.mxu0
  %v3746 = vand.u32 %v1023, 4294901760
  %3747 = vmatprep.subr.mxu0 %v3746
  %v3748 = vand.u32 %v1022, 4294901760
  %3749 = vmatpush1.msra.mxu0 %v3748
  %3750 = vmatprep.subr.mxu0 0.0
  %3751 = vmatpush1.msra.mxu0 0.0
  %3752 = vmatprep.subr.mxu0 0.0
  %3753 = vmatpush1.msra.mxu0 0.0
  %3754 = vmatprep.subr.mxu0 0.0
  %3755 = vmatpush1.msra.mxu0 0.0
  %3756 = vmatprep.subr.mxu0 0.0
  %3757 = vmatpush1.msra.mxu0 0.0
  %3758 = vmatprep.subr.mxu0 0.0
  %3759 = vmatpush1.msra.mxu0 0.0
  %3760 = vmatprep.subr.mxu0 0.0
  %3761 = vmatpush1.msra.mxu0 0.0
  %3762 = vmatprep.subr.mxu0 0.0
  %3763 = vmatpush1.msra.mxu0 0.0
  %3764 = vmatprep.subr.mxu0 0.0
  %3765 = vmatpush1.msra.mxu0 0.0
  %3766 = vmatprep.subr.mxu0 0.0
  %3767 = vmatpush1.msra.mxu0 0.0
  %3768 = vmatprep.subr.mxu0 0.0
  %3769 = vmatpush1.msra.mxu0 0.0
  %3770 = vmatprep.subr.mxu0 0.0
  %3771 = vmatpush1.msra.mxu0 0.0
  %3772 = vmatprep.subr.mxu0 0.0
  %3773 = vmatpush1.msra.mxu0 0.0
  %3774 = vmatprep.subr.mxu0 0.0
  %3775 = vmatpush1.msra.mxu0 0.0
  %3776 = vmatprep.subr.mxu0 0.0
  %3777 = vmatpush1.msra.mxu0 0.0
  %3778 = vmatprep.subr.mxu0 0.0
  %3779 = vmatpush1.msra.mxu0 0.0
  %3780 = vmatprep.subr.mxu0 0.0
  %3781 = vmatpush1.msra.mxu0 0.0
  %3782 = vmatprep.subr.mxu0 0.0
  %3783 = vmatpush1.msra.mxu0 0.0
  %3784 = vmatprep.subr.mxu0 0.0
  %3785 = vmatpush1.msra.mxu0 0.0
  %3786 = vmatprep.subr.mxu0 0.0
  %3787 = vmatpush1.msra.mxu0 0.0
  %3788 = vmatprep.subr.mxu0 0.0
  %3789 = vmatpush1.msra.mxu0 0.0
  %3790 = vmatprep.subr.mxu0 0.0
  %3791 = vmatpush1.msra.mxu0 0.0
  %3792 = vmatprep.subr.mxu0 0.0
  %3793 = vmatpush1.msra.mxu0 0.0
  %3794 = vmatprep.subr.mxu0 0.0
  %3795 = vmatpush1.msra.mxu0 0.0
  %3796 = vmatprep.subr.mxu0 0.0
  %3797 = vmatpush1.msra.mxu0 0.0
  %3798 = vmatprep.subr.mxu0 0.0
  %3799 = vmatpush1.msra.mxu0 0.0
  %3800 = vmatprep.subr.mxu0 0.0
  %3801 = vmatpush1.msra.mxu0 0.0
  %3802 = vmatprep.subr.mxu0 0.0
  %3803 = vmatpush1.msra.mxu0 0.0
  %3804 = vmatprep.subr.mxu0 0.0
  %3805 = vmatpush1.msra.mxu0 0.0
  %3806 = vmatprep.subr.mxu0 0.0
  %3807 = vmatpush1.msra.mxu0 0.0
  %3808 = vmatprep.subr.mxu0 0.0
  %3809 = vmatpush1.msra.mxu0 0.0
  %3810 = vmatprep.subr.mxu0 0.0
  %3811 = vmatpush1.msra.mxu0 0.0
  %3812 = vmatprep.mubr.f32.mxu0 0.0
  %v3813 = vand.u32 %v3353, 4294901760
  %3814 = vmatmul.mubr.f32.gmra.mrb[0].mxu0 %v3813
  %v3815 = vpop.f32.mrb[0].mxu0
  %v3816 = vadd.f32 %v3742, %v3815
  %v3817 = vpop.f32.mrb[0].mxu0
  %v3818 = vadd.f32 %v3744, %v3817
  %3819 = vdwg.mxu0
  %v3821 = vsel %vm55, %v3350, 0
  %v3823 = vand.u32 %v41, 4294901760
  %3824 = vmatprep.subr.mxu0 %v3823
  %v3825 = vand.u32 %v40, 4294901760
  %3826 = vmatpush1.msra.mxu0 %v3825
  %v3827 = vand.u32 %v43, 4294901760
  %3828 = vmatprep.subr.mxu0 %v3827
  %v3829 = vand.u32 %v42, 4294901760
  %3830 = vmatpush1.msra.mxu0 %v3829
  %3831 = vmatprep.subr.mxu0 0.0
  %3832 = vmatpush1.msra.mxu0 0.0
  %3833 = vmatprep.subr.mxu0 0.0
  %3834 = vmatpush1.msra.mxu0 0.0
  %3835 = vmatprep.subr.mxu0 0.0
  %3836 = vmatpush1.msra.mxu0 0.0
  %3837 = vmatprep.subr.mxu0 0.0
  %3838 = vmatpush1.msra.mxu0 0.0
  %3839 = vmatprep.subr.mxu0 0.0
  %3840 = vmatpush1.msra.mxu0 0.0
  %3841 = vmatprep.subr.mxu0 0.0
  %3842 = vmatpush1.msra.mxu0 0.0
  %3843 = vmatprep.subr.mxu0 0.0
  %3844 = vmatpush1.msra.mxu0 0.0
  %3845 = vmatprep.subr.mxu0 0.0
  %3846 = vmatpush1.msra.mxu0 0.0
  %3847 = vmatprep.subr.mxu0 0.0
  %3848 = vmatpush1.msra.mxu0 0.0
  %3849 = vmatprep.subr.mxu0 0.0
  %3850 = vmatpush1.msra.mxu0 0.0
  %3851 = vmatprep.subr.mxu0 0.0
  %3852 = vmatpush1.msra.mxu0 0.0
  %3853 = vmatprep.subr.mxu0 0.0
  %3854 = vmatpush1.msra.mxu0 0.0
  %3855 = vmatprep.subr.mxu0 0.0
  %3856 = vmatpush1.msra.mxu0 0.0
  %3857 = vmatprep.subr.mxu0 0.0
  %3858 = vmatpush1.msra.mxu0 0.0
  %3859 = vmatprep.subr.mxu0 0.0
  %3860 = vmatpush1.msra.mxu0 0.0
  %3861 = vmatprep.subr.mxu0 0.0
  %3862 = vmatpush1.msra.mxu0 0.0
  %3863 = vmatprep.subr.mxu0 0.0
  %3864 = vmatpush1.msra.mxu0 0.0
  %3865 = vmatprep.subr.mxu0 0.0
  %3866 = vmatpush1.msra.mxu0 0.0
  %3867 = vmatprep.subr.mxu0 0.0
  %3868 = vmatpush1.msra.mxu0 0.0
  %3869 = vmatprep.subr.mxu0 0.0
  %3870 = vmatpush1.msra.mxu0 0.0
  %3871 = vmatprep.subr.mxu0 0.0
  %3872 = vmatpush1.msra.mxu0 0.0
  %3873 = vmatprep.subr.mxu0 0.0
  %3874 = vmatpush1.msra.mxu0 0.0
  %3875 = vmatprep.subr.mxu0 0.0
  %3876 = vmatpush1.msra.mxu0 0.0
  %3877 = vmatprep.subr.mxu0 0.0
  %3878 = vmatpush1.msra.mxu0 0.0
  %3879 = vmatprep.subr.mxu0 0.0
  %3880 = vmatpush1.msra.mxu0 0.0
  %3881 = vmatprep.subr.mxu0 0.0
  %3882 = vmatpush1.msra.mxu0 0.0
  %3883 = vmatprep.subr.mxu0 0.0
  %3884 = vmatpush1.msra.mxu0 0.0
  %3885 = vmatprep.subr.mxu0 0.0
  %3886 = vmatpush1.msra.mxu0 0.0
  %3887 = vmatprep.subr.mxu0 0.0
  %3888 = vmatpush1.msra.mxu0 0.0
  %3889 = vmatprep.subr.mxu0 0.0
  %3890 = vmatpush1.msra.mxu0 0.0
  %3891 = vmatprep.mubr.f32.mxu0 0.0
  %v3892 = vand.u32 %v3821, 4294901760
  %v3893 = vsub.f32 %v3821, %v3892
  %v3894 = vand.u32 %v3893, 4294901760
  %v3895 = vsub.f32 %v3893, %v3894
  %v3896 = vand.u32 %v3895, 4294901760
  %3897 = vmatmul.mubr.f32.gmra.mrb[0].mxu0 %v3896
  %v3898 = vpop.f32.mrb[0].mxu0
  %v3899 = vadd.f32 %v3816, %v3898
  %v3900 = vpop.f32.mrb[0].mxu0
  %v3901 = vadd.f32 %v3818, %v3900
  %3902 = vdwg.mxu0
  %v3903 = vand.u32 %v41, 4294901760
  %v3904 = vsub.f32 %v41, %v3903
  %v3905 = vand.u32 %v3904, 4294901760
  %v3906 = vsub.f32 %v3904, %v3905
  %v3907 = vand.u32 %v3906, 4294901760
  %3908 = vmatprep.subr.mxu0 %v3907
  %v3909 = vand.u32 %v40, 4294901760
  %v3910 = vsub.f32 %v40, %v3909
  %v3911 = vand.u32 %v3910, 4294901760
  %v3912 = vsub.f32 %v3910, %v3911
  %v3913 = vand.u32 %v3912, 4294901760
  %3914 = vmatpush1.msra.mxu0 %v3913
  %v3915 = vand.u32 %v43, 4294901760
  %v3916 = vsub.f32 %v43, %v3915
  %v3917 = vand.u32 %v3916, 4294901760
  %v3918 = vsub.f32 %v3916, %v3917
  %v3919 = vand.u32 %v3918, 4294901760
  %3920 = vmatprep.subr.mxu0 %v3919
  %v3921 = vand.u32 %v42, 4294901760
  %v3922 = vsub.f32 %v42, %v3921
  %v3923 = vand.u32 %v3922, 4294901760
  %v3924 = vsub.f32 %v3922, %v3923
  %v3925 = vand.u32 %v3924, 4294901760
  %3926 = vmatpush1.msra.mxu0 %v3925
  %3927 = vmatprep.subr.mxu0 0.0
  %3928 = vmatpush1.msra.mxu0 0.0
  %3929 = vmatprep.subr.mxu0 0.0
  %3930 = vmatpush1.msra.mxu0 0.0
  %3931 = vmatprep.subr.mxu0 0.0
  %3932 = vmatpush1.msra.mxu0 0.0
  %3933 = vmatprep.subr.mxu0 0.0
  %3934 = vmatpush1.msra.mxu0 0.0
  %3935 = vmatprep.subr.mxu0 0.0
  %3936 = vmatpush1.msra.mxu0 0.0
  %3937 = vmatprep.subr.mxu0 0.0
  %3938 = vmatpush1.msra.mxu0 0.0
  %3939 = vmatprep.subr.mxu0 0.0
  %3940 = vmatpush1.msra.mxu0 0.0
  %3941 = vmatprep.subr.mxu0 0.0
  %3942 = vmatpush1.msra.mxu0 0.0
  %3943 = vmatprep.subr.mxu0 0.0
  %3944 = vmatpush1.msra.mxu0 0.0
  %3945 = vmatprep.subr.mxu0 0.0
  %3946 = vmatpush1.msra.mxu0 0.0
  %3947 = vmatprep.subr.mxu0 0.0
  %3948 = vmatpush1.msra.mxu0 0.0
  %3949 = vmatprep.subr.mxu0 0.0
  %3950 = vmatpush1.msra.mxu0 0.0
  %3951 = vmatprep.subr.mxu0 0.0
  %3952 = vmatpush1.msra.mxu0 0.0
  %3953 = vmatprep.subr.mxu0 0.0
  %3954 = vmatpush1.msra.mxu0 0.0
  %3955 = vmatprep.subr.mxu0 0.0
  %3956 = vmatpush1.msra.mxu0 0.0
  %3957 = vmatprep.subr.mxu0 0.0
  %3958 = vmatpush1.msra.mxu0 0.0
  %3959 = vmatprep.subr.mxu0 0.0
  %3960 = vmatpush1.msra.mxu0 0.0
  %3961 = vmatprep.subr.mxu0 0.0
  %3962 = vmatpush1.msra.mxu0 0.0
  %3963 = vmatprep.subr.mxu0 0.0
  %3964 = vmatpush1.msra.mxu0 0.0
  %3965 = vmatprep.subr.mxu0 0.0
  %3966 = vmatpush1.msra.mxu0 0.0
  %3967 = vmatprep.subr.mxu0 0.0
  %3968 = vmatpush1.msra.mxu0 0.0
  %3969 = vmatprep.subr.mxu0 0.0
  %3970 = vmatpush1.msra.mxu0 0.0
  %3971 = vmatprep.subr.mxu0 0.0
  %3972 = vmatpush1.msra.mxu0 0.0
  %3973 = vmatprep.subr.mxu0 0.0
  %3974 = vmatpush1.msra.mxu0 0.0
  %3975 = vmatprep.subr.mxu0 0.0
  %3976 = vmatpush1.msra.mxu0 0.0
  %3977 = vmatprep.subr.mxu0 0.0
  %3978 = vmatpush1.msra.mxu0 0.0
  %3979 = vmatprep.subr.mxu0 0.0
  %3980 = vmatpush1.msra.mxu0 0.0
  %3981 = vmatprep.subr.mxu0 0.0
  %3982 = vmatpush1.msra.mxu0 0.0
  %3983 = vmatprep.subr.mxu0 0.0
  %3984 = vmatpush1.msra.mxu0 0.0
  %3985 = vmatprep.subr.mxu0 0.0
  %3986 = vmatpush1.msra.mxu0 0.0
  %3987 = vmatprep.mubr.f32.mxu0 0.0
  %v3988 = vand.u32 %v3821, 4294901760
  %3989 = vmatmul.mubr.f32.gmra.mrb[0].mxu0 %v3988
  %v3990 = vpop.f32.mrb[0].mxu0
  %v3991 = vadd.f32 %v3899, %v3990
  %v3992 = vpop.f32.mrb[0].mxu0
  %v3993 = vadd.f32 %v3901, %v3992
  %3994 = vdwg.mxu0
  %v3995 = vand.u32 %v41, 4294901760
  %v3996 = vsub.f32 %v41, %v3995
  %3997 = vmatprep.subr.mxu0 %v3996
  %v3998 = vand.u32 %v40, 4294901760
  %v3999 = vsub.f32 %v40, %v3998
  %4000 = vmatpush1.msra.mxu0 %v3999
  %v4001 = vand.u32 %v43, 4294901760
  %v4002 = vsub.f32 %v43, %v4001
  %4003 = vmatprep.subr.mxu0 %v4002
  %v4004 = vand.u32 %v42, 4294901760
  %v4005 = vsub.f32 %v42, %v4004
  %4006 = vmatpush1.msra.mxu0 %v4005
  %4007 = vmatprep.subr.mxu0 0.0
  %4008 = vmatpush1.msra.mxu0 0.0
  %4009 = vmatprep.subr.mxu0 0.0
  %4010 = vmatpush1.msra.mxu0 0.0
  %4011 = vmatprep.subr.mxu0 0.0
  %4012 = vmatpush1.msra.mxu0 0.0
  %4013 = vmatprep.subr.mxu0 0.0
  %4014 = vmatpush1.msra.mxu0 0.0
  %4015 = vmatprep.subr.mxu0 0.0
  %4016 = vmatpush1.msra.mxu0 0.0
  %4017 = vmatprep.subr.mxu0 0.0
  %4018 = vmatpush1.msra.mxu0 0.0
  %4019 = vmatprep.subr.mxu0 0.0
  %4020 = vmatpush1.msra.mxu0 0.0
  %4021 = vmatprep.subr.mxu0 0.0
  %4022 = vmatpush1.msra.mxu0 0.0
  %4023 = vmatprep.subr.mxu0 0.0
  %4024 = vmatpush1.msra.mxu0 0.0
  %4025 = vmatprep.subr.mxu0 0.0
  %4026 = vmatpush1.msra.mxu0 0.0
  %4027 = vmatprep.subr.mxu0 0.0
  %4028 = vmatpush1.msra.mxu0 0.0
  %4029 = vmatprep.subr.mxu0 0.0
  %4030 = vmatpush1.msra.mxu0 0.0
  %4031 = vmatprep.subr.mxu0 0.0
  %4032 = vmatpush1.msra.mxu0 0.0
  %4033 = vmatprep.subr.mxu0 0.0
  %4034 = vmatpush1.msra.mxu0 0.0
  %4035 = vmatprep.subr.mxu0 0.0
  %4036 = vmatpush1.msra.mxu0 0.0
  %4037 = vmatprep.subr.mxu0 0.0
  %4038 = vmatpush1.msra.mxu0 0.0
  %4039 = vmatprep.subr.mxu0 0.0
  %4040 = vmatpush1.msra.mxu0 0.0
  %4041 = vmatprep.subr.mxu0 0.0
  %4042 = vmatpush1.msra.mxu0 0.0
  %4043 = vmatprep.subr.mxu0 0.0
  %4044 = vmatpush1.msra.mxu0 0.0
  %4045 = vmatprep.subr.mxu0 0.0
  %4046 = vmatpush1.msra.mxu0 0.0
  %4047 = vmatprep.subr.mxu0 0.0
  %4048 = vmatpush1.msra.mxu0 0.0
  %4049 = vmatprep.subr.mxu0 0.0
  %4050 = vmatpush1.msra.mxu0 0.0
  %4051 = vmatprep.subr.mxu0 0.0
  %4052 = vmatpush1.msra.mxu0 0.0
  %4053 = vmatprep.subr.mxu0 0.0
  %4054 = vmatpush1.msra.mxu0 0.0
  %4055 = vmatprep.subr.mxu0 0.0
  %4056 = vmatpush1.msra.mxu0 0.0
  %4057 = vmatprep.subr.mxu0 0.0
  %4058 = vmatpush1.msra.mxu0 0.0
  %4059 = vmatprep.subr.mxu0 0.0
  %4060 = vmatpush1.msra.mxu0 0.0
  %4061 = vmatprep.subr.mxu0 0.0
  %4062 = vmatpush1.msra.mxu0 0.0
  %4063 = vmatprep.subr.mxu0 0.0
  %4064 = vmatpush1.msra.mxu0 0.0
  %4065 = vmatprep.subr.mxu0 0.0
  %4066 = vmatpush1.msra.mxu0 0.0
  %4067 = vmatprep.mubr.f32.mxu0 0.0
  %v4068 = vand.u32 %v3821, 4294901760
  %v4069 = vsub.f32 %v3821, %v4068
  %4070 = vmatmul.mubr.f32.gmra.mrb[0].mxu0 %v4069
  %v4071 = vpop.f32.mrb[0].mxu0
  %v4072 = vadd.f32 %v3991, %v4071
  %v4073 = vpop.f32.mrb[0].mxu0
  %v4074 = vadd.f32 %v3993, %v4073
  %4075 = vdwg.mxu0
  %v4076 = vand.u32 %v41, 4294901760
  %4077 = vmatprep.subr.mxu0 %v4076
  %v4078 = vand.u32 %v40, 4294901760
  %4079 = vmatpush1.msra.mxu0 %v4078
  %v4080 = vand.u32 %v43, 4294901760
  %4081 = vmatprep.subr.mxu0 %v4080
  %v4082 = vand.u32 %v42, 4294901760
  %4083 = vmatpush1.msra.mxu0 %v4082
  %4084 = vmatprep.subr.mxu0 0.0
  %4085 = vmatpush1.msra.mxu0 0.0
  %4086 = vmatprep.subr.mxu0 0.0
  %4087 = vmatpush1.msra.mxu0 0.0
  %4088 = vmatprep.subr.mxu0 0.0
  %4089 = vmatpush1.msra.mxu0 0.0
  %4090 = vmatprep.subr.mxu0 0.0
  %4091 = vmatpush1.msra.mxu0 0.0
  %4092 = vmatprep.subr.mxu0 0.0
  %4093 = vmatpush1.msra.mxu0 0.0
  %4094 = vmatprep.subr.mxu0 0.0
  %4095 = vmatpush1.msra.mxu0 0.0
  %4096 = vmatprep.subr.mxu0 0.0
  %4097 = vmatpush1.msra.mxu0 0.0
  %4098 = vmatprep.subr.mxu0 0.0
  %4099 = vmatpush1.msra.mxu0 0.0
  %4100 = vmatprep.subr.mxu0 0.0
  %4101 = vmatpush1.msra.mxu0 0.0
  %4102 = vmatprep.subr.mxu0 0.0
  %4103 = vmatpush1.msra.mxu0 0.0
  %4104 = vmatprep.subr.mxu0 0.0
  %4105 = vmatpush1.msra.mxu0 0.0
  %4106 = vmatprep.subr.mxu0 0.0
  %4107 = vmatpush1.msra.mxu0 0.0
  %4108 = vmatprep.subr.mxu0 0.0
  %4109 = vmatpush1.msra.mxu0 0.0
  %4110 = vmatprep.subr.mxu0 0.0
  %4111 = vmatpush1.msra.mxu0 0.0
  %4112 = vmatprep.subr.mxu0 0.0
  %4113 = vmatpush1.msra.mxu0 0.0
  %4114 = vmatprep.subr.mxu0 0.0
  %4115 = vmatpush1.msra.mxu0 0.0
  %4116 = vmatprep.subr.mxu0 0.0
  %4117 = vmatpush1.msra.mxu0 0.0
  %4118 = vmatprep.subr.mxu0 0.0
  %4119 = vmatpush1.msra.mxu0 0.0
  %4120 = vmatprep.subr.mxu0 0.0
  %4121 = vmatpush1.msra.mxu0 0.0
  %4122 = vmatprep.subr.mxu0 0.0
  %4123 = vmatpush1.msra.mxu0 0.0
  %4124 = vmatprep.subr.mxu0 0.0
  %4125 = vmatpush1.msra.mxu0 0.0
  %4126 = vmatprep.subr.mxu0 0.0
  %4127 = vmatpush1.msra.mxu0 0.0
  %4128 = vmatprep.subr.mxu0 0.0
  %4129 = vmatpush1.msra.mxu0 0.0
  %4130 = vmatprep.subr.mxu0 0.0
  %4131 = vmatpush1.msra.mxu0 0.0
  %4132 = vmatprep.subr.mxu0 0.0
  %4133 = vmatpush1.msra.mxu0 0.0
  %4134 = vmatprep.subr.mxu0 0.0
  %4135 = vmatpush1.msra.mxu0 0.0
  %4136 = vmatprep.subr.mxu0 0.0
  %4137 = vmatpush1.msra.mxu0 0.0
  %4138 = vmatprep.subr.mxu0 0.0
  %4139 = vmatpush1.msra.mxu0 0.0
  %4140 = vmatprep.subr.mxu0 0.0
  %4141 = vmatpush1.msra.mxu0 0.0
  %4142 = vmatprep.subr.mxu0 0.0
  %4143 = vmatpush1.msra.mxu0 0.0
  %4144 = vmatprep.mubr.f32.mxu0 0.0
  %v4145 = vand.u32 %v3821, 4294901760
  %v4146 = vsub.f32 %v3821, %v4145
  %v4147 = vand.u32 %v4146, 4294901760
  %4148 = vmatmul.mubr.f32.gmra.mrb[0].mxu0 %v4147
  %v4149 = vpop.f32.mrb[0].mxu0
  %v4150 = vadd.f32 %v4072, %v4149
  %v4151 = vpop.f32.mrb[0].mxu0
  %v4152 = vadd.f32 %v4074, %v4151
  %4153 = vdwg.mxu0
  %v4154 = vand.u32 %v41, 4294901760
  %v4155 = vsub.f32 %v41, %v4154
  %v4156 = vand.u32 %v4155, 4294901760
  %4157 = vmatprep.subr.mxu0 %v4156
  %v4158 = vand.u32 %v40, 4294901760
  %v4159 = vsub.f32 %v40, %v4158
  %v4160 = vand.u32 %v4159, 4294901760
  %4161 = vmatpush1.msra.mxu0 %v4160
  %v4162 = vand.u32 %v43, 4294901760
  %v4163 = vsub.f32 %v43, %v4162
  %v4164 = vand.u32 %v4163, 4294901760
  %4165 = vmatprep.subr.mxu0 %v4164
  %v4166 = vand.u32 %v42, 4294901760
  %v4167 = vsub.f32 %v42, %v4166
  %v4168 = vand.u32 %v4167, 4294901760
  %4169 = vmatpush1.msra.mxu0 %v4168
  %4170 = vmatprep.subr.mxu0 0.0
  %4171 = vmatpush1.msra.mxu0 0.0
  %4172 = vmatprep.subr.mxu0 0.0
  %4173 = vmatpush1.msra.mxu0 0.0
  %4174 = vmatprep.subr.mxu0 0.0
  %4175 = vmatpush1.msra.mxu0 0.0
  %4176 = vmatprep.subr.mxu0 0.0
  %4177 = vmatpush1.msra.mxu0 0.0
  %4178 = vmatprep.subr.mxu0 0.0
  %4179 = vmatpush1.msra.mxu0 0.0
  %4180 = vmatprep.subr.mxu0 0.0
  %4181 = vmatpush1.msra.mxu0 0.0
  %4182 = vmatprep.subr.mxu0 0.0
  %4183 = vmatpush1.msra.mxu0 0.0
  %4184 = vmatprep.subr.mxu0 0.0
  %4185 = vmatpush1.msra.mxu0 0.0
  %4186 = vmatprep.subr.mxu0 0.0
  %4187 = vmatpush1.msra.mxu0 0.0
  %4188 = vmatprep.subr.mxu0 0.0
  %4189 = vmatpush1.msra.mxu0 0.0
  %4190 = vmatprep.subr.mxu0 0.0
  %4191 = vmatpush1.msra.mxu0 0.0
  %4192 = vmatprep.subr.mxu0 0.0
  %4193 = vmatpush1.msra.mxu0 0.0
  %4194 = vmatprep.subr.mxu0 0.0
  %4195 = vmatpush1.msra.mxu0 0.0
  %4196 = vmatprep.subr.mxu0 0.0
  %4197 = vmatpush1.msra.mxu0 0.0
  %4198 = vmatprep.subr.mxu0 0.0
  %4199 = vmatpush1.msra.mxu0 0.0
  %4200 = vmatprep.subr.mxu0 0.0
  %4201 = vmatpush1.msra.mxu0 0.0
  %4202 = vmatprep.subr.mxu0 0.0
  %4203 = vmatpush1.msra.mxu0 0.0
  %4204 = vmatprep.subr.mxu0 0.0
  %4205 = vmatpush1.msra.mxu0 0.0
  %4206 = vmatprep.subr.mxu0 0.0
  %4207 = vmatpush1.msra.mxu0 0.0
  %4208 = vmatprep.subr.mxu0 0.0
  %4209 = vmatpush1.msra.mxu0 0.0
  %4210 = vmatprep.subr.mxu0 0.0
  %4211 = vmatpush1.msra.mxu0 0.0
  %4212 = vmatprep.subr.mxu0 0.0
  %4213 = vmatpush1.msra.mxu0 0.0
  %4214 = vmatprep.subr.mxu0 0.0
  %4215 = vmatpush1.msra.mxu0 0.0
  %4216 = vmatprep.subr.mxu0 0.0
  %4217 = vmatpush1.msra.mxu0 0.0
  %4218 = vmatprep.subr.mxu0 0.0
  %4219 = vmatpush1.msra.mxu0 0.0
  %4220 = vmatprep.subr.mxu0 0.0
  %4221 = vmatpush1.msra.mxu0 0.0
  %4222 = vmatprep.subr.mxu0 0.0
  %4223 = vmatpush1.msra.mxu0 0.0
  %4224 = vmatprep.subr.mxu0 0.0
  %4225 = vmatpush1.msra.mxu0 0.0
  %4226 = vmatprep.subr.mxu0 0.0
  %4227 = vmatpush1.msra.mxu0 0.0
  %4228 = vmatprep.subr.mxu0 0.0
  %4229 = vmatpush1.msra.mxu0 0.0
  %4230 = vmatprep.mubr.f32.mxu0 0.0
  %v4231 = vand.u32 %v3821, 4294901760
  %4232 = vmatmul.mubr.f32.gmra.mrb[0].mxu0 %v4231
  %v4233 = vpop.f32.mrb[0].mxu0
  %v4234 = vadd.f32 %v4150, %v4233
  %v4235 = vpop.f32.mrb[0].mxu0
  %v4236 = vadd.f32 %v4152, %v4235
  %4237 = vdwg.mxu0
  %v4238 = vand.u32 %v41, 4294901760
  %4239 = vmatprep.subr.mxu0 %v4238
  %v4240 = vand.u32 %v40, 4294901760
  %4241 = vmatpush1.msra.mxu0 %v4240
  %v4242 = vand.u32 %v43, 4294901760
  %4243 = vmatprep.subr.mxu0 %v4242
  %v4244 = vand.u32 %v42, 4294901760
  %4245 = vmatpush1.msra.mxu0 %v4244
  %4246 = vmatprep.subr.mxu0 0.0
  %4247 = vmatpush1.msra.mxu0 0.0
  %4248 = vmatprep.subr.mxu0 0.0
  %4249 = vmatpush1.msra.mxu0 0.0
  %4250 = vmatprep.subr.mxu0 0.0
  %4251 = vmatpush1.msra.mxu0 0.0
  %4252 = vmatprep.subr.mxu0 0.0
  %4253 = vmatpush1.msra.mxu0 0.0
  %4254 = vmatprep.subr.mxu0 0.0
  %4255 = vmatpush1.msra.mxu0 0.0
  %4256 = vmatprep.subr.mxu0 0.0
  %4257 = vmatpush1.msra.mxu0 0.0
  %4258 = vmatprep.subr.mxu0 0.0
  %4259 = vmatpush1.msra.mxu0 0.0
  %4260 = vmatprep.subr.mxu0 0.0
  %4261 = vmatpush1.msra.mxu0 0.0
  %4262 = vmatprep.subr.mxu0 0.0
  %4263 = vmatpush1.msra.mxu0 0.0
  %4264 = vmatprep.subr.mxu0 0.0
  %4265 = vmatpush1.msra.mxu0 0.0
  %4266 = vmatprep.subr.mxu0 0.0
  %4267 = vmatpush1.msra.mxu0 0.0
  %4268 = vmatprep.subr.mxu0 0.0
  %4269 = vmatpush1.msra.mxu0 0.0
  %4270 = vmatprep.subr.mxu0 0.0
  %4271 = vmatpush1.msra.mxu0 0.0
  %4272 = vmatprep.subr.mxu0 0.0
  %4273 = vmatpush1.msra.mxu0 0.0
  %4274 = vmatprep.subr.mxu0 0.0
  %4275 = vmatpush1.msra.mxu0 0.0
  %4276 = vmatprep.subr.mxu0 0.0
  %4277 = vmatpush1.msra.mxu0 0.0
  %4278 = vmatprep.subr.mxu0 0.0
  %4279 = vmatpush1.msra.mxu0 0.0
  %4280 = vmatprep.subr.mxu0 0.0
  %4281 = vmatpush1.msra.mxu0 0.0
  %4282 = vmatprep.subr.mxu0 0.0
  %4283 = vmatpush1.msra.mxu0 0.0
  %4284 = vmatprep.subr.mxu0 0.0
  %4285 = vmatpush1.msra.mxu0 0.0
  %4286 = vmatprep.subr.mxu0 0.0
  %4287 = vmatpush1.msra.mxu0 0.0
  %4288 = vmatprep.subr.mxu0 0.0
  %4289 = vmatpush1.msra.mxu0 0.0
  %4290 = vmatprep.subr.mxu0 0.0
  %4291 = vmatpush1.msra.mxu0 0.0
  %4292 = vmatprep.subr.mxu0 0.0
  %4293 = vmatpush1.msra.mxu0 0.0
  %4294 = vmatprep.subr.mxu0 0.0
  %4295 = vmatpush1.msra.mxu0 0.0
  %4296 = vmatprep.subr.mxu0 0.0
  %4297 = vmatpush1.msra.mxu0 0.0
  %4298 = vmatprep.subr.mxu0 0.0
  %4299 = vmatpush1.msra.mxu0 0.0
  %4300 = vmatprep.subr.mxu0 0.0
  %4301 = vmatpush1.msra.mxu0 0.0
  %4302 = vmatprep.subr.mxu0 0.0
  %4303 = vmatpush1.msra.mxu0 0.0
  %4304 = vmatprep.subr.mxu0 0.0
  %4305 = vmatpush1.msra.mxu0 0.0
  %4306 = vmatprep.mubr.f32.mxu0 0.0
  %v4307 = vand.u32 %v3821, 4294901760
  %4308 = vmatmul.mubr.f32.gmra.mrb[0].mxu0 %v4307
  %v4309 = vpop.f32.mrb[0].mxu0
  %v4310 = vadd.f32 %v4234, %v4309
  %v4311 = vpop.f32.mrb[0].mxu0
  %v4312 = vadd.f32 %v4236, %v4311
  %4313 = vdwg.mxu0
  %v4314 = vld [vmem:[%s8] sm:$0xff]
  %4316 = vset.pattern.permute.xlu0 0
  %4317 = vperm.xlu0 %4316, %v4314
  %v4318 = vpop.permute.xlu0 %4317
  %v4320 = vadd.f32 %v4310, %v4318
  %v4321 = vadd.f32 %v4312, %v4318
  %v4322 = vmax.f32 %v4320, 0.0
  %v4323 = vmax.f32 %v4321, 0.0
  %4324 = vst [vmem:[%s12] sm:$0xff] %v4322
  %4325 = vst [vmem:[%s12 + $0x8] sm:$0xff] %v4323
  %s4326 = scalar_lea.vmem %s5, 8
  %v4327 = vld [vmem:[%s4326] sm:$0xff]
  %s4328 = scalar_lea.vmem %s7, 8
  %v4329 = vld [vmem:[%s4328] sm:$0xff]
  %v4331 = vsel %vm2429, %v4329, 0
  %v4333 = vand.u32 %v1530, 4294901760
  %4334 = vmatprep.subr.mxu0 %v4333
  %v4335 = vand.u32 %v1529, 4294901760
  %4336 = vmatpush1.msra.mxu0 %v4335
  %4337 = vmatprep.subr.mxu0 0.0
  %4338 = vmatpush1.msra.mxu0 0.0
  %4339 = vmatprep.subr.mxu0 0.0
  %4340 = vmatpush1.msra.mxu0 0.0
  %4341 = vmatprep.subr.mxu0 0.0
  %4342 = vmatpush1.msra.mxu0 0.0
  %4343 = vmatprep.subr.mxu0 0.0
  %4344 = vmatpush1.msra.mxu0 0.0
  %4345 = vmatprep.subr.mxu0 0.0
  %4346 = vmatpush1.msra.mxu0 0.0
  %4347 = vmatprep.subr.mxu0 0.0
  %4348 = vmatpush1.msra.mxu0 0.0
  %4349 = vmatprep.subr.mxu0 0.0
  %4350 = vmatpush1.msra.mxu0 0.0
  %4351 = vmatprep.subr.mxu0 0.0
  %4352 = vmatpush1.msra.mxu0 0.0
  %4353 = vmatprep.subr.mxu0 0.0
  %4354 = vmatpush1.msra.mxu0 0.0
  %4355 = vmatprep.subr.mxu0 0.0
  %4356 = vmatpush1.msra.mxu0 0.0
  %4357 = vmatprep.subr.mxu0 0.0
  %4358 = vmatpush1.msra.mxu0 0.0
  %4359 = vmatprep.subr.mxu0 0.0
  %4360 = vmatpush1.msra.mxu0 0.0
  %4361 = vmatprep.subr.mxu0 0.0
  %4362 = vmatpush1.msra.mxu0 0.0
  %4363 = vmatprep.subr.mxu0 0.0
  %4364 = vmatpush1.msra.mxu0 0.0
  %4365 = vmatprep.subr.mxu0 0.0
  %4366 = vmatpush1.msra.mxu0 0.0
  %4367 = vmatprep.subr.mxu0 0.0
  %4368 = vmatpush1.msra.mxu0 0.0
  %4369 = vmatprep.subr.mxu0 0.0
  %4370 = vmatpush1.msra.mxu0 0.0
  %4371 = vmatprep.subr.mxu0 0.0
  %4372 = vmatpush1.msra.mxu0 0.0
  %4373 = vmatprep.subr.mxu0 0.0
  %4374 = vmatpush1.msra.mxu0 0.0
  %4375 = vmatprep.subr.mxu0 0.0
  %4376 = vmatpush1.msra.mxu0 0.0
  %4377 = vmatprep.subr.mxu0 0.0
  %4378 = vmatpush1.msra.mxu0 0.0
  %4379 = vmatprep.subr.mxu0 0.0
  %4380 = vmatpush1.msra.mxu0 0.0
  %4381 = vmatprep.subr.mxu0 0.0
  %4382 = vmatpush1.msra.mxu0 0.0
  %4383 = vmatprep.subr.mxu0 0.0
  %4384 = vmatpush1.msra.mxu0 0.0
  %4385 = vmatprep.subr.mxu0 0.0
  %4386 = vmatpush1.msra.mxu0 0.0
  %4387 = vmatprep.subr.mxu0 0.0
  %4388 = vmatpush1.msra.mxu0 0.0
  %4389 = vmatprep.subr.mxu0 0.0
  %4390 = vmatpush1.msra.mxu0 0.0
  %4391 = vmatprep.subr.mxu0 0.0
  %4392 = vmatpush1.msra.mxu0 0.0
  %4393 = vmatprep.subr.mxu0 0.0
  %4394 = vmatpush1.msra.mxu0 0.0
  %4395 = vmatprep.subr.mxu0 0.0
  %4396 = vmatpush1.msra.mxu0 0.0
  %4397 = vmatprep.subr.mxu0 0.0
  %4398 = vmatpush1.msra.mxu0 0.0
  %4399 = vmatprep.mubr.f32.mxu0 0.0
  %v4400 = vand.u32 %v4331, 4294901760
  %v4401 = vsub.f32 %v4331, %v4400
  %v4402 = vand.u32 %v4401, 4294901760
  %v4403 = vsub.f32 %v4401, %v4402
  %v4404 = vand.u32 %v4403, 4294901760
  %4405 = vmatmul.mubr.f32.gmra.mrb[0].mxu0 %v4404
  %v4406 = vpop.f32.mrb[0].mxu0
  %v4407 = vadd.f32 0.0, %v4406
  %v4408 = vpop.f32.mrb[0].mxu0
  %v4409 = vadd.f32 0.0, %v4408
  %4410 = vdwg.mxu0
  %v4411 = vand.u32 %v1530, 4294901760
  %v4412 = vsub.f32 %v1530, %v4411
  %v4413 = vand.u32 %v4412, 4294901760
  %v4414 = vsub.f32 %v4412, %v4413
  %v4415 = vand.u32 %v4414, 4294901760
  %4416 = vmatprep.subr.mxu0 %v4415
  %v4417 = vand.u32 %v1529, 4294901760
  %v4418 = vsub.f32 %v1529, %v4417
  %v4419 = vand.u32 %v4418, 4294901760
  %v4420 = vsub.f32 %v4418, %v4419
  %v4421 = vand.u32 %v4420, 4294901760
  %4422 = vmatpush1.msra.mxu0 %v4421
  %4423 = vmatprep.subr.mxu0 0.0
  %4424 = vmatpush1.msra.mxu0 0.0
  %4425 = vmatprep.subr.mxu0 0.0
  %4426 = vmatpush1.msra.mxu0 0.0
  %4427 = vmatprep.subr.mxu0 0.0
  %4428 = vmatpush1.msra.mxu0 0.0
  %4429 = vmatprep.subr.mxu0 0.0
  %4430 = vmatpush1.msra.mxu0 0.0
  %4431 = vmatprep.subr.mxu0 0.0
  %4432 = vmatpush1.msra.mxu0 0.0
  %4433 = vmatprep.subr.mxu0 0.0
  %4434 = vmatpush1.msra.mxu0 0.0
  %4435 = vmatprep.subr.mxu0 0.0
  %4436 = vmatpush1.msra.mxu0 0.0
  %4437 = vmatprep.subr.mxu0 0.0
  %4438 = vmatpush1.msra.mxu0 0.0
  %4439 = vmatprep.subr.mxu0 0.0
  %4440 = vmatpush1.msra.mxu0 0.0
  %4441 = vmatprep.subr.mxu0 0.0
  %4442 = vmatpush1.msra.mxu0 0.0
  %4443 = vmatprep.subr.mxu0 0.0
  %4444 = vmatpush1.msra.mxu0 0.0
  %4445 = vmatprep.subr.mxu0 0.0
  %4446 = vmatpush1.msra.mxu0 0.0
  %4447 = vmatprep.subr.mxu0 0.0
  %4448 = vmatpush1.msra.mxu0 0.0
  %4449 = vmatprep.subr.mxu0 0.0
  %4450 = vmatpush1.msra.mxu0 0.0
  %4451 = vmatprep.subr.mxu0 0.0
  %4452 = vmatpush1.msra.mxu0 0.0
  %4453 = vmatprep.subr.mxu0 0.0
  %4454 = vmatpush1.msra.mxu0 0.0
  %4455 = vmatprep.subr.mxu0 0.0
  %4456 = vmatpush1.msra.mxu0 0.0
  %4457 = vmatprep.subr.mxu0 0.0
  %4458 = vmatpush1.msra.mxu0 0.0
  %4459 = vmatprep.subr.mxu0 0.0
  %4460 = vmatpush1.msra.mxu0 0.0
  %4461 = vmatprep.subr.mxu0 0.0
  %4462 = vmatpush1.msra.mxu0 0.0
  %4463 = vmatprep.subr.mxu0 0.0
  %4464 = vmatpush1.msra.mxu0 0.0
  %4465 = vmatprep.subr.mxu0 0.0
  %4466 = vmatpush1.msra.mxu0 0.0
  %4467 = vmatprep.subr.mxu0 0.0
  %4468 = vmatpush1.msra.mxu0 0.0
  %4469 = vmatprep.subr.mxu0 0.0
  %4470 = vmatpush1.msra.mxu0 0.0
  %4471 = vmatprep.subr.mxu0 0.0
  %4472 = vmatpush1.msra.mxu0 0.0
  %4473 = vmatprep.subr.mxu0 0.0
  %4474 = vmatpush1.msra.mxu0 0.0
  %4475 = vmatprep.subr.mxu0 0.0
  %4476 = vmatpush1.msra.mxu0 0.0
  %4477 = vmatprep.subr.mxu0 0.0
  %4478 = vmatpush1.msra.mxu0 0.0
  %4479 = vmatprep.subr.mxu0 0.0
  %4480 = vmatpush1.msra.mxu0 0.0
  %4481 = vmatprep.subr.mxu0 0.0
  %4482 = vmatpush1.msra.mxu0 0.0
  %4483 = vmatprep.subr.mxu0 0.0
  %4484 = vmatpush1.msra.mxu0 0.0
  %4485 = vmatprep.mubr.f32.mxu0 0.0
  %v4486 = vand.u32 %v4331, 4294901760
  %4487 = vmatmul.mubr.f32.gmra.mrb[0].mxu0 %v4486
  %v4488 = vpop.f32.mrb[0].mxu0
  %v4489 = vadd.f32 %v4407, %v4488
  %v4490 = vpop.f32.mrb[0].mxu0
  %v4491 = vadd.f32 %v4409, %v4490
  %4492 = vdwg.mxu0
  %v4493 = vand.u32 %v1530, 4294901760
  %v4494 = vsub.f32 %v1530, %v4493
  %4495 = vmatprep.subr.mxu0 %v4494
  %v4496 = vand.u32 %v1529, 4294901760
  %v4497 = vsub.f32 %v1529, %v4496
  %4498 = vmatpush1.msra.mxu0 %v4497
  %4499 = vmatprep.subr.mxu0 0.0
  %4500 = vmatpush1.msra.mxu0 0.0
  %4501 = vmatprep.subr.mxu0 0.0
  %4502 = vmatpush1.msra.mxu0 0.0
  %4503 = vmatprep.subr.mxu0 0.0
  %4504 = vmatpush1.msra.mxu0 0.0
  %4505 = vmatprep.subr.mxu0 0.0
  %4506 = vmatpush1.msra.mxu0 0.0
  %4507 = vmatprep.subr.mxu0 0.0
  %4508 = vmatpush1.msra.mxu0 0.0
  %4509 = vmatprep.subr.mxu0 0.0
  %4510 = vmatpush1.msra.mxu0 0.0
  %4511 = vmatprep.subr.mxu0 0.0
  %4512 = vmatpush1.msra.mxu0 0.0
  %4513 = vmatprep.subr.mxu0 0.0
  %4514 = vmatpush1.msra.mxu0 0.0
  %4515 = vmatprep.subr.mxu0 0.0
  %4516 = vmatpush1.msra.mxu0 0.0
  %4517 = vmatprep.subr.mxu0 0.0
  %4518 = vmatpush1.msra.mxu0 0.0
  %4519 = vmatprep.subr.mxu0 0.0
  %4520 = vmatpush1.msra.mxu0 0.0
  %4521 = vmatprep.subr.mxu0 0.0
  %4522 = vmatpush1.msra.mxu0 0.0
  %4523 = vmatprep.subr.mxu0 0.0
  %4524 = vmatpush1.msra.mxu0 0.0
  %4525 = vmatprep.subr.mxu0 0.0
  %4526 = vmatpush1.msra.mxu0 0.0
  %4527 = vmatprep.subr.mxu0 0.0
  %4528 = vmatpush1.msra.mxu0 0.0
  %4529 = vmatprep.subr.mxu0 0.0
  %4530 = vmatpush1.msra.mxu0 0.0
  %4531 = vmatprep.subr.mxu0 0.0
  %4532 = vmatpush1.msra.mxu0 0.0
  %4533 = vmatprep.subr.mxu0 0.0
  %4534 = vmatpush1.msra.mxu0 0.0
  %4535 = vmatprep.subr.mxu0 0.0
  %4536 = vmatpush1.msra.mxu0 0.0
  %4537 = vmatprep.subr.mxu0 0.0
  %4538 = vmatpush1.msra.mxu0 0.0
  %4539 = vmatprep.subr.mxu0 0.0
  %4540 = vmatpush1.msra.mxu0 0.0
  %4541 = vmatprep.subr.mxu0 0.0
  %4542 = vmatpush1.msra.mxu0 0.0
  %4543 = vmatprep.subr.mxu0 0.0
  %4544 = vmatpush1.msra.mxu0 0.0
  %4545 = vmatprep.subr.mxu0 0.0
  %4546 = vmatpush1.msra.mxu0 0.0
  %4547 = vmatprep.subr.mxu0 0.0
  %4548 = vmatpush1.msra.mxu0 0.0
  %4549 = vmatprep.subr.mxu0 0.0
  %4550 = vmatpush1.msra.mxu0 0.0
  %4551 = vmatprep.subr.mxu0 0.0
  %4552 = vmatpush1.msra.mxu0 0.0
  %4553 = vmatprep.subr.mxu0 0.0
  %4554 = vmatpush1.msra.mxu0 0.0
  %4555 = vmatprep.subr.mxu0 0.0
  %4556 = vmatpush1.msra.mxu0 0.0
  %4557 = vmatprep.subr.mxu0 0.0
  %4558 = vmatpush1.msra.mxu0 0.0
  %4559 = vmatprep.subr.mxu0 0.0
  %4560 = vmatpush1.msra.mxu0 0.0
  %4561 = vmatprep.mubr.f32.mxu0 0.0
  %v4562 = vand.u32 %v4331, 4294901760
  %v4563 = vsub.f32 %v4331, %v4562
  %4564 = vmatmul.mubr.f32.gmra.mrb[0].mxu0 %v4563
  %v4565 = vpop.f32.mrb[0].mxu0
  %v4566 = vadd.f32 %v4489, %v4565
  %v4567 = vpop.f32.mrb[0].mxu0
  %v4568 = vadd.f32 %v4491, %v4567
  %4569 = vdwg.mxu0
  %v4570 = vand.u32 %v1530, 4294901760
  %4571 = vmatprep.subr.mxu0 %v4570
  %v4572 = vand.u32 %v1529, 4294901760
  %4573 = vmatpush1.msra.mxu0 %v4572
  %4574 = vmatprep.subr.mxu0 0.0
  %4575 = vmatpush1.msra.mxu0 0.0
  %4576 = vmatprep.subr.mxu0 0.0
  %4577 = vmatpush1.msra.mxu0 0.0
  %4578 = vmatprep.subr.mxu0 0.0
  %4579 = vmatpush1.msra.mxu0 0.0
  %4580 = vmatprep.subr.mxu0 0.0
  %4581 = vmatpush1.msra.mxu0 0.0
  %4582 = vmatprep.subr.mxu0 0.0
  %4583 = vmatpush1.msra.mxu0 0.0
  %4584 = vmatprep.subr.mxu0 0.0
  %4585 = vmatpush1.msra.mxu0 0.0
  %4586 = vmatprep.subr.mxu0 0.0
  %4587 = vmatpush1.msra.mxu0 0.0
  %4588 = vmatprep.subr.mxu0 0.0
  %4589 = vmatpush1.msra.mxu0 0.0
  %4590 = vmatprep.subr.mxu0 0.0
  %4591 = vmatpush1.msra.mxu0 0.0
  %4592 = vmatprep.subr.mxu0 0.0
  %4593 = vmatpush1.msra.mxu0 0.0
  %4594 = vmatprep.subr.mxu0 0.0
  %4595 = vmatpush1.msra.mxu0 0.0
  %4596 = vmatprep.subr.mxu0 0.0
  %4597 = vmatpush1.msra.mxu0 0.0
  %4598 = vmatprep.subr.mxu0 0.0
  %4599 = vmatpush1.msra.mxu0 0.0
  %4600 = vmatprep.subr.mxu0 0.0
  %4601 = vmatpush1.msra.mxu0 0.0
  %4602 = vmatprep.subr.mxu0 0.0
  %4603 = vmatpush1.msra.mxu0 0.0
  %4604 = vmatprep.subr.mxu0 0.0
  %4605 = vmatpush1.msra.mxu0 0.0
  %4606 = vmatprep.subr.mxu0 0.0
  %4607 = vmatpush1.msra.mxu0 0.0
  %4608 = vmatprep.subr.mxu0 0.0
  %4609 = vmatpush1.msra.mxu0 0.0
  %4610 = vmatprep.subr.mxu0 0.0
  %4611 = vmatpush1.msra.mxu0 0.0
  %4612 = vmatprep.subr.mxu0 0.0
  %4613 = vmatpush1.msra.mxu0 0.0
  %4614 = vmatprep.subr.mxu0 0.0
  %4615 = vmatpush1.msra.mxu0 0.0
  %4616 = vmatprep.subr.mxu0 0.0
  %4617 = vmatpush1.msra.mxu0 0.0
  %4618 = vmatprep.subr.mxu0 0.0
  %4619 = vmatpush1.msra.mxu0 0.0
  %4620 = vmatprep.subr.mxu0 0.0
  %4621 = vmatpush1.msra.mxu0 0.0
  %4622 = vmatprep.subr.mxu0 0.0
  %4623 = vmatpush1.msra.mxu0 0.0
  %4624 = vmatprep.subr.mxu0 0.0
  %4625 = vmatpush1.msra.mxu0 0.0
  %4626 = vmatprep.subr.mxu0 0.0
  %4627 = vmatpush1.msra.mxu0 0.0
  %4628 = vmatprep.subr.mxu0 0.0
  %4629 = vmatpush1.msra.mxu0 0.0
  %4630 = vmatprep.subr.mxu0 0.0
  %4631 = vmatpush1.msra.mxu0 0.0
  %4632 = vmatprep.subr.mxu0 0.0
  %4633 = vmatpush1.msra.mxu0 0.0
  %4634 = vmatprep.subr.mxu0 0.0
  %4635 = vmatpush1.msra.mxu0 0.0
  %4636 = vmatprep.mubr.f32.mxu0 0.0
  %v4637 = vand.u32 %v4331, 4294901760
  %v4638 = vsub.f32 %v4331, %v4637
  %v4639 = vand.u32 %v4638, 4294901760
  %4640 = vmatmul.mubr.f32.gmra.mrb[0].mxu0 %v4639
  %v4641 = vpop.f32.mrb[0].mxu0
  %v4642 = vadd.f32 %v4566, %v4641
  %v4643 = vpop.f32.mrb[0].mxu0
  %v4644 = vadd.f32 %v4568, %v4643
  %4645 = vdwg.mxu0
  %v4646 = vand.u32 %v1530, 4294901760
  %v4647 = vsub.f32 %v1530, %v4646
  %v4648 = vand.u32 %v4647, 4294901760
  %4649 = vmatprep.subr.mxu0 %v4648
  %v4650 = vand.u32 %v1529, 4294901760
  %v4651 = vsub.f32 %v1529, %v4650
  %v4652 = vand.u32 %v4651, 4294901760
  %4653 = vmatpush1.msra.mxu0 %v4652
  %4654 = vmatprep.subr.mxu0 0.0
  %4655 = vmatpush1.msra.mxu0 0.0
  %4656 = vmatprep.subr.mxu0 0.0
  %4657 = vmatpush1.msra.mxu0 0.0
  %4658 = vmatprep.subr.mxu0 0.0
  %4659 = vmatpush1.msra.mxu0 0.0
  %4660 = vmatprep.subr.mxu0 0.0
  %4661 = vmatpush1.msra.mxu0 0.0
  %4662 = vmatprep.subr.mxu0 0.0
  %4663 = vmatpush1.msra.mxu0 0.0
  %4664 = vmatprep.subr.mxu0 0.0
  %4665 = vmatpush1.msra.mxu0 0.0
  %4666 = vmatprep.subr.mxu0 0.0
  %4667 = vmatpush1.msra.mxu0 0.0
  %4668 = vmatprep.subr.mxu0 0.0
  %4669 = vmatpush1.msra.mxu0 0.0
  %4670 = vmatprep.subr.mxu0 0.0
  %4671 = vmatpush1.msra.mxu0 0.0
  %4672 = vmatprep.subr.mxu0 0.0
  %4673 = vmatpush1.msra.mxu0 0.0
  %4674 = vmatprep.subr.mxu0 0.0
  %4675 = vmatpush1.msra.mxu0 0.0
  %4676 = vmatprep.subr.mxu0 0.0
  %4677 = vmatpush1.msra.mxu0 0.0
  %4678 = vmatprep.subr.mxu0 0.0
  %4679 = vmatpush1.msra.mxu0 0.0
  %4680 = vmatprep.subr.mxu0 0.0
  %4681 = vmatpush1.msra.mxu0 0.0
  %4682 = vmatprep.subr.mxu0 0.0
  %4683 = vmatpush1.msra.mxu0 0.0
  %4684 = vmatprep.subr.mxu0 0.0
  %4685 = vmatpush1.msra.mxu0 0.0
  %4686 = vmatprep.subr.mxu0 0.0
  %4687 = vmatpush1.msra.mxu0 0.0
  %4688 = vmatprep.subr.mxu0 0.0
  %4689 = vmatpush1.msra.mxu0 0.0
  %4690 = vmatprep.subr.mxu0 0.0
  %4691 = vmatpush1.msra.mxu0 0.0
  %4692 = vmatprep.subr.mxu0 0.0
  %4693 = vmatpush1.msra.mxu0 0.0
  %4694 = vmatprep.subr.mxu0 0.0
  %4695 = vmatpush1.msra.mxu0 0.0
  %4696 = vmatprep.subr.mxu0 0.0
  %4697 = vmatpush1.msra.mxu0 0.0
  %4698 = vmatprep.subr.mxu0 0.0
  %4699 = vmatpush1.msra.mxu0 0.0
  %4700 = vmatprep.subr.mxu0 0.0
  %4701 = vmatpush1.msra.mxu0 0.0
  %4702 = vmatprep.subr.mxu0 0.0
  %4703 = vmatpush1.msra.mxu0 0.0
  %4704 = vmatprep.subr.mxu0 0.0
  %4705 = vmatpush1.msra.mxu0 0.0
  %4706 = vmatprep.subr.mxu0 0.0
  %4707 = vmatpush1.msra.mxu0 0.0
  %4708 = vmatprep.subr.mxu0 0.0
  %4709 = vmatpush1.msra.mxu0 0.0
  %4710 = vmatprep.subr.mxu0 0.0
  %4711 = vmatpush1.msra.mxu0 0.0
  %4712 = vmatprep.subr.mxu0 0.0
  %4713 = vmatpush1.msra.mxu0 0.0
  %4714 = vmatprep.subr.mxu0 0.0
  %4715 = vmatpush1.msra.mxu0 0.0
  %4716 = vmatprep.mubr.f32.mxu0 0.0
  %v4717 = vand.u32 %v4331, 4294901760
  %4718 = vmatmul.mubr.f32.gmra.mrb[0].mxu0 %v4717
  %v4719 = vpop.f32.mrb[0].mxu0
  %v4720 = vadd.f32 %v4642, %v4719
  %v4721 = vpop.f32.mrb[0].mxu0
  %v4722 = vadd.f32 %v4644, %v4721
  %4723 = vdwg.mxu0
  %v4724 = vand.u32 %v1530, 4294901760
  %4725 = vmatprep.subr.mxu0 %v4724
  %v4726 = vand.u32 %v1529, 4294901760
  %4727 = vmatpush1.msra.mxu0 %v4726
  %4728 = vmatprep.subr.mxu0 0.0
  %4729 = vmatpush1.msra.mxu0 0.0
  %4730 = vmatprep.subr.mxu0 0.0
  %4731 = vmatpush1.msra.mxu0 0.0
  %4732 = vmatprep.subr.mxu0 0.0
  %4733 = vmatpush1.msra.mxu0 0.0
  %4734 = vmatprep.subr.mxu0 0.0
  %4735 = vmatpush1.msra.mxu0 0.0
  %4736 = vmatprep.subr.mxu0 0.0
  %4737 = vmatpush1.msra.mxu0 0.0
  %4738 = vmatprep.subr.mxu0 0.0
  %4739 = vmatpush1.msra.mxu0 0.0
  %4740 = vmatprep.subr.mxu0 0.0
  %4741 = vmatpush1.msra.mxu0 0.0
  %4742 = vmatprep.subr.mxu0 0.0
  %4743 = vmatpush1.msra.mxu0 0.0
  %4744 = vmatprep.subr.mxu0 0.0
  %4745 = vmatpush1.msra.mxu0 0.0
  %4746 = vmatprep.subr.mxu0 0.0
  %4747 = vmatpush1.msra.mxu0 0.0
  %4748 = vmatprep.subr.mxu0 0.0
  %4749 = vmatpush1.msra.mxu0 0.0
  %4750 = vmatprep.subr.mxu0 0.0
  %4751 = vmatpush1.msra.mxu0 0.0
  %4752 = vmatprep.subr.mxu0 0.0
  %4753 = vmatpush1.msra.mxu0 0.0
  %4754 = vmatprep.subr.mxu0 0.0
  %4755 = vmatpush1.msra.mxu0 0.0
  %4756 = vmatprep.subr.mxu0 0.0
  %4757 = vmatpush1.msra.mxu0 0.0
  %4758 = vmatprep.subr.mxu0 0.0
  %4759 = vmatpush1.msra.mxu0 0.0
  %4760 = vmatprep.subr.mxu0 0.0
  %4761 = vmatpush1.msra.mxu0 0.0
  %4762 = vmatprep.subr.mxu0 0.0
  %4763 = vmatpush1.msra.mxu0 0.0
  %4764 = vmatprep.subr.mxu0 0.0
  %4765 = vmatpush1.msra.mxu0 0.0
  %4766 = vmatprep.subr.mxu0 0.0
  %4767 = vmatpush1.msra.mxu0 0.0
  %4768 = vmatprep.subr.mxu0 0.0
  %4769 = vmatpush1.msra.mxu0 0.0
  %4770 = vmatprep.subr.mxu0 0.0
  %4771 = vmatpush1.msra.mxu0 0.0
  %4772 = vmatprep.subr.mxu0 0.0
  %4773 = vmatpush1.msra.mxu0 0.0
  %4774 = vmatprep.subr.mxu0 0.0
  %4775 = vmatpush1.msra.mxu0 0.0
  %4776 = vmatprep.subr.mxu0 0.0
  %4777 = vmatpush1.msra.mxu0 0.0
  %4778 = vmatprep.subr.mxu0 0.0
  %4779 = vmatpush1.msra.mxu0 0.0
  %4780 = vmatprep.subr.mxu0 0.0
  %4781 = vmatpush1.msra.mxu0 0.0
  %4782 = vmatprep.subr.mxu0 0.0
  %4783 = vmatpush1.msra.mxu0 0.0
  %4784 = vmatprep.subr.mxu0 0.0
  %4785 = vmatpush1.msra.mxu0 0.0
  %4786 = vmatprep.subr.mxu0 0.0
  %4787 = vmatpush1.msra.mxu0 0.0
  %4788 = vmatprep.subr.mxu0 0.0
  %4789 = vmatpush1.msra.mxu0 0.0
  %4790 = vmatprep.mubr.f32.mxu0 0.0
  %v4791 = vand.u32 %v4331, 4294901760
  %4792 = vmatmul.mubr.f32.gmra.mrb[0].mxu0 %v4791
  %v4793 = vpop.f32.mrb[0].mxu0
  %v4794 = vadd.f32 %v4720, %v4793
  %v4795 = vpop.f32.mrb[0].mxu0
  %v4796 = vadd.f32 %v4722, %v4795
  %4797 = vdwg.mxu0
  %v4799 = vsel %vm55, %v4327, 0
  %v4801 = vand.u32 %v45, 4294901760
  %4802 = vmatprep.subr.mxu0 %v4801
  %v4803 = vand.u32 %v44, 4294901760
  %4804 = vmatpush1.msra.mxu0 %v4803
  %v4805 = vand.u32 %v47, 4294901760
  %4806 = vmatprep.subr.mxu0 %v4805
  %v4807 = vand.u32 %v46, 4294901760
  %4808 = vmatpush1.msra.mxu0 %v4807
  %4809 = vmatprep.subr.mxu0 0.0
  %4810 = vmatpush1.msra.mxu0 0.0
  %4811 = vmatprep.subr.mxu0 0.0
  %4812 = vmatpush1.msra.mxu0 0.0
  %4813 = vmatprep.subr.mxu0 0.0
  %4814 = vmatpush1.msra.mxu0 0.0
  %4815 = vmatprep.subr.mxu0 0.0
  %4816 = vmatpush1.msra.mxu0 0.0
  %4817 = vmatprep.subr.mxu0 0.0
  %4818 = vmatpush1.msra.mxu0 0.0
  %4819 = vmatprep.subr.mxu0 0.0
  %4820 = vmatpush1.msra.mxu0 0.0
  %4821 = vmatprep.subr.mxu0 0.0
  %4822 = vmatpush1.msra.mxu0 0.0
  %4823 = vmatprep.subr.mxu0 0.0
  %4824 = vmatpush1.msra.mxu0 0.0
  %4825 = vmatprep.subr.mxu0 0.0
  %4826 = vmatpush1.msra.mxu0 0.0
  %4827 = vmatprep.subr.mxu0 0.0
  %4828 = vmatpush1.msra.mxu0 0.0
  %4829 = vmatprep.subr.mxu0 0.0
  %4830 = vmatpush1.msra.mxu0 0.0
  %4831 = vmatprep.subr.mxu0 0.0
  %4832 = vmatpush1.msra.mxu0 0.0
  %4833 = vmatprep.subr.mxu0 0.0
  %4834 = vmatpush1.msra.mxu0 0.0
  %4835 = vmatprep.subr.mxu0 0.0
  %4836 = vmatpush1.msra.mxu0 0.0
  %4837 = vmatprep.subr.mxu0 0.0
  %4838 = vmatpush1.msra.mxu0 0.0
  %4839 = vmatprep.subr.mxu0 0.0
  %4840 = vmatpush1.msra.mxu0 0.0
  %4841 = vmatprep.subr.mxu0 0.0
  %4842 = vmatpush1.msra.mxu0 0.0
  %4843 = vmatprep.subr.mxu0 0.0
  %4844 = vmatpush1.msra.mxu0 0.0
  %4845 = vmatprep.subr.mxu0 0.0
  %4846 = vmatpush1.msra.mxu0 0.0
  %4847 = vmatprep.subr.mxu0 0.0
  %4848 = vmatpush1.msra.mxu0 0.0
  %4849 = vmatprep.subr.mxu0 0.0
  %4850 = vmatpush1.msra.mxu0 0.0
  %4851 = vmatprep.subr.mxu0 0.0
  %4852 = vmatpush1.msra.mxu0 0.0
  %4853 = vmatprep.subr.mxu0 0.0
  %4854 = vmatpush1.msra.mxu0 0.0
  %4855 = vmatprep.subr.mxu0 0.0
  %4856 = vmatpush1.msra.mxu0 0.0
  %4857 = vmatprep.subr.mxu0 0.0
  %4858 = vmatpush1.msra.mxu0 0.0
  %4859 = vmatprep.subr.mxu0 0.0
  %4860 = vmatpush1.msra.mxu0 0.0
  %4861 = vmatprep.subr.mxu0 0.0
  %4862 = vmatpush1.msra.mxu0 0.0
  %4863 = vmatprep.subr.mxu0 0.0
  %4864 = vmatpush1.msra.mxu0 0.0
  %4865 = vmatprep.subr.mxu0 0.0
  %4866 = vmatpush1.msra.mxu0 0.0
  %4867 = vmatprep.subr.mxu0 0.0
  %4868 = vmatpush1.msra.mxu0 0.0
  %4869 = vmatprep.mubr.f32.mxu0 0.0
  %v4870 = vand.u32 %v4799, 4294901760
  %v4871 = vsub.f32 %v4799, %v4870
  %v4872 = vand.u32 %v4871, 4294901760
  %v4873 = vsub.f32 %v4871, %v4872
  %v4874 = vand.u32 %v4873, 4294901760
  %4875 = vmatmul.mubr.f32.gmra.mrb[0].mxu0 %v4874
  %v4876 = vpop.f32.mrb[0].mxu0
  %v4877 = vadd.f32 %v4794, %v4876
  %v4878 = vpop.f32.mrb[0].mxu0
  %v4879 = vadd.f32 %v4796, %v4878
  %4880 = vdwg.mxu0
  %v4881 = vand.u32 %v45, 4294901760
  %v4882 = vsub.f32 %v45, %v4881
  %v4883 = vand.u32 %v4882, 4294901760
  %v4884 = vsub.f32 %v4882, %v4883
  %v4885 = vand.u32 %v4884, 4294901760
  %4886 = vmatprep.subr.mxu0 %v4885
  %v4887 = vand.u32 %v44, 4294901760
  %v4888 = vsub.f32 %v44, %v4887
  %v4889 = vand.u32 %v4888, 4294901760
  %v4890 = vsub.f32 %v4888, %v4889
  %v4891 = vand.u32 %v4890, 4294901760
  %4892 = vmatpush1.msra.mxu0 %v4891
  %v4893 = vand.u32 %v47, 4294901760
  %v4894 = vsub.f32 %v47, %v4893
  %v4895 = vand.u32 %v4894, 4294901760
  %v4896 = vsub.f32 %v4894, %v4895
  %v4897 = vand.u32 %v4896, 4294901760
  %4898 = vmatprep.subr.mxu0 %v4897
  %v4899 = vand.u32 %v46, 4294901760
  %v4900 = vsub.f32 %v46, %v4899
  %v4901 = vand.u32 %v4900, 4294901760
  %v4902 = vsub.f32 %v4900, %v4901
  %v4903 = vand.u32 %v4902, 4294901760
  %4904 = vmatpush1.msra.mxu0 %v4903
  %4905 = vmatprep.subr.mxu0 0.0
  %4906 = vmatpush1.msra.mxu0 0.0
  %4907 = vmatprep.subr.mxu0 0.0
  %4908 = vmatpush1.msra.mxu0 0.0
  %4909 = vmatprep.subr.mxu0 0.0
  %4910 = vmatpush1.msra.mxu0 0.0
  %4911 = vmatprep.subr.mxu0 0.0
  %4912 = vmatpush1.msra.mxu0 0.0
  %4913 = vmatprep.subr.mxu0 0.0
  %4914 = vmatpush1.msra.mxu0 0.0
  %4915 = vmatprep.subr.mxu0 0.0
  %4916 = vmatpush1.msra.mxu0 0.0
  %4917 = vmatprep.subr.mxu0 0.0
  %4918 = vmatpush1.msra.mxu0 0.0
  %4919 = vmatprep.subr.mxu0 0.0
  %4920 = vmatpush1.msra.mxu0 0.0
  %4921 = vmatprep.subr.mxu0 0.0
  %4922 = vmatpush1.msra.mxu0 0.0
  %4923 = vmatprep.subr.mxu0 0.0
  %4924 = vmatpush1.msra.mxu0 0.0
  %4925 = vmatprep.subr.mxu0 0.0
  %4926 = vmatpush1.msra.mxu0 0.0
  %4927 = vmatprep.subr.mxu0 0.0
  %4928 = vmatpush1.msra.mxu0 0.0
  %4929 = vmatprep.subr.mxu0 0.0
  %4930 = vmatpush1.msra.mxu0 0.0
  %4931 = vmatprep.subr.mxu0 0.0
  %4932 = vmatpush1.msra.mxu0 0.0
  %4933 = vmatprep.subr.mxu0 0.0
  %4934 = vmatpush1.msra.mxu0 0.0
  %4935 = vmatprep.subr.mxu0 0.0
  %4936 = vmatpush1.msra.mxu0 0.0
  %4937 = vmatprep.subr.mxu0 0.0
  %4938 = vmatpush1.msra.mxu0 0.0
  %4939 = vmatprep.subr.mxu0 0.0
  %4940 = vmatpush1.msra.mxu0 0.0
  %4941 = vmatprep.subr.mxu0 0.0
  %4942 = vmatpush1.msra.mxu0 0.0
  %4943 = vmatprep.subr.mxu0 0.0
  %4944 = vmatpush1.msra.mxu0 0.0
  %4945 = vmatprep.subr.mxu0 0.0
  %4946 = vmatpush1.msra.mxu0 0.0
  %4947 = vmatprep.subr.mxu0 0.0
  %4948 = vmatpush1.msra.mxu0 0.0
  %4949 = vmatprep.subr.mxu0 0.0
  %4950 = vmatpush1.msra.mxu0 0.0
  %4951 = vmatprep.subr.mxu0 0.0
  %4952 = vmatpush1.msra.mxu0 0.0
  %4953 = vmatprep.subr.mxu0 0.0
  %4954 = vmatpush1.msra.mxu0 0.0
  %4955 = vmatprep.subr.mxu0 0.0
  %4956 = vmatpush1.msra.mxu0 0.0
  %4957 = vmatprep.subr.mxu0 0.0
  %4958 = vmatpush1.msra.mxu0 0.0
  %4959 = vmatprep.subr.mxu0 0.0
  %4960 = vmatpush1.msra.mxu0 0.0
  %4961 = vmatprep.subr.mxu0 0.0
  %4962 = vmatpush1.msra.mxu0 0.0
  %4963 = vmatprep.subr.mxu0 0.0
  %4964 = vmatpush1.msra.mxu0 0.0
  %4965 = vmatprep.mubr.f32.mxu0 0.0
  %v4966 = vand.u32 %v4799, 4294901760
  %4967 = vmatmul.mubr.f32.gmra.mrb[0].mxu0 %v4966
  %v4968 = vpop.f32.mrb[0].mxu0
  %v4969 = vadd.f32 %v4877, %v4968
  %v4970 = vpop.f32.mrb[0].mxu0
  %v4971 = vadd.f32 %v4879, %v4970
  %4972 = vdwg.mxu0
  %v4973 = vand.u32 %v45, 4294901760
  %v4974 = vsub.f32 %v45, %v4973
  %4975 = vmatprep.subr.mxu0 %v4974
  %v4976 = vand.u32 %v44, 4294901760
  %v4977 = vsub.f32 %v44, %v4976
  %4978 = vmatpush1.msra.mxu0 %v4977
  %v4979 = vand.u32 %v47, 4294901760
  %v4980 = vsub.f32 %v47, %v4979
  %4981 = vmatprep.subr.mxu0 %v4980
  %v4982 = vand.u32 %v46, 4294901760
  %v4983 = vsub.f32 %v46, %v4982
  %4984 = vmatpush1.msra.mxu0 %v4983
  %4985 = vmatprep.subr.mxu0 0.0
  %4986 = vmatpush1.msra.mxu0 0.0
  %4987 = vmatprep.subr.mxu0 0.0
  %4988 = vmatpush1.msra.mxu0 0.0
  %4989 = vmatprep.subr.mxu0 0.0
  %4990 = vmatpush1.msra.mxu0 0.0
  %4991 = vmatprep.subr.mxu0 0.0
  %4992 = vmatpush1.msra.mxu0 0.0
  %4993 = vmatprep.subr.mxu0 0.0
  %4994 = vmatpush1.msra.mxu0 0.0
  %4995 = vmatprep.subr.mxu0 0.0
  %4996 = vmatpush1.msra.mxu0 0.0
  %4997 = vmatprep.subr.mxu0 0.0
  %4998 = vmatpush1.msra.mxu0 0.0
  %4999 = vmatprep.subr.mxu0 0.0
  %5000 = vmatpush1.msra.mxu0 0.0
  %5001 = vmatprep.subr.mxu0 0.0
  %5002 = vmatpush1.msra.mxu0 0.0
  %5003 = vmatprep.subr.mxu0 0.0
  %5004 = vmatpush1.msra.mxu0 0.0
  %5005 = vmatprep.subr.mxu0 0.0
  %5006 = vmatpush1.msra.mxu0 0.0
  %5007 = vmatprep.subr.mxu0 0.0
  %5008 = vmatpush1.msra.mxu0 0.0
  %5009 = vmatprep.subr.mxu0 0.0
  %5010 = vmatpush1.msra.mxu0 0.0
  %5011 = vmatprep.subr.mxu0 0.0
  %5012 = vmatpush1.msra.mxu0 0.0
  %5013 = vmatprep.subr.mxu0 0.0
  %5014 = vmatpush1.msra.mxu0 0.0
  %5015 = vmatprep.subr.mxu0 0.0
  %5016 = vmatpush1.msra.mxu0 0.0
  %5017 = vmatprep.subr.mxu0 0.0
  %5018 = vmatpush1.msra.mxu0 0.0
  %5019 = vmatprep.subr.mxu0 0.0
  %5020 = vmatpush1.msra.mxu0 0.0
  %5021 = vmatprep.subr.mxu0 0.0
  %5022 = vmatpush1.msra.mxu0 0.0
  %5023 = vmatprep.subr.mxu0 0.0
  %5024 = vmatpush1.msra.mxu0 0.0
  %5025 = vmatprep.subr.mxu0 0.0
  %5026 = vmatpush1.msra.mxu0 0.0
  %5027 = vmatprep.subr.mxu0 0.0
  %5028 = vmatpush1.msra.mxu0 0.0
  %5029 = vmatprep.subr.mxu0 0.0
  %5030 = vmatpush1.msra.mxu0 0.0
  %5031 = vmatprep.subr.mxu0 0.0
  %5032 = vmatpush1.msra.mxu0 0.0
  %5033 = vmatprep.subr.mxu0 0.0
  %5034 = vmatpush1.msra.mxu0 0.0
  %5035 = vmatprep.subr.mxu0 0.0
  %5036 = vmatpush1.msra.mxu0 0.0
  %5037 = vmatprep.subr.mxu0 0.0
  %5038 = vmatpush1.msra.mxu0 0.0
  %5039 = vmatprep.subr.mxu0 0.0
  %5040 = vmatpush1.msra.mxu0 0.0
  %5041 = vmatprep.subr.mxu0 0.0
  %5042 = vmatpush1.msra.mxu0 0.0
  %5043 = vmatprep.subr.mxu0 0.0
  %5044 = vmatpush1.msra.mxu0 0.0
  %5045 = vmatprep.mubr.f32.mxu0 0.0
  %v5046 = vand.u32 %v4799, 4294901760
  %v5047 = vsub.f32 %v4799, %v5046
  %5048 = vmatmul.mubr.f32.gmra.mrb[0].mxu0 %v5047
  %v5049 = vpop.f32.mrb[0].mxu0
  %v5050 = vadd.f32 %v4969, %v5049
  %v5051 = vpop.f32.mrb[0].mxu0
  %v5052 = vadd.f32 %v4971, %v5051
  %5053 = vdwg.mxu0
  %v5054 = vand.u32 %v45, 4294901760
  %5055 = vmatprep.subr.mxu0 %v5054
  %v5056 = vand.u32 %v44, 4294901760
  %5057 = vmatpush1.msra.mxu0 %v5056
  %v5058 = vand.u32 %v47, 4294901760
  %5059 = vmatprep.subr.mxu0 %v5058
  %v5060 = vand.u32 %v46, 4294901760
  %5061 = vmatpush1.msra.mxu0 %v5060
  %5062 = vmatprep.subr.mxu0 0.0
  %5063 = vmatpush1.msra.mxu0 0.0
  %5064 = vmatprep.subr.mxu0 0.0
  %5065 = vmatpush1.msra.mxu0 0.0
  %5066 = vmatprep.subr.mxu0 0.0
  %5067 = vmatpush1.msra.mxu0 0.0
  %5068 = vmatprep.subr.mxu0 0.0
  %5069 = vmatpush1.msra.mxu0 0.0
  %5070 = vmatprep.subr.mxu0 0.0
  %5071 = vmatpush1.msra.mxu0 0.0
  %5072 = vmatprep.subr.mxu0 0.0
  %5073 = vmatpush1.msra.mxu0 0.0
  %5074 = vmatprep.subr.mxu0 0.0
  %5075 = vmatpush1.msra.mxu0 0.0
  %5076 = vmatprep.subr.mxu0 0.0
  %5077 = vmatpush1.msra.mxu0 0.0
  %5078 = vmatprep.subr.mxu0 0.0
  %5079 = vmatpush1.msra.mxu0 0.0
  %5080 = vmatprep.subr.mxu0 0.0
  %5081 = vmatpush1.msra.mxu0 0.0
  %5082 = vmatprep.subr.mxu0 0.0
  %5083 = vmatpush1.msra.mxu0 0.0
  %5084 = vmatprep.subr.mxu0 0.0
  %5085 = vmatpush1.msra.mxu0 0.0
  %5086 = vmatprep.subr.mxu0 0.0
  %5087 = vmatpush1.msra.mxu0 0.0
  %5088 = vmatprep.subr.mxu0 0.0
  %5089 = vmatpush1.msra.mxu0 0.0
  %5090 = vmatprep.subr.mxu0 0.0
  %5091 = vmatpush1.msra.mxu0 0.0
  %5092 = vmatprep.subr.mxu0 0.0
  %5093 = vmatpush1.msra.mxu0 0.0
  %5094 = vmatprep.subr.mxu0 0.0
  %5095 = vmatpush1.msra.mxu0 0.0
  %5096 = vmatprep.subr.mxu0 0.0
  %5097 = vmatpush1.msra.mxu0 0.0
  %5098 = vmatprep.subr.mxu0 0.0
  %5099 = vmatpush1.msra.mxu0 0.0
  %5100 = vmatprep.subr.mxu0 0.0
  %5101 = vmatpush1.msra.mxu0 0.0
  %5102 = vmatprep.subr.mxu0 0.0
  %5103 = vmatpush1.msra.mxu0 0.0
  %5104 = vmatprep.subr.mxu0 0.0
  %5105 = vmatpush1.msra.mxu0 0.0
  %5106 = vmatprep.subr.mxu0 0.0
  %5107 = vmatpush1.msra.mxu0 0.0
  %5108 = vmatprep.subr.mxu0 0.0
  %5109 = vmatpush1.msra.mxu0 0.0
  %5110 = vmatprep.subr.mxu0 0.0
  %5111 = vmatpush1.msra.mxu0 0.0
  %5112 = vmatprep.subr.mxu0 0.0
  %5113 = vmatpush1.msra.mxu0 0.0
  %5114 = vmatprep.subr.mxu0 0.0
  %5115 = vmatpush1.msra.mxu0 0.0
  %5116 = vmatprep.subr.mxu0 0.0
  %5117 = vmatpush1.msra.mxu0 0.0
  %5118 = vmatprep.subr.mxu0 0.0
  %5119 = vmatpush1.msra.mxu0 0.0
  %5120 = vmatprep.subr.mxu0 0.0
  %5121 = vmatpush1.msra.mxu0 0.0
  %5122 = vmatprep.mubr.f32.mxu0 0.0
  %v5123 = vand.u32 %v4799, 4294901760
  %v5124 = vsub.f32 %v4799, %v5123
  %v5125 = vand.u32 %v5124, 4294901760
  %5126 = vmatmul.mubr.f32.gmra.mrb[0].mxu0 %v5125
  %v5127 = vpop.f32.mrb[0].mxu0
  %v5128 = vadd.f32 %v5050, %v5127
  %v5129 = vpop.f32.mrb[0].mxu0
  %v5130 = vadd.f32 %v5052, %v5129
  %5131 = vdwg.mxu0
  %v5132 = vand.u32 %v45, 4294901760
  %v5133 = vsub.f32 %v45, %v5132
  %v5134 = vand.u32 %v5133, 4294901760
  %5135 = vmatprep.subr.mxu0 %v5134
  %v5136 = vand.u32 %v44, 4294901760
  %v5137 = vsub.f32 %v44, %v5136
  %v5138 = vand.u32 %v5137, 4294901760
  %5139 = vmatpush1.msra.mxu0 %v5138
  %v5140 = vand.u32 %v47, 4294901760
  %v5141 = vsub.f32 %v47, %v5140
  %v5142 = vand.u32 %v5141, 4294901760
  %5143 = vmatprep.subr.mxu0 %v5142
  %v5144 = vand.u32 %v46, 4294901760
  %v5145 = vsub.f32 %v46, %v5144
  %v5146 = vand.u32 %v5145, 4294901760
  %5147 = vmatpush1.msra.mxu0 %v5146
  %5148 = vmatprep.subr.mxu0 0.0
  %5149 = vmatpush1.msra.mxu0 0.0
  %5150 = vmatprep.subr.mxu0 0.0
  %5151 = vmatpush1.msra.mxu0 0.0
  %5152 = vmatprep.subr.mxu0 0.0
  %5153 = vmatpush1.msra.mxu0 0.0
  %5154 = vmatprep.subr.mxu0 0.0
  %5155 = vmatpush1.msra.mxu0 0.0
  %5156 = vmatprep.subr.mxu0 0.0
  %5157 = vmatpush1.msra.mxu0 0.0
  %5158 = vmatprep.subr.mxu0 0.0
  %5159 = vmatpush1.msra.mxu0 0.0
  %5160 = vmatprep.subr.mxu0 0.0
  %5161 = vmatpush1.msra.mxu0 0.0
  %5162 = vmatprep.subr.mxu0 0.0
  %5163 = vmatpush1.msra.mxu0 0.0
  %5164 = vmatprep.subr.mxu0 0.0
  %5165 = vmatpush1.msra.mxu0 0.0
  %5166 = vmatprep.subr.mxu0 0.0
  %5167 = vmatpush1.msra.mxu0 0.0
  %5168 = vmatprep.subr.mxu0 0.0
  %5169 = vmatpush1.msra.mxu0 0.0
  %5170 = vmatprep.subr.mxu0 0.0
  %5171 = vmatpush1.msra.mxu0 0.0
  %5172 = vmatprep.subr.mxu0 0.0
  %5173 = vmatpush1.msra.mxu0 0.0
  %5174 = vmatprep.subr.mxu0 0.0
  %5175 = vmatpush1.msra.mxu0 0.0
  %5176 = vmatprep.subr.mxu0 0.0
  %5177 = vmatpush1.msra.mxu0 0.0
  %5178 = vmatprep.subr.mxu0 0.0
  %5179 = vmatpush1.msra.mxu0 0.0
  %5180 = vmatprep.subr.mxu0 0.0
  %5181 = vmatpush1.msra.mxu0 0.0
  %5182 = vmatprep.subr.mxu0 0.0
  %5183 = vmatpush1.msra.mxu0 0.0
  %5184 = vmatprep.subr.mxu0 0.0
  %5185 = vmatpush1.msra.mxu0 0.0
  %5186 = vmatprep.subr.mxu0 0.0
  %5187 = vmatpush1.msra.mxu0 0.0
  %5188 = vmatprep.subr.mxu0 0.0
  %5189 = vmatpush1.msra.mxu0 0.0
  %5190 = vmatprep.subr.mxu0 0.0
  %5191 = vmatpush1.msra.mxu0 0.0
  %5192 = vmatprep.subr.mxu0 0.0
  %5193 = vmatpush1.msra.mxu0 0.0
  %5194 = vmatprep.subr.mxu0 0.0
  %5195 = vmatpush1.msra.mxu0 0.0
  %5196 = vmatprep.subr.mxu0 0.0
  %5197 = vmatpush1.msra.mxu0 0.0
  %5198 = vmatprep.subr.mxu0 0.0
  %5199 = vmatpush1.msra.mxu0 0.0
  %5200 = vmatprep.subr.mxu0 0.0
  %5201 = vmatpush1.msra.mxu0 0.0
  %5202 = vmatprep.subr.mxu0 0.0
  %5203 = vmatpush1.msra.mxu0 0.0
  %5204 = vmatprep.subr.mxu0 0.0
  %5205 = vmatpush1.msra.mxu0 0.0
  %5206 = vmatprep.subr.mxu0 0.0
  %5207 = vmatpush1.msra.mxu0 0.0
  %5208 = vmatprep.mubr.f32.mxu0 0.0
  %v5209 = vand.u32 %v4799, 4294901760
  %5210 = vmatmul.mubr.f32.gmra.mrb[0].mxu0 %v5209
  %v5211 = vpop.f32.mrb[0].mxu0
  %v5212 = vadd.f32 %v5128, %v5211
  %v5213 = vpop.f32.mrb[0].mxu0
  %v5214 = vadd.f32 %v5130, %v5213
  %5215 = vdwg.mxu0
  %v5216 = vand.u32 %v45, 4294901760
  %5217 = vmatprep.subr.mxu0 %v5216
  %v5218 = vand.u32 %v44, 4294901760
  %5219 = vmatpush1.msra.mxu0 %v5218
  %v5220 = vand.u32 %v47, 4294901760
  %5221 = vmatprep.subr.mxu0 %v5220
  %v5222 = vand.u32 %v46, 4294901760
  %5223 = vmatpush1.msra.mxu0 %v5222
  %5224 = vmatprep.subr.mxu0 0.0
  %5225 = vmatpush1.msra.mxu0 0.0
  %5226 = vmatprep.subr.mxu0 0.0
  %5227 = vmatpush1.msra.mxu0 0.0
  %5228 = vmatprep.subr.mxu0 0.0
  %5229 = vmatpush1.msra.mxu0 0.0
  %5230 = vmatprep.subr.mxu0 0.0
  %5231 = vmatpush1.msra.mxu0 0.0
  %5232 = vmatprep.subr.mxu0 0.0
  %5233 = vmatpush1.msra.mxu0 0.0
  %5234 = vmatprep.subr.mxu0 0.0
  %5235 = vmatpush1.msra.mxu0 0.0
  %5236 = vmatprep.subr.mxu0 0.0
  %5237 = vmatpush1.msra.mxu0 0.0
  %5238 = vmatprep.subr.mxu0 0.0
  %5239 = vmatpush1.msra.mxu0 0.0
  %5240 = vmatprep.subr.mxu0 0.0
  %5241 = vmatpush1.msra.mxu0 0.0
  %5242 = vmatprep.subr.mxu0 0.0
  %5243 = vmatpush1.msra.mxu0 0.0
  %5244 = vmatprep.subr.mxu0 0.0
  %5245 = vmatpush1.msra.mxu0 0.0
  %5246 = vmatprep.subr.mxu0 0.0
  %5247 = vmatpush1.msra.mxu0 0.0
  %5248 = vmatprep.subr.mxu0 0.0
  %5249 = vmatpush1.msra.mxu0 0.0
  %5250 = vmatprep.subr.mxu0 0.0
  %5251 = vmatpush1.msra.mxu0 0.0
  %5252 = vmatprep.subr.mxu0 0.0
  %5253 = vmatpush1.msra.mxu0 0.0
  %5254 = vmatprep.subr.mxu0 0.0
  %5255 = vmatpush1.msra.mxu0 0.0
  %5256 = vmatprep.subr.mxu0 0.0
  %5257 = vmatpush1.msra.mxu0 0.0
  %5258 = vmatprep.subr.mxu0 0.0
  %5259 = vmatpush1.msra.mxu0 0.0
  %5260 = vmatprep.subr.mxu0 0.0
  %5261 = vmatpush1.msra.mxu0 0.0
  %5262 = vmatprep.subr.mxu0 0.0
  %5263 = vmatpush1.msra.mxu0 0.0
  %5264 = vmatprep.subr.mxu0 0.0
  %5265 = vmatpush1.msra.mxu0 0.0
  %5266 = vmatprep.subr.mxu0 0.0
  %5267 = vmatpush1.msra.mxu0 0.0
  %5268 = vmatprep.subr.mxu0 0.0
  %5269 = vmatpush1.msra.mxu0 0.0
  %5270 = vmatprep.subr.mxu0 0.0
  %5271 = vmatpush1.msra.mxu0 0.0
  %5272 = vmatprep.subr.mxu0 0.0
  %5273 = vmatpush1.msra.mxu0 0.0
  %5274 = vmatprep.subr.mxu0 0.0
  %5275 = vmatpush1.msra.mxu0 0.0
  %5276 = vmatprep.subr.mxu0 0.0
  %5277 = vmatpush1.msra.mxu0 0.0
  %5278 = vmatprep.subr.mxu0 0.0
  %5279 = vmatpush1.msra.mxu0 0.0
  %5280 = vmatprep.subr.mxu0 0.0
  %5281 = vmatpush1.msra.mxu0 0.0
  %5282 = vmatprep.subr.mxu0 0.0
  %5283 = vmatpush1.msra.mxu0 0.0
  %5284 = vmatprep.mubr.f32.mxu0 0.0
  %v5285 = vand.u32 %v4799, 4294901760
  %5286 = vmatmul.mubr.f32.gmra.mrb[0].mxu0 %v5285
  %v5287 = vpop.f32.mrb[0].mxu0
  %v5288 = vadd.f32 %v5212, %v5287
  %v5289 = vpop.f32.mrb[0].mxu0
  %v5290 = vadd.f32 %v5214, %v5289
  %5291 = vdwg.mxu0
  %v5292 = vld [vmem:[%s1028] sm:$0xff]
  %5294 = vset.pattern.permute.xlu0 0
  %5295 = vperm.xlu0 %5294, %v5292
  %v5296 = vpop.permute.xlu0 %5295
  %v5298 = vadd.f32 %v5288, %v5296
  %v5299 = vadd.f32 %v5290, %v5296
  %v5300 = vmax.f32 %v5298, 0.0
  %v5301 = vmax.f32 %v5299, 0.0
  %5302 = vst [vmem:[%s14] sm:$0xff] %v5300
  %5303 = vst [vmem:[%s14 + $0x8] sm:$0xff] %v5301
  // Predicated region
  $region38: #{autoregressive_forward_pallas.1} parent=0 // pred_check
    _
  $region39: #{autoregressive_forward_pallas.1} parent=0 // pred_check_branch
    %5305 = sbr.rel (0) target = $region41
  $region40: #{autoregressive_forward_pallas.1} parent=0 // pred_region
    _
  $region41: #{autoregressive_forward_pallas.1} parent=0 // pred_fallthru
    _
  // Predicated region
  $region42: #{autoregressive_forward_pallas.1} parent=0 // pred_check
    _
  $region43: #{autoregressive_forward_pallas.1} parent=0 // pred_check_branch
    %5307 = sbr.rel (0) target = $region45
  $region44: #{autoregressive_forward_pallas.1} parent=0 // pred_region
    _
  $region45: #{autoregressive_forward_pallas.1} parent=0 // pred_fallthru
    _
  // Predicated region
  $region46: #{autoregressive_forward_pallas.1} parent=0 // pred_check
    _
  $region47: #{autoregressive_forward_pallas.1} parent=0 // pred_check_branch
    %5309 = sbr.rel (0) target = $region49
  $region48: #{autoregressive_forward_pallas.1} parent=0 // pred_region
    _
  $region49: #{autoregressive_forward_pallas.1} parent=0 // pred_fallthru
    _
  // Predicated region
  $region50: #{autoregressive_forward_pallas.1} parent=0 // pred_check
    _
  $region51: #{autoregressive_forward_pallas.1} parent=0 // pred_check_branch
    %5311 = sbr.rel (0) target = $region53
  $region52: #{autoregressive_forward_pallas.1} parent=0 // pred_region
    _
  $region53: #{autoregressive_forward_pallas.1} parent=0 // pred_fallthru
    _
  // Predicated region
  $region54: #{autoregressive_forward_pallas.1} parent=0 // pred_check
    _
  $region55: #{autoregressive_forward_pallas.1} parent=0 // pred_check_branch
    %5313 = sbr.rel (0) target = $region57
  $region56: #{autoregressive_forward_pallas.1} parent=0 // pred_region
    _
  $region57: #{autoregressive_forward_pallas.1} parent=0 // pred_fallthru
    _
  // Predicated region
  $region58: #{autoregressive_forward_pallas.1} parent=0 // pred_check
    _
  $region59: #{autoregressive_forward_pallas.1} parent=0 // pred_check_branch
    %5315 = sbr.rel (0) target = $region61
  $region60: #{autoregressive_forward_pallas.1} parent=0 // pred_region
    _
  $region61: #{autoregressive_forward_pallas.1} parent=0 // pred_fallthru
    _
  // Predicated region
  $region62: #{autoregressive_forward_pallas.1} parent=0 // pred_check
    _
  $region63: #{autoregressive_forward_pallas.1} parent=0 // pred_check_branch
    %5317 = sbr.rel (0) target = $region65
  $region64: #{autoregressive_forward_pallas.1} parent=0 // pred_region
    _
  $region65: #{autoregressive_forward_pallas.1} parent=0 // pred_fallthru
    _
  // Predicated region
  $region66: #{autoregressive_forward_pallas.1} parent=0 // pred_check
    _
  $region67: #{autoregressive_forward_pallas.1} parent=0 // pred_check_branch
    %5319 = sbr.rel (0) target = $region69
  $region68: #{autoregressive_forward_pallas.1} parent=0 // pred_region
    _
  $region69: #{autoregressive_forward_pallas.1} parent=0 // pred_fallthru
    _
  // Predicated region
  $region70: #{autoregressive_forward_pallas.1} parent=0 // pred_check
    _
  $region71: #{autoregressive_forward_pallas.1} parent=0 // pred_check_branch
    %5321 = sbr.rel (0) target = $region73
  $region72: #{autoregressive_forward_pallas.1} parent=0 // pred_region
    _
  $region73: #{autoregressive_forward_pallas.1} parent=0 // pred_fallthru
    _
  // Predicated region
  $region74: #{autoregressive_forward_pallas.1} parent=0 // pred_check
    _
  $region75: #{autoregressive_forward_pallas.1} parent=0 // pred_check_branch
    %5323 = sbr.rel (0) target = $region77
  $region76: #{autoregressive_forward_pallas.1} parent=0 // pred_region
    _
  $region77: #{autoregressive_forward_pallas.1} parent=0 // pred_fallthru
    _
  // Predicated region
  $region78: #{autoregressive_forward_pallas.1} parent=0 // pred_check
    _
  $region79: #{autoregressive_forward_pallas.1} parent=0 // pred_check_branch
    %5325 = sbr.rel (0) target = $region81
  $region80: #{autoregressive_forward_pallas.1} parent=0 // pred_region
    _
  $region81: #{autoregressive_forward_pallas.1} parent=0 // pred_fallthru
    _
  // Predicated region
  $region82: #{autoregressive_forward_pallas.1} parent=0 // pred_check
    _
  $region83: #{autoregressive_forward_pallas.1} parent=0 // pred_check_branch
    %5327 = sbr.rel (0) target = $region85
  $region84: #{autoregressive_forward_pallas.1} parent=0 // pred_region
    _
  $region85: #{autoregressive_forward_pallas.1} parent=0 // pred_fallthru
    _

</llo_original>
